<compile_context>
chip_gen: v5e
topology: v5e:2x2
jax: 0.10.0
libtpu: 0.0.40
codegen_flags: <defaults>
</compile_context>

<pallas_src>
import functools

import jax
import jax.numpy as jnp
from jax.experimental import pallas as pl
from jax.experimental.pallas import tpu as pltpu

EPS = 1e-6
_VMEM_LIMIT = 48 * 1024 * 1024   # fits scoped VMEM on v5e/v6e (128 MiB) and v7x (64 MiB)


def _layer_norm(v, gamma, beta):
    """torch AddNorm norm: unbiased std (N-1), eps added to std (not variance)."""
    n = v.shape[-1]
    mean = jnp.mean(v, axis=-1, keepdims=True)
    var = jnp.sum((v - mean) ** 2, axis=-1, keepdims=True) * (1.0 / (n - 1))
    inv = pl.reciprocal(jnp.sqrt(var) + EPS, approx=True)       # EUP, not a VPU divide
    return gamma * (v - mean) * inv + beta


# ---------------- kernel 1: LayerNorm + Q/K/V projection (head-major output) ----------
def _qkv_kernel(x_ref, g1_ref, be1_ref,
                wq_ref, bq_ref, wk_ref, bk_ref, wv_ref, bv_ref,
                q_ref, k_ref, v_ref):
    x = x_ref[...].astype(jnp.float32)                          # (TS, D)
    n1 = _layer_norm(x, g1_ref[...], be1_ref[...]).astype(jnp.bfloat16)

    def proj(w_ref, b_ref):                                     # (TS, D) @ (D, d_k)
        y = jnp.dot(n1, w_ref[...], preferred_element_type=jnp.float32) + b_ref[...]
        return y.astype(jnp.bfloat16)

    q_ref[...] = proj(wq_ref, bq_ref)
    k_ref[...] = proj(wk_ref, bk_ref)
    v_ref[...] = proj(wv_ref, bv_ref)


# ---------------- kernel 2: flash attention + Wo + residual ---------------------------
def _attn_kernel(x_ref, q_ref, k_ref, v_ref, wo_ref, bo_ref, o_ref,
                 m_sc, l_sc, acc_sc, *, sm_scale):
    ki = pl.program_id(2)

    @pl.when(ki == 0)
    def _():
        m_sc[...] = jnp.full_like(m_sc, -jnp.inf)
        l_sc[...] = jnp.zeros_like(l_sc)
        acc_sc[...] = jnp.zeros_like(acc_sc)

    # TODO(synk): attention mask not implemented (forward exercised with mask=None);
    # dropout is an identity in eval mode.
    q = q_ref[...]                                              # (H, TQ, d_k) bf16
    k = k_ref[...]                                              # (H, TK, d_k) bf16
    s = jnp.einsum("hqd,hkd->hqk", q, k,
                   preferred_element_type=jnp.float32) * sm_scale
    m_prev = m_sc[...]
    m_new = jnp.maximum(m_prev, jnp.max(s, axis=-1, keepdims=True))
    alpha = jnp.exp(m_prev - m_new)
    p = jnp.exp(s - m_new)
    l_sc[...] = alpha * l_sc[...] + jnp.sum(p, axis=-1, keepdims=True)
    acc_sc[...] = alpha * acc_sc[...] + jnp.einsum(
        "hqk,hkd->hqd", p.astype(jnp.bfloat16), v_ref[...],
        preferred_element_type=jnp.float32)
    m_sc[...] = m_new

    @pl.when(ki == pl.num_programs(2) - 1)
    def _():
        num_heads = acc_sc.shape[0]
        ctx = acc_sc[...] * pl.reciprocal(l_sc[...], approx=True)   # (H, TQ, d_k) f32
        out = jnp.zeros(o_ref.shape, jnp.float32)                   # (TQ, D)
        for h in range(num_heads):                                  # accumulate, no concat
            out = out + jnp.dot(ctx[h].astype(jnp.bfloat16), wo_ref[h],
                                preferred_element_type=jnp.float32)
        attn = out + bo_ref[...]
        o_ref[...] = (x_ref[...].astype(jnp.float32) + attn).astype(o_ref.dtype)


# ---------------- kernel 3: LayerNorm + FFN (d_ff-tiled reduction) + residual ---------
def _ffn_kernel(h1_ref, g2_ref, be2_ref, w1_ref, b1_ref, w2_ref, b2_ref,
                o_ref, acc_ref, n2_ref):
    f = pl.program_id(2)

    @pl.when(f == 0)
    def _():
        h1 = h1_ref[...].astype(jnp.float32)
        n2_ref[...] = _layer_norm(h1, g2_ref[...], be2_ref[...]).astype(jnp.bfloat16)
        acc_ref[...] = jnp.zeros_like(acc_ref)

    a = jnp.dot(n2_ref[...], w1_ref[...], preferred_element_type=jnp.float32) + b1_ref[...]
    a = jnp.maximum(a, 0.0)
    acc_ref[...] += jnp.dot(a.astype(jnp.bfloat16), w2_ref[...],
                            preferred_element_type=jnp.float32)

    @pl.when(f == pl.num_programs(2) - 1)
    def _():
        o_ref[...] = (h1_ref[...].astype(jnp.float32) + acc_ref[...]
                      + b2_ref[...]).astype(o_ref.dtype)


# ---------------- wrapper -------------------------------------------------------------
def encoder_layer(x, params, *, num_heads, seq_tile=None, dff_tile=None):
    B, S, D = x.shape
    d_ff = params["w1"].shape[1]
    assert D % num_heads == 0
    dk = D // num_heads
    if seq_tile is None:
        seq_tile = next((t for t in (256, 128, 64, 32, 16, 8) if S % t == 0), None)
    if dff_tile is None:
        dff_tile = next((t for t in (512, 256, 128) if d_ff % t == 0), None)
    assert seq_tile is not None and S % seq_tile == 0 and seq_tile % 8 == 0
    assert dff_tile is not None and d_ff % dff_tile == 0 and dff_tile % 128 == 0
    assert D % 128 == 0 and dk % 8 == 0, "keep lane dim a multiple of 128"

    f32, bf16 = jnp.float32, jnp.bfloat16
    H, TS, TF = num_heads, seq_tile, dff_tile

    # Head-major weight layouts prepared once on the host (plain XLA, cheap):
    #   wq/wk/wv: (D, D) -> (H, D, d_k)   so kernel 1 never lane-slices
    #   wo:       (D, D) -> (H, d_k, D)   so kernel 2 accumulates per head
    def split_heads_in(w):
        return w.reshape(D, H, dk).transpose(1, 0, 2).astype(bf16)

    def split_heads_bias(b):
        return b.reshape(H, 1, dk).astype(f32)

    wq_h = split_heads_in(params["wq"])
    wk_h = split_heads_in(params["wk"])
    wv_h = split_heads_in(params["wv"])
    bq_h = split_heads_bias(params["bq"])
    bk_h = split_heads_bias(params["bk"])
    bv_h = split_heads_bias(params["bv"])
    wo_h = params["wo"].reshape(H, dk, D).astype(bf16)
    w1_b = params["w1"].astype(bf16)
    w2_b = params["w2"].astype(bf16)

    cp_par3 = pltpu.CompilerParams(
        dimension_semantics=("parallel", "parallel", "parallel"),
        vmem_limit_bytes=_VMEM_LIMIT)
    cp_red3 = pltpu.CompilerParams(
        dimension_semantics=("parallel", "parallel", "arbitrary"),
        vmem_limit_bytes=_VMEM_LIMIT)

    # ---- kernel 1: LayerNorm + QKV ----
    ce_qkv = pl.CostEstimate(
        flops=int(6 * B * S * D * D),
        transcendentals=int(B * S * H),
        bytes_accessed=int(4 * B * S * D + 6 * D * D + 6 * B * S * D))
    q, k, v = pl.pallas_call(
        _qkv_kernel,
        out_shape=[jax.ShapeDtypeStruct((B, H, S, dk), bf16)] * 3,
        grid=(B, S // TS, H),
        in_specs=[
            pl.BlockSpec((pl.Squeezed(), TS, D), lambda b, si, h: (b, si, 0)),   # x
            pl.BlockSpec((1, D), lambda b, si, h: (0, 0)),                        # gamma1
            pl.BlockSpec((1, D), lambda b, si, h: (0, 0)),                        # beta1
            pl.BlockSpec((pl.Squeezed(), D, dk), lambda b, si, h: (h, 0, 0)),     # Wq[h]
            pl.BlockSpec((pl.Squeezed(), 1, dk), lambda b, si, h: (h, 0, 0)),     # bq[h]
            pl.BlockSpec((pl.Squeezed(), D, dk), lambda b, si, h: (h, 0, 0)),     # Wk[h]
            pl.BlockSpec((pl.Squeezed(), 1, dk), lambda b, si, h: (h, 0, 0)),     # bk[h]
            pl.BlockSpec((pl.Squeezed(), D, dk), lambda b, si, h: (h, 0, 0)),     # Wv[h]
            pl.BlockSpec((pl.Squeezed(), 1, dk), lambda b, si, h: (h, 0, 0)),     # bv[h]
        ],
        out_specs=[pl.BlockSpec((pl.Squeezed(), pl.Squeezed(), TS, dk),
                                lambda b, si, h: (b, h, si, 0))] * 3,
        compiler_params=cp_par3,
        cost_estimate=ce_qkv,
    )(x, params["g1"], params["be1"], wq_h, bq_h, wk_h, bk_h, wv_h, bv_h)

    # ---- kernel 2: flash attention + Wo + residual ----
    sm_scale = 1.0 / float(dk) ** 0.5
    ce_attn = pl.CostEstimate(
        flops=int(4 * B * H * S * S * dk + 2 * B * S * D * D),
        transcendentals=int(B * H * S * S + B * H * S),
        bytes_accessed=int(14 * B * S * D + 2 * D * D))
    h1 = pl.pallas_call(
        functools.partial(_attn_kernel, sm_scale=sm_scale),
        out_shape=jax.ShapeDtypeStruct((B, S, D), f32),
        grid=(B, S // TS, S // TS),
        in_specs=[
            pl.BlockSpec((pl.Squeezed(), TS, D), lambda b, qi, ki: (b, qi, 0)),        # x
            pl.BlockSpec((pl.Squeezed(), H, TS, dk), lambda b, qi, ki: (b, 0, qi, 0)),  # q
            pl.BlockSpec((pl.Squeezed(), H, TS, dk), lambda b, qi, ki: (b, 0, ki, 0)),  # k
            pl.BlockSpec((pl.Squeezed(), H, TS, dk), lambda b, qi, ki: (b, 0, ki, 0)),  # v
            pl.BlockSpec((H, dk, D), lambda b, qi, ki: (0, 0, 0)),                      # Wo
            pl.BlockSpec((1, D), lambda b, qi, ki: (0, 0)),                             # bo
        ],
        out_specs=pl.BlockSpec((pl.Squeezed(), TS, D), lambda b, qi, ki: (b, qi, 0)),
        scratch_shapes=[
            pltpu.VMEM((H, TS, 1), f32),    # running max
            pltpu.VMEM((H, TS, 1), f32),    # running denom
            pltpu.VMEM((H, TS, dk), f32),   # running context accumulator
        ],
        compiler_params=cp_red3,
        cost_estimate=ce_attn,
    )(x, q, k, v, wo_h, params["bo"])

    # ---- kernel 3: LayerNorm + FFN + residual ----
    ce_ffn = pl.CostEstimate(
        flops=int(4 * B * S * D * d_ff),
        transcendentals=int(B * S),
        bytes_accessed=int(8 * B * S * D + 4 * D * d_ff))
    out = pl.pallas_call(
        _ffn_kernel,
        out_shape=jax.ShapeDtypeStruct((B, S, D), x.dtype),        # output in input dtype
        grid=(B, S // TS, d_ff // TF),
        in_specs=[
            pl.BlockSpec((pl.Squeezed(), TS, D), lambda b, si, f: (b, si, 0)),  # h1
            pl.BlockSpec((1, D), lambda b, si, f: (0, 0)),                      # gamma2
            pl.BlockSpec((1, D), lambda b, si, f: (0, 0)),                      # beta2
            pl.BlockSpec((D, TF), lambda b, si, f: (0, f)),                     # W1 chunk
            pl.BlockSpec((1, TF), lambda b, si, f: (0, f)),                     # b1 chunk
            pl.BlockSpec((TF, D), lambda b, si, f: (f, 0)),                     # W2 chunk
            pl.BlockSpec((1, D), lambda b, si, f: (0, 0)),                      # b2
        ],
        out_specs=pl.BlockSpec((pl.Squeezed(), TS, D), lambda b, si, f: (b, si, 0)),
        scratch_shapes=[pltpu.VMEM((TS, D), f32),     # W2 accumulator
                        pltpu.VMEM((TS, D), bf16)],   # cached LayerNorm(h1)
        compiler_params=cp_red3,
        cost_estimate=ce_ffn,
    )(h1, params["g2"], params["be2"], w1_b, params["b1"], w2_b, params["b2"])
    return out


def make_params(key, d_model, d_ff):
    ks = jax.random.split(key, 8)
    s = 0.02
    return {
        "g1": jnp.ones((1, d_model), jnp.float32),
        "be1": jnp.zeros((1, d_model), jnp.float32),
        "wq": s * jax.random.normal(ks[0], (d_model, d_model), jnp.float32),
        "bq": jnp.zeros((1, d_model), jnp.float32),
        "wk": s * jax.random.normal(ks[1], (d_model, d_model), jnp.float32),
        "bk": jnp.zeros((1, d_model), jnp.float32),
        "wv": s * jax.random.normal(ks[2], (d_model, d_model), jnp.float32),
        "bv": jnp.zeros((1, d_model), jnp.float32),
        "wo": s * jax.random.normal(ks[3], (d_model, d_model), jnp.float32),
        "bo": jnp.zeros((1, d_model), jnp.float32),
        "g2": jnp.ones((1, d_model), jnp.float32),
        "be2": jnp.zeros((1, d_model), jnp.float32),
        "w1": s * jax.random.normal(ks[4], (d_model, d_ff), jnp.float32),
        "b1": jnp.zeros((1, d_ff), jnp.float32),
        "w2": s * jax.random.normal(ks[5], (d_ff, d_model), jnp.float32),
        "b2": jnp.zeros((1, d_model), jnp.float32),
    }


def reference(x, p, num_heads):
    # pure-JAX f32 reference with identical semantics, for a sanity check
    D = x.shape[-1]
    dk = D // num_heads

    def norm(v, g, b):
        mean = jnp.mean(v, axis=-1, keepdims=True)
        var = jnp.sum((v - mean) ** 2, axis=-1, keepdims=True) / (D - 1)
        return g * (v - mean) / (jnp.sqrt(var) + EPS) + b

    n1 = norm(x, p["g1"], p["be1"])
    q = n1 @ p["wq"] + p["bq"]
    k = n1 @ p["wk"] + p["bk"]
    v = n1 @ p["wv"] + p["bv"]
    B, S, _ = x.shape
    qh = q.reshape(B, S, num_heads, dk).transpose(0, 2, 1, 3)
    kh = k.reshape(B, S, num_heads, dk).transpose(0, 2, 1, 3)
    vh = v.reshape(B, S, num_heads, dk).transpose(0, 2, 1, 3)
    sc = jnp.einsum("bhqd,bhkd->bhqk", qh, kh) / jnp.sqrt(jnp.float32(dk))
    pm = jax.nn.softmax(sc, axis=-1)
    attn = jnp.einsum("bhqk,bhkd->bhqd", pm, vh).transpose(0, 2, 1, 3).reshape(B, S, D)
    attn = attn @ p["wo"] + p["bo"]
    h1 = x + attn
    n2 = norm(h1, p["g2"], p["be2"])
    ff = jnp.maximum(n2 @ p["w1"] + p["b1"], 0.0) @ p["w2"] + p["b2"]
    return h1 + ff


if __name__ == "__main__":
    # small but lane-dense shapes: d_model multiple of 128, d_k = 128 per head
    B, S, D, H, DFF = 2, 32, 256, 2, 512
    key = jax.random.PRNGKey(0)
    kx, kp = jax.random.split(key)
    x = jax.random.normal(kx, (B, S, D), jnp.float32)
    params = make_params(kp, D, DFF)

    fn = jax.jit(functools.partial(encoder_layer, num_heads=H, seq_tile=16, dff_tile=256))
    out = jax.block_until_ready(fn(x, params))

    ref = reference(x, params, H)
    assert out.shape == (B, S, D)
    err = float(jnp.max(jnp.abs(out - ref)))
    # bf16 MXU operands (f32 accumulation) + approx reciprocals -> looser tolerance
    assert err < 2e-2, err
    print("KERNEL_OK")
</pallas_src>

<mosaic_0001>
module attributes {stable_mosaic.version = 11 : i64} {
  func.func @_attn_kernel(%arg0: i32, %arg1: i32, %arg2: i32, %arg3: memref<1x16x256xf32, #tpu.memory_space<vmem>>, %arg4: memref<1x2x16x128xbf16, #tpu.memory_space<vmem>>, %arg5: memref<1x2x16x128xbf16, #tpu.memory_space<vmem>>, %arg6: memref<1x2x16x128xbf16, #tpu.memory_space<vmem>>, %arg7: memref<2x128x256xbf16, #tpu.memory_space<vmem>>, %arg8: memref<1x256xf32, #tpu.memory_space<vmem>>, %arg9: memref<1x16x256xf32, #tpu.memory_space<vmem>>, %arg10: memref<2x16x1xf32, #tpu.memory_space<vmem>>, %arg11: memref<2x16x1xf32, #tpu.memory_space<vmem>>, %arg12: memref<2x16x128xf32, #tpu.memory_space<vmem>>) attributes {dimension_semantics = [#tpu.dimension_semantics<parallel>, #tpu.dimension_semantics<parallel>, #tpu.dimension_semantics<arbitrary>], iteration_bounds = array<i64: 2, 2, 2>, scalar_prefetch = 0 : i64, scratch_operands = 3 : i64, tpu.core_type = #tpu.core_type<tc>, window_params = [{transform_indices = @transform_0, window_bounds = array<i64: 1, 16, 256>}, {transform_indices = @transform_1, window_bounds = array<i64: 1, 2, 16, 128>}, {transform_indices = @transform_2, window_bounds = array<i64: 1, 2, 16, 128>}, {transform_indices = @transform_3, window_bounds = array<i64: 1, 2, 16, 128>}, {pipeline_mode = #tpu.pipeline_mode<synchronous>, transform_indices = @transform_4, window_bounds = array<i64: 2, 128, 256>}, {pipeline_mode = #tpu.pipeline_mode<synchronous>, transform_indices = @transform_5, window_bounds = array<i64: 1, 256>}, {transform_indices = @transform_6, window_bounds = array<i64: 1, 16, 256>}]} {
    %c0_i32 = arith.constant 0 : i32
    %0 = arith.cmpi eq, %arg2, %c0_i32 : i32
    %1 = arith.extui %0 : i1 to i32
    %c0_i32_0 = arith.constant 0 : i32
    %2 = arith.cmpi ne, %1, %c0_i32_0 : i32
    scf.if %2 {
      %cst_35 = arith.constant 0xFF800000 : f32
      %38 = vector.broadcast %cst_35 : f32 to vector<2x16x1xf32>
      %c0_36 = arith.constant 0 : index
      %c0_37 = arith.constant 0 : index
      %c0_38 = arith.constant 0 : index
      %39 = vector.load %arg10[%c0_36, %c0_37, %c0_38] : memref<2x16x1xf32, #tpu.memory_space<vmem>>, vector<2x16x1xf32>
      tpu.vector_store %arg10[%c0_36, %c0_37, %c0_38], %38 {strides = array<i32>} : memref<2x16x1xf32, #tpu.memory_space<vmem>>, vector<2x16x1xf32>,
      %cst_39 = arith.constant 0.000000e+00 : f32
      %40 = vector.broadcast %cst_39 : f32 to vector<2x16x1xf32>
      %c0_40 = arith.constant 0 : index
      %c0_41 = arith.constant 0 : index
      %c0_42 = arith.constant 0 : index
      %41 = vector.load %arg11[%c0_40, %c0_41, %c0_42] : memref<2x16x1xf32, #tpu.memory_space<vmem>>, vector<2x16x1xf32>
      tpu.vector_store %arg11[%c0_40, %c0_41, %c0_42], %40 {strides = array<i32>} : memref<2x16x1xf32, #tpu.memory_space<vmem>>, vector<2x16x1xf32>,
      %cst_43 = arith.constant 0.000000e+00 : f32
      %42 = vector.broadcast %cst_43 : f32 to vector<2x16x128xf32>
      %c0_44 = arith.constant 0 : index
      %c0_45 = arith.constant 0 : index
      %c0_46 = arith.constant 0 : index
      %43 = vector.load %arg12[%c0_44, %c0_45, %c0_46] : memref<2x16x128xf32, #tpu.memory_space<vmem>>, vector<2x16x128xf32>
      tpu.vector_store %arg12[%c0_44, %c0_45, %c0_46], %42 {strides = array<i32>} : memref<2x16x128xf32, #tpu.memory_space<vmem>>, vector<2x16x128xf32>,
    } else {
    }
    %c0 = arith.constant 0 : index
    %c0_1 = arith.constant 0 : index
    %c0_2 = arith.constant 0 : index
    %c0_3 = arith.constant 0 : index
    %3 = vector.load %arg4[%c0, %c0_1, %c0_2, %c0_3] : memref<1x2x16x128xbf16, #tpu.memory_space<vmem>>, vector<1x2x16x128xbf16>
    %4 = vector.shape_cast %3 : vector<1x2x16x128xbf16> to vector<2x16x128xbf16>
    %c0_4 = arith.constant 0 : index
    %c0_5 = arith.constant 0 : index
    %c0_6 = arith.constant 0 : index
    %c0_7 = arith.constant 0 : index
    %5 = vector.load %arg5[%c0_4, %c0_5, %c0_6, %c0_7] : memref<1x2x16x128xbf16, #tpu.memory_space<vmem>>, vector<1x2x16x128xbf16>
    %6 = vector.shape_cast %5 : vector<1x2x16x128xbf16> to vector<2x16x128xbf16>
    "tpu.trace_start"() <{level = 10 : i32, message = "hqd,hkd->hqk"}> : () -> ()
    %cst = arith.constant dense<0.000000e+00> : vector<2x16x16xf32>
    %7 = tpu.matmul %4, %6, %cst {dimension_numbers = #tpu.dot_dimension_numbers<[2], [2], [1], [1], [0, 0, 0, 1, 1, 1], [0], [0]>} : vector<2x16x128xbf16>, vector<2x16x128xbf16>, vector<2x16x16xf32> -> vector<2x16x16xf32>
    "tpu.trace_stop"() : () -> ()
    %cst_8 = arith.constant 0.0883883461 : f32
    %8 = vector.broadcast %cst_8 : f32 to vector<2x16x16xf32>
    %9 = arith.mulf %7, %8 : vector<2x16x16xf32>
    %c0_9 = arith.constant 0 : index
    %c0_10 = arith.constant 0 : index
    %c0_11 = arith.constant 0 : index
    %10 = vector.load %arg10[%c0_9, %c0_10, %c0_11] : memref<2x16x1xf32, #tpu.memory_space<vmem>>, vector<2x16x1xf32>
    %cst_12 = arith.constant dense<0xFF800000> : vector<2x16xf32>
    %11 = vector.multi_reduction <maximumf>, %9, %cst_12 [2] : vector<2x16x16xf32> to vector<2x16xf32>
    %12 = vector.shape_cast %11 : vector<2x16xf32> to vector<2x16x1xf32>
    %13 = arith.maximumf %10, %12 : vector<2x16x1xf32>
    %14 = arith.subf %10, %13 : vector<2x16x1xf32>
    %15 = math.exp %14 : vector<2x16x1xf32>
    %16 = vector.broadcast %13 : vector<2x16x1xf32> to vector<2x16x16xf32>
    %17 = arith.subf %9, %16 : vector<2x16x16xf32>
    %18 = math.exp %17 : vector<2x16x16xf32>
    %c0_13 = arith.constant 0 : index
    %c0_14 = arith.constant 0 : index
    %c0_15 = arith.constant 0 : index
    %19 = vector.load %arg11[%c0_13, %c0_14, %c0_15] : memref<2x16x1xf32, #tpu.memory_space<vmem>>, vector<2x16x1xf32>
    %20 = arith.mulf %15, %19 : vector<2x16x1xf32>
    %cst_16 = arith.constant dense<0.000000e+00> : vector<2x16xf32>
    %21 = vector.multi_reduction <add>, %18, %cst_16 [2] : vector<2x16x16xf32> to vector<2x16xf32>
    %22 = vector.shape_cast %21 : vector<2x16xf32> to vector<2x16x1xf32>
    %23 = arith.addf %20, %22 : vector<2x16x1xf32>
    %c0_17 = arith.constant 0 : index
    %c0_18 = arith.constant 0 : index
    %c0_19 = arith.constant 0 : index
    %24 = vector.load %arg11[%c0_17, %c0_18, %c0_19] : memref<2x16x1xf32, #tpu.memory_space<vmem>>, vector<2x16x1xf32>
    tpu.vector_store %arg11[%c0_17, %c0_18, %c0_19], %23 {strides = array<i32>} : memref<2x16x1xf32, #tpu.memory_space<vmem>>, vector<2x16x1xf32>,
    %c0_20 = arith.constant 0 : index
    %c0_21 = arith.constant 0 : index
    %c0_22 = arith.constant 0 : index
    %25 = vector.load %arg12[%c0_20, %c0_21, %c0_22] : memref<2x16x128xf32, #tpu.memory_space<vmem>>, vector<2x16x128xf32>
    %26 = vector.broadcast %15 : vector<2x16x1xf32> to vector<2x16x128xf32>
    %27 = arith.mulf %26, %25 : vector<2x16x128xf32>
    %28 = arith.truncf %18 : vector<2x16x16xf32> to vector<2x16x16xbf16>
    %c0_23 = arith.constant 0 : index
    %c0_24 = arith.constant 0 : index
    %c0_25 = arith.constant 0 : index
    %c0_26 = arith.constant 0 : index
    %29 = vector.load %arg6[%c0_23, %c0_24, %c0_25, %c0_26] : memref<1x2x16x128xbf16, #tpu.memory_space<vmem>>, vector<1x2x16x128xbf16>
    %30 = vector.shape_cast %29 : vector<1x2x16x128xbf16> to vector<2x16x128xbf16>
    "tpu.trace_start"() <{level = 10 : i32, message = "hqk,hkd->hqd"}> : () -> ()
    %cst_27 = arith.constant dense<0.000000e+00> : vector<2x16x128xf32>
    %31 = tpu.matmul %28, %30, %cst_27 {dimension_numbers = #tpu.dot_dimension_numbers<[2], [1], [1], [2], [0, 0, 0, 1, 1, 2], [0], [0]>} : vector<2x16x16xbf16>, vector<2x16x128xbf16>, vector<2x16x128xf32> -> vector<2x16x128xf32>
    "tpu.trace_stop"() : () -> ()
    %32 = arith.addf %27, %31 : vector<2x16x128xf32>
    %c0_28 = arith.constant 0 : index
    %c0_29 = arith.constant 0 : index
    %c0_30 = arith.constant 0 : index
    %33 = vector.load %arg12[%c0_28, %c0_29, %c0_30] : memref<2x16x128xf32, #tpu.memory_space<vmem>>, vector<2x16x128xf32>
    tpu.vector_store %arg12[%c0_28, %c0_29, %c0_30], %32 {strides = array<i32>} : memref<2x16x128xf32, #tpu.memory_space<vmem>>, vector<2x16x128xf32>,
    %c0_31 = arith.constant 0 : index
    %c0_32 = arith.constant 0 : index
    %c0_33 = arith.constant 0 : index
    %34 = vector.load %arg10[%c0_31, %c0_32, %c0_33] : memref<2x16x1xf32, #tpu.memory_space<vmem>>, vector<2x16x1xf32>
    tpu.vector_store %arg10[%c0_31, %c0_32, %c0_33], %13 {strides = array<i32>} : memref<2x16x1xf32, #tpu.memory_space<vmem>>, vector<2x16x1xf32>,
    %c1_i32 = arith.constant 1 : i32
    %35 = arith.cmpi eq, %arg2, %c1_i32 : i32
    %36 = arith.extui %35 : i1 to i32
    %c0_i32_34 = arith.constant 0 : i32
    %37 = arith.cmpi ne, %36, %c0_i32_34 : i32
    scf.if %37 {
      %c0_35 = arith.constant 0 : index
      %c0_36 = arith.constant 0 : index
      %c0_37 = arith.constant 0 : index
      %38 = vector.load %arg12[%c0_35, %c0_36, %c0_37] : memref<2x16x128xf32, #tpu.memory_space<vmem>>, vector<2x16x128xf32>
      %c0_38 = arith.constant 0 : index
      %c0_39 = arith.constant 0 : index
      %c0_40 = arith.constant 0 : index
      %39 = vector.load %arg11[%c0_38, %c0_39, %c0_40] : memref<2x16x1xf32, #tpu.memory_space<vmem>>, vector<2x16x1xf32>
      %40 = tpu.reciprocal %39 {approx = true} : vector<2x16x1xf32> -> vector<2x16x1xf32>
      %41 = vector.broadcast %40 : vector<2x16x1xf32> to vector<2x16x128xf32>
      %42 = arith.mulf %38, %41 : vector<2x16x128xf32>
      %cst_41 = arith.constant 0.000000e+00 : f32
      %43 = vector.broadcast %cst_41 : f32 to vector<16x256xf32>
      %44 = vector.extract_strided_slice %42 {offsets = [0, 0, 0], sizes = [1, 16, 128], strides = [1, 1, 1]} : vector<2x16x128xf32> to vector<1x16x128xf32>
      %45 = vector.shape_cast %44 : vector<1x16x128xf32> to vector<16x128xf32>
      %46 = arith.truncf %45 : vector<16x128xf32> to vector<16x128xbf16>
      %c0_42 = arith.constant 0 : index
      %c0_43 = arith.constant 0 : index
      %c0_44 = arith.constant 0 : index
      %47 = vector.load %arg7[%c0_42, %c0_43, %c0_44] : memref<2x128x256xbf16, #tpu.memory_space<vmem>>, vector<1x128x256xbf16>
      %48 = vector.shape_cast %47 : vector<1x128x256xbf16> to vector<128x256xbf16>
      %cst_45 = arith.constant dense<0.000000e+00> : vector<16x256xf32>
      %49 = tpu.matmul %46, %48, %cst_45 {dimension_numbers = #tpu.dot_dimension_numbers<[1], [0], [0], [1], [0, 0, 1, 1], [], []>} : vector<16x128xbf16>, vector<128x256xbf16>, vector<16x256xf32> -> vector<16x256xf32>
      %50 = arith.addf %43, %49 : vector<16x256xf32>
      %51 = vector.extract_strided_slice %42 {offsets = [1, 0, 0], sizes = [1, 16, 128], strides = [1, 1, 1]} : vector<2x16x128xf32> to vector<1x16x128xf32>
      %52 = vector.shape_cast %51 : vector<1x16x128xf32> to vector<16x128xf32>
      %53 = arith.truncf %52 : vector<16x128xf32> to vector<16x128xbf16>
      %c1 = arith.constant 1 : index
      %c0_46 = arith.constant 0 : index
      %c0_47 = arith.constant 0 : index
      %54 = vector.load %arg7[%c1, %c0_46, %c0_47] : memref<2x128x256xbf16, #tpu.memory_space<vmem>>, vector<1x128x256xbf16>
      %55 = vector.shape_cast %54 : vector<1x128x256xbf16> to vector<128x256xbf16>
      %cst_48 = arith.constant dense<0.000000e+00> : vector<16x256xf32>
      %56 = tpu.matmul %53, %55, %cst_48 {dimension_numbers = #tpu.dot_dimension_numbers<[1], [0], [0], [1], [0, 0, 1, 1], [], []>} : vector<16x128xbf16>, vector<128x256xbf16>, vector<16x256xf32> -> vector<16x256xf32>
      %57 = arith.addf %50, %56 : vector<16x256xf32>
      %c0_49 = arith.constant 0 : index
      %c0_50 = arith.constant 0 : index
      %58 = vector.load %arg8[%c0_49, %c0_50] : memref<1x256xf32, #tpu.memory_space<vmem>>, vector<1x256xf32>
      %59 = vector.broadcast %58 : vector<1x256xf32> to vector<16x256xf32>
      %60 = arith.addf %57, %59 : vector<16x256xf32>
      %c0_51 = arith.constant 0 : index
      %c0_52 = arith.constant 0 : index
      %c0_53 = arith.constant 0 : index
      %61 = vector.load %arg3[%c0_51, %c0_52, %c0_53] : memref<1x16x256xf32, #tpu.memory_space<vmem>>, vector<1x16x256xf32>
      %62 = vector.shape_cast %61 : vector<1x16x256xf32> to vector<16x256xf32>
      %63 = arith.addf %62, %60 : vector<16x256xf32>
      %c0_54 = arith.constant 0 : index
      %c0_55 = arith.constant 0 : index
      %c0_56 = arith.constant 0 : index
      %64 = vector.load %arg9[%c0_54, %c0_55, %c0_56] : memref<1x16x256xf32, #tpu.memory_space<vmem>>, vector<1x16x256xf32>
      %65 = vector.shape_cast %64 : vector<1x16x256xf32> to vector<16x256xf32>
      %66 = vector.shape_cast %63 : vector<16x256xf32> to vector<1x16x256xf32>
      tpu.vector_store %arg9[%c0_54, %c0_55, %c0_56], %66 {strides = array<i32>} : memref<1x16x256xf32, #tpu.memory_space<vmem>>, vector<1x16x256xf32>,
    } else {
    }
    return
  }
  func.func @transform_0(%arg0: i32, %arg1: i32, %arg2: i32) -> (i32, i32, i32) {
    %c0_i32 = arith.constant 0 : i32
    %c0_i32_0 = arith.constant 0 : i32
    return %arg0, %arg1, %c0_i32 : i32, i32, i32
  }
  func.func @transform_1(%arg0: i32, %arg1: i32, %arg2: i32) -> (i32, i32, i32, i32) {
    %c0_i32 = arith.constant 0 : i32
    %c0_i32_0 = arith.constant 0 : i32
    %c0_i32_1 = arith.constant 0 : i32
    return %arg0, %c0_i32, %arg1, %c0_i32_0 : i32, i32, i32, i32
  }
  func.func @transform_2(%arg0: i32, %arg1: i32, %arg2: i32) -> (i32, i32, i32, i32) {
    %c0_i32 = arith.constant 0 : i32
    %c0_i32_0 = arith.constant 0 : i32
    %c0_i32_1 = arith.constant 0 : i32
    return %arg0, %c0_i32, %arg2, %c0_i32_0 : i32, i32, i32, i32
  }
  func.func @transform_3(%arg0: i32, %arg1: i32, %arg2: i32) -> (i32, i32, i32, i32) {
    %c0_i32 = arith.constant 0 : i32
    %c0_i32_0 = arith.constant 0 : i32
    %c0_i32_1 = arith.constant 0 : i32
    return %arg0, %c0_i32, %arg2, %c0_i32_0 : i32, i32, i32, i32
  }
  func.func @transform_4(%arg0: i32, %arg1: i32, %arg2: i32) -> (i32, i32, i32) {
    %c0_i32 = arith.constant 0 : i32
    %c0_i32_0 = arith.constant 0 : i32
    %c0_i32_1 = arith.constant 0 : i32
    %c0_i32_2 = arith.constant 0 : i32
    return %c0_i32, %c0_i32_0, %c0_i32_1 : i32, i32, i32
  }
  func.func @transform_5(%arg0: i32, %arg1: i32, %arg2: i32) -> (i32, i32) {
    %c0_i32 = arith.constant 0 : i32
    %c0_i32_0 = arith.constant 0 : i32
    %c0_i32_1 = arith.constant 0 : i32
    return %c0_i32, %c0_i32_0 : i32, i32
  }
  func.func @transform_6(%arg0: i32, %arg1: i32, %arg2: i32) -> (i32, i32, i32) {
    %c0_i32 = arith.constant 0 : i32
    %c0_i32_0 = arith.constant 0 : i32
    return %arg0, %arg1, %c0_i32 : i32, i32, i32
  }
}

module attributes {stable_mosaic.version = 11 : i64} {
  func.func @_qkv_kernel(%arg0: i32, %arg1: i32, %arg2: i32, %arg3: memref<1x16x256xf32, #tpu.memory_space<vmem>>, %arg4: memref<1x256xf32, #tpu.memory_space<vmem>>, %arg5: memref<1x256xf32, #tpu.memory_space<vmem>>, %arg6: memref<1x256x128xbf16, #tpu.memory_space<vmem>>, %arg7: memref<1x1x128xf32, #tpu.memory_space<vmem>>, %arg8: memref<1x256x128xbf16, #tpu.memory_space<vmem>>, %arg9: memref<1x1x128xf32, #tpu.memory_space<vmem>>, %arg10: memref<1x256x128xbf16, #tpu.memory_space<vmem>>, %arg11: memref<1x1x128xf32, #tpu.memory_space<vmem>>, %arg12: memref<1x1x16x128xbf16, #tpu.memory_space<vmem>>, %arg13: memref<1x1x16x128xbf16, #tpu.memory_space<vmem>>, %arg14: memref<1x1x16x128xbf16, #tpu.memory_space<vmem>>) attributes {dimension_semantics = [#tpu.dimension_semantics<parallel>, #tpu.dimension_semantics<parallel>, #tpu.dimension_semantics<parallel>], iteration_bounds = array<i64: 2, 2, 2>, scalar_prefetch = 0 : i64, scratch_operands = 0 : i64, tpu.core_type = #tpu.core_type<tc>, window_params = [{transform_indices = @transform_0, window_bounds = array<i64: 1, 16, 256>}, {pipeline_mode = #tpu.pipeline_mode<synchronous>, transform_indices = @transform_1, window_bounds = array<i64: 1, 256>}, {pipeline_mode = #tpu.pipeline_mode<synchronous>, transform_indices = @transform_2, window_bounds = array<i64: 1, 256>}, {transform_indices = @transform_3, window_bounds = array<i64: 1, 256, 128>}, {transform_indices = @transform_4, window_bounds = array<i64: 1, 1, 128>}, {transform_indices = @transform_5, window_bounds = array<i64: 1, 256, 128>}, {transform_indices = @transform_6, window_bounds = array<i64: 1, 1, 128>}, {transform_indices = @transform_7, window_bounds = array<i64: 1, 256, 128>}, {transform_indices = @transform_8, window_bounds = array<i64: 1, 1, 128>}, {transform_indices = @transform_9, window_bounds = array<i64: 1, 1, 16, 128>}, {transform_indices = @transform_10, window_bounds = array<i64: 1, 1, 16, 128>}, {transform_indices = @transform_11, window_bounds = array<i64: 1, 1, 16, 128>}]} {
    %c0 = arith.constant 0 : index
    %c0_0 = arith.constant 0 : index
    %c0_1 = arith.constant 0 : index
    %0 = vector.load %arg3[%c0, %c0_0, %c0_1] : memref<1x16x256xf32, #tpu.memory_space<vmem>>, vector<1x16x256xf32>
    %1 = vector.shape_cast %0 : vector<1x16x256xf32> to vector<16x256xf32>
    %c0_2 = arith.constant 0 : index
    %c0_3 = arith.constant 0 : index
    %2 = vector.load %arg4[%c0_2, %c0_3] : memref<1x256xf32, #tpu.memory_space<vmem>>, vector<1x256xf32>
    %c0_4 = arith.constant 0 : index
    %c0_5 = arith.constant 0 : index
    %3 = vector.load %arg5[%c0_4, %c0_5] : memref<1x256xf32, #tpu.memory_space<vmem>>, vector<1x256xf32>
    %cst = arith.constant dense<0.000000e+00> : vector<16xf32>
    %4 = vector.multi_reduction <add>, %1, %cst [1] : vector<16x256xf32> to vector<16xf32>
    %5 = vector.shape_cast %4 : vector<16xf32> to vector<16x1xf32>
    %cst_6 = arith.constant 2.560000e+02 : f32
    %6 = vector.broadcast %cst_6 : f32 to vector<16x1xf32>
    %7 = arith.divf %5, %6 : vector<16x1xf32>
    %8 = vector.broadcast %7 : vector<16x1xf32> to vector<16x256xf32>
    %9 = arith.subf %1, %8 : vector<16x256xf32>
    %10 = arith.mulf %9, %9 : vector<16x256xf32>
    %cst_7 = arith.constant dense<0.000000e+00> : vector<16xf32>
    %11 = vector.multi_reduction <add>, %10, %cst_7 [1] : vector<16x256xf32> to vector<16xf32>
    %12 = vector.shape_cast %11 : vector<16xf32> to vector<16x1xf32>
    %cst_8 = arith.constant 0.00392156886 : f32
    %13 = vector.broadcast %cst_8 : f32 to vector<16x1xf32>
    %14 = arith.mulf %12, %13 : vector<16x1xf32>
    %15 = math.sqrt %14 : vector<16x1xf32>
    %cst_9 = arith.constant 9.99999997E-7 : f32
    %16 = vector.broadcast %cst_9 : f32 to vector<16x1xf32>
    %17 = arith.addf %15, %16 : vector<16x1xf32>
    %18 = tpu.reciprocal %17 {approx = true} : vector<16x1xf32> -> vector<16x1xf32>
    %19 = vector.broadcast %7 : vector<16x1xf32> to vector<16x256xf32>
    %20 = arith.subf %1, %19 : vector<16x256xf32>
    %21 = vector.broadcast %2 : vector<1x256xf32> to vector<16x256xf32>
    %22 = arith.mulf %21, %20 : vector<16x256xf32>
    %23 = vector.broadcast %18 : vector<16x1xf32> to vector<16x256xf32>
    %24 = arith.mulf %22, %23 : vector<16x256xf32>
    %25 = vector.broadcast %3 : vector<1x256xf32> to vector<16x256xf32>
    %26 = arith.addf %24, %25 : vector<16x256xf32>
    %27 = arith.truncf %26 : vector<16x256xf32> to vector<16x256xbf16>
    %c0_10 = arith.constant 0 : index
    %c0_11 = arith.constant 0 : index
    %c0_12 = arith.constant 0 : index
    %28 = vector.load %arg6[%c0_10, %c0_11, %c0_12] : memref<1x256x128xbf16, #tpu.memory_space<vmem>>, vector<1x256x128xbf16>
    %29 = vector.shape_cast %28 : vector<1x256x128xbf16> to vector<256x128xbf16>
    %cst_13 = arith.constant dense<0.000000e+00> : vector<16x128xf32>
    %30 = tpu.matmul %27, %29, %cst_13 {dimension_numbers = #tpu.dot_dimension_numbers<[1], [0], [0], [1], [0, 0, 1, 1], [], []>} : vector<16x256xbf16>, vector<256x128xbf16>, vector<16x128xf32> -> vector<16x128xf32>
    %c0_14 = arith.constant 0 : index
    %c0_15 = arith.constant 0 : index
    %c0_16 = arith.constant 0 : index
    %31 = vector.load %arg7[%c0_14, %c0_15, %c0_16] : memref<1x1x128xf32, #tpu.memory_space<vmem>>, vector<1x1x128xf32>
    %32 = vector.shape_cast %31 : vector<1x1x128xf32> to vector<1x128xf32>
    %33 = vector.broadcast %32 : vector<1x128xf32> to vector<16x128xf32>
    %34 = arith.addf %30, %33 : vector<16x128xf32>
    %35 = arith.truncf %34 : vector<16x128xf32> to vector<16x128xbf16>
    %c0_17 = arith.constant 0 : index
    %c0_18 = arith.constant 0 : index
    %c0_19 = arith.constant 0 : index
    %c0_20 = arith.constant 0 : index
    %36 = vector.load %arg12[%c0_17, %c0_18, %c0_19, %c0_20] : memref<1x1x16x128xbf16, #tpu.memory_space<vmem>>, vector<1x1x16x128xbf16>
    %37 = vector.shape_cast %36 : vector<1x1x16x128xbf16> to vector<16x128xbf16>
    %38 = vector.shape_cast %35 : vector<16x128xbf16> to vector<1x1x16x128xbf16>
    tpu.vector_store %arg12[%c0_17, %c0_18, %c0_19, %c0_20], %38 {strides = array<i32>} : memref<1x1x16x128xbf16, #tpu.memory_space<vmem>>, vector<1x1x16x128xbf16>,
    %c0_21 = arith.constant 0 : index
    %c0_22 = arith.constant 0 : index
    %c0_23 = arith.constant 0 : index
    %39 = vector.load %arg8[%c0_21, %c0_22, %c0_23] : memref<1x256x128xbf16, #tpu.memory_space<vmem>>, vector<1x256x128xbf16>
    %40 = vector.shape_cast %39 : vector<1x256x128xbf16> to vector<256x128xbf16>
    %cst_24 = arith.constant dense<0.000000e+00> : vector<16x128xf32>
    %41 = tpu.matmul %27, %40, %cst_24 {dimension_numbers = #tpu.dot_dimension_numbers<[1], [0], [0], [1], [0, 0, 1, 1], [], []>} : vector<16x256xbf16>, vector<256x128xbf16>, vector<16x128xf32> -> vector<16x128xf32>
    %c0_25 = arith.constant 0 : index
    %c0_26 = arith.constant 0 : index
    %c0_27 = arith.constant 0 : index
    %42 = vector.load %arg9[%c0_25, %c0_26, %c0_27] : memref<1x1x128xf32, #tpu.memory_space<vmem>>, vector<1x1x128xf32>
    %43 = vector.shape_cast %42 : vector<1x1x128xf32> to vector<1x128xf32>
    %44 = vector.broadcast %43 : vector<1x128xf32> to vector<16x128xf32>
    %45 = arith.addf %41, %44 : vector<16x128xf32>
    %46 = arith.truncf %45 : vector<16x128xf32> to vector<16x128xbf16>
    %c0_28 = arith.constant 0 : index
    %c0_29 = arith.constant 0 : index
    %c0_30 = arith.constant 0 : index
    %c0_31 = arith.constant 0 : index
    %47 = vector.load %arg13[%c0_28, %c0_29, %c0_30, %c0_31] : memref<1x1x16x128xbf16, #tpu.memory_space<vmem>>, vector<1x1x16x128xbf16>
    %48 = vector.shape_cast %47 : vector<1x1x16x128xbf16> to vector<16x128xbf16>
    %49 = vector.shape_cast %46 : vector<16x128xbf16> to vector<1x1x16x128xbf16>
    tpu.vector_store %arg13[%c0_28, %c0_29, %c0_30, %c0_31], %49 {strides = array<i32>} : memref<1x1x16x128xbf16, #tpu.memory_space<vmem>>, vector<1x1x16x128xbf16>,
    %c0_32 = arith.constant 0 : index
    %c0_33 = arith.constant 0 : index
    %c0_34 = arith.constant 0 : index
    %50 = vector.load %arg10[%c0_32, %c0_33, %c0_34] : memref<1x256x128xbf16, #tpu.memory_space<vmem>>, vector<1x256x128xbf16>
    %51 = vector.shape_cast %50 : vector<1x256x128xbf16> to vector<256x128xbf16>
    %cst_35 = arith.constant dense<0.000000e+00> : vector<16x128xf32>
    %52 = tpu.matmul %27, %51, %cst_35 {dimension_numbers = #tpu.dot_dimension_numbers<[1], [0], [0], [1], [0, 0, 1, 1], [], []>} : vector<16x256xbf16>, vector<256x128xbf16>, vector<16x128xf32> -> vector<16x128xf32>
    %c0_36 = arith.constant 0 : index
    %c0_37 = arith.constant 0 : index
    %c0_38 = arith.constant 0 : index
    %53 = vector.load %arg11[%c0_36, %c0_37, %c0_38] : memref<1x1x128xf32, #tpu.memory_space<vmem>>, vector<1x1x128xf32>
    %54 = vector.shape_cast %53 : vector<1x1x128xf32> to vector<1x128xf32>
    %55 = vector.broadcast %54 : vector<1x128xf32> to vector<16x128xf32>
    %56 = arith.addf %52, %55 : vector<16x128xf32>
    %57 = arith.truncf %56 : vector<16x128xf32> to vector<16x128xbf16>
    %c0_39 = arith.constant 0 : index
    %c0_40 = arith.constant 0 : index
    %c0_41 = arith.constant 0 : index
    %c0_42 = arith.constant 0 : index
    %58 = vector.load %arg14[%c0_39, %c0_40, %c0_41, %c0_42] : memref<1x1x16x128xbf16, #tpu.memory_space<vmem>>, vector<1x1x16x128xbf16>
    %59 = vector.shape_cast %58 : vector<1x1x16x128xbf16> to vector<16x128xbf16>
    %60 = vector.shape_cast %57 : vector<16x128xbf16> to vector<1x1x16x128xbf16>
    tpu.vector_store %arg14[%c0_39, %c0_40, %c0_41, %c0_42], %60 {strides = array<i32>} : memref<1x1x16x128xbf16, #tpu.memory_space<vmem>>, vector<1x1x16x128xbf16>,
    return
  }
  func.func @transform_0(%arg0: i32, %arg1: i32, %arg2: i32) -> (i32, i32, i32) {
    %c0_i32 = arith.constant 0 : i32
    %c0_i32_0 = arith.constant 0 : i32
    return %arg0, %arg1, %c0_i32 : i32, i32, i32
  }
  func.func @transform_1(%arg0: i32, %arg1: i32, %arg2: i32) -> (i32, i32) {
    %c0_i32 = arith.constant 0 : i32
    %c0_i32_0 = arith.constant 0 : i32
    %c0_i32_1 = arith.constant 0 : i32
    return %c0_i32, %c0_i32_0 : i32, i32
  }
  func.func @transform_2(%arg0: i32, %arg1: i32, %arg2: i32) -> (i32, i32) {
    %c0_i32 = arith.constant 0 : i32
    %c0_i32_0 = arith.constant 0 : i32
    %c0_i32_1 = arith.constant 0 : i32
    return %c0_i32, %c0_i32_0 : i32, i32
  }
  func.func @transform_3(%arg0: i32, %arg1: i32, %arg2: i32) -> (i32, i32, i32) {
    %c0_i32 = arith.constant 0 : i32
    %c0_i32_0 = arith.constant 0 : i32
    %c0_i32_1 = arith.constant 0 : i32
    return %arg2, %c0_i32, %c0_i32_0 : i32, i32, i32
  }
  func.func @transform_4(%arg0: i32, %arg1: i32, %arg2: i32) -> (i32, i32, i32) {
    %c0_i32 = arith.constant 0 : i32
    %c0_i32_0 = arith.constant 0 : i32
    %c0_i32_1 = arith.constant 0 : i32
    return %arg2, %c0_i32, %c0_i32_0 : i32, i32, i32
  }
  func.func @transform_5(%arg0: i32, %arg1: i32, %arg2: i32) -> (i32, i32, i32) {
    %c0_i32 = arith.constant 0 : i32
    %c0_i32_0 = arith.constant 0 : i32
    %c0_i32_1 = arith.constant 0 : i32
    return %arg2, %c0_i32, %c0_i32_0 : i32, i32, i32
  }
  func.func @transform_6(%arg0: i32, %arg1: i32, %arg2: i32) -> (i32, i32, i32) {
    %c0_i32 = arith.constant 0 : i32
    %c0_i32_0 = arith.constant 0 : i32
    %c0_i32_1 = arith.constant 0 : i32
    return %arg2, %c0_i32, %c0_i32_0 : i32, i32, i32
  }
  func.func @transform_7(%arg0: i32, %arg1: i32, %arg2: i32) -> (i32, i32, i32) {
    %c0_i32 = arith.constant 0 : i32
    %c0_i32_0 = arith.constant 0 : i32
    %c0_i32_1 = arith.constant 0 : i32
    return %arg2, %c0_i32, %c0_i32_0 : i32, i32, i32
  }
  func.func @transform_8(%arg0: i32, %arg1: i32, %arg2: i32) -> (i32, i32, i32) {
    %c0_i32 = arith.constant 0 : i32
    %c0_i32_0 = arith.constant 0 : i32
    %c0_i32_1 = arith.constant 0 : i32
    return %arg2, %c0_i32, %c0_i32_0 : i32, i32, i32
  }
  func.func @transform_9(%arg0: i32, %arg1: i32, %arg2: i32) -> (i32, i32, i32, i32) {
    %c0_i32 = arith.constant 0 : i32
    %c0_i32_0 = arith.constant 0 : i32
    return %arg0, %arg2, %arg1, %c0_i32 : i32, i32, i32, i32
  }
  func.func @transform_10(%arg0: i32, %arg1: i32, %arg2: i32) -> (i32, i32, i32, i32) {
    %c0_i32 = arith.constant 0 : i32
    %c0_i32_0 = arith.constant 0 : i32
    return %arg0, %arg2, %arg1, %c0_i32 : i32, i32, i32, i32
  }
  func.func @transform_11(%arg0: i32, %arg1: i32, %arg2: i32) -> (i32, i32, i32, i32) {
    %c0_i32 = arith.constant 0 : i32
    %c0_i32_0 = arith.constant 0 : i32
    return %arg0, %arg2, %arg1, %c0_i32 : i32, i32, i32, i32
  }
}

module attributes {stable_mosaic.version = 11 : i64} {
  func.func @_ffn_kernel(%arg0: i32, %arg1: i32, %arg2: i32, %arg3: memref<1x16x256xf32, #tpu.memory_space<vmem>>, %arg4: memref<1x256xf32, #tpu.memory_space<vmem>>, %arg5: memref<1x256xf32, #tpu.memory_space<vmem>>, %arg6: memref<256x256xbf16, #tpu.memory_space<vmem>>, %arg7: memref<1x256xf32, #tpu.memory_space<vmem>>, %arg8: memref<256x256xbf16, #tpu.memory_space<vmem>>, %arg9: memref<1x256xf32, #tpu.memory_space<vmem>>, %arg10: memref<1x16x256xf32, #tpu.memory_space<vmem>>, %arg11: memref<16x256xf32, #tpu.memory_space<vmem>>, %arg12: memref<16x256xbf16, #tpu.memory_space<vmem>>) attributes {dimension_semantics = [#tpu.dimension_semantics<parallel>, #tpu.dimension_semantics<parallel>, #tpu.dimension_semantics<arbitrary>], iteration_bounds = array<i64: 2, 2, 2>, scalar_prefetch = 0 : i64, scratch_operands = 2 : i64, tpu.core_type = #tpu.core_type<tc>, window_params = [{transform_indices = @transform_0, window_bounds = array<i64: 1, 16, 256>}, {pipeline_mode = #tpu.pipeline_mode<synchronous>, transform_indices = @transform_1, window_bounds = array<i64: 1, 256>}, {pipeline_mode = #tpu.pipeline_mode<synchronous>, transform_indices = @transform_2, window_bounds = array<i64: 1, 256>}, {transform_indices = @transform_3, window_bounds = array<i64: 256, 256>}, {transform_indices = @transform_4, window_bounds = array<i64: 1, 256>}, {transform_indices = @transform_5, window_bounds = array<i64: 256, 256>}, {pipeline_mode = #tpu.pipeline_mode<synchronous>, transform_indices = @transform_6, window_bounds = array<i64: 1, 256>}, {transform_indices = @transform_7, window_bounds = array<i64: 1, 16, 256>}]} {
    %c0_i32 = arith.constant 0 : i32
    %0 = arith.cmpi eq, %arg2, %c0_i32 : i32
    %1 = arith.extui %0 : i1 to i32
    %c0_i32_0 = arith.constant 0 : i32
    %2 = arith.cmpi ne, %1, %c0_i32_0 : i32
    scf.if %2 {
      %c0_15 = arith.constant 0 : index
      %c0_16 = arith.constant 0 : index
      %c0_17 = arith.constant 0 : index
      %20 = vector.load %arg3[%c0_15, %c0_16, %c0_17] : memref<1x16x256xf32, #tpu.memory_space<vmem>>, vector<1x16x256xf32>
      %21 = vector.shape_cast %20 : vector<1x16x256xf32> to vector<16x256xf32>
      %c0_18 = arith.constant 0 : index
      %c0_19 = arith.constant 0 : index
      %22 = vector.load %arg4[%c0_18, %c0_19] : memref<1x256xf32, #tpu.memory_space<vmem>>, vector<1x256xf32>
      %c0_20 = arith.constant 0 : index
      %c0_21 = arith.constant 0 : index
      %23 = vector.load %arg5[%c0_20, %c0_21] : memref<1x256xf32, #tpu.memory_space<vmem>>, vector<1x256xf32>
      %cst_22 = arith.constant dense<0.000000e+00> : vector<16xf32>
      %24 = vector.multi_reduction <add>, %21, %cst_22 [1] : vector<16x256xf32> to vector<16xf32>
      %25 = vector.shape_cast %24 : vector<16xf32> to vector<16x1xf32>
      %cst_23 = arith.constant 2.560000e+02 : f32
      %26 = vector.broadcast %cst_23 : f32 to vector<16x1xf32>
      %27 = arith.divf %25, %26 : vector<16x1xf32>
      %28 = vector.broadcast %27 : vector<16x1xf32> to vector<16x256xf32>
      %29 = arith.subf %21, %28 : vector<16x256xf32>
      %30 = arith.mulf %29, %29 : vector<16x256xf32>
      %cst_24 = arith.constant dense<0.000000e+00> : vector<16xf32>
      %31 = vector.multi_reduction <add>, %30, %cst_24 [1] : vector<16x256xf32> to vector<16xf32>
      %32 = vector.shape_cast %31 : vector<16xf32> to vector<16x1xf32>
      %cst_25 = arith.constant 0.00392156886 : f32
      %33 = vector.broadcast %cst_25 : f32 to vector<16x1xf32>
      %34 = arith.mulf %32, %33 : vector<16x1xf32>
      %35 = math.sqrt %34 : vector<16x1xf32>
      %cst_26 = arith.constant 9.99999997E-7 : f32
      %36 = vector.broadcast %cst_26 : f32 to vector<16x1xf32>
      %37 = arith.addf %35, %36 : vector<16x1xf32>
      %38 = tpu.reciprocal %37 {approx = true} : vector<16x1xf32> -> vector<16x1xf32>
      %39 = vector.broadcast %27 : vector<16x1xf32> to vector<16x256xf32>
      %40 = arith.subf %21, %39 : vector<16x256xf32>
      %41 = vector.broadcast %22 : vector<1x256xf32> to vector<16x256xf32>
      %42 = arith.mulf %41, %40 : vector<16x256xf32>
      %43 = vector.broadcast %38 : vector<16x1xf32> to vector<16x256xf32>
      %44 = arith.mulf %42, %43 : vector<16x256xf32>
      %45 = vector.broadcast %23 : vector<1x256xf32> to vector<16x256xf32>
      %46 = arith.addf %44, %45 : vector<16x256xf32>
      %47 = arith.truncf %46 : vector<16x256xf32> to vector<16x256xbf16>
      %c0_27 = arith.constant 0 : index
      %c0_28 = arith.constant 0 : index
      %48 = vector.load %arg12[%c0_27, %c0_28] : memref<16x256xbf16, #tpu.memory_space<vmem>>, vector<16x256xbf16>
      tpu.vector_store %arg12[%c0_27, %c0_28], %47 {strides = array<i32>} : memref<16x256xbf16, #tpu.memory_space<vmem>>, vector<16x256xbf16>,
      %cst_29 = arith.constant 0.000000e+00 : f32
      %49 = vector.broadcast %cst_29 : f32 to vector<16x256xf32>
      %c0_30 = arith.constant 0 : index
      %c0_31 = arith.constant 0 : index
      %50 = vector.load %arg11[%c0_30, %c0_31] : memref<16x256xf32, #tpu.memory_space<vmem>>, vector<16x256xf32>
      tpu.vector_store %arg11[%c0_30, %c0_31], %49 {strides = array<i32>} : memref<16x256xf32, #tpu.memory_space<vmem>>, vector<16x256xf32>,
    } else {
    }
    %c0 = arith.constant 0 : index
    %c0_1 = arith.constant 0 : index
    %3 = vector.load %arg12[%c0, %c0_1] : memref<16x256xbf16, #tpu.memory_space<vmem>>, vector<16x256xbf16>
    %c0_2 = arith.constant 0 : index
    %c0_3 = arith.constant 0 : index
    %4 = vector.load %arg6[%c0_2, %c0_3] : memref<256x256xbf16, #tpu.memory_space<vmem>>, vector<256x256xbf16>
    %cst = arith.constant dense<0.000000e+00> : vector<16x256xf32>
    %5 = tpu.matmul %3, %4, %cst {dimension_numbers = #tpu.dot_dimension_numbers<[1], [0], [0], [1], [0, 0, 1, 1], [], []>} : vector<16x256xbf16>, vector<256x256xbf16>, vector<16x256xf32> -> vector<16x256xf32>
    %c0_4 = arith.constant 0 : index
    %c0_5 = arith.constant 0 : index
    %6 = vector.load %arg7[%c0_4, %c0_5] : memref<1x256xf32, #tpu.memory_space<vmem>>, vector<1x256xf32>
    %7 = vector.broadcast %6 : vector<1x256xf32> to vector<16x256xf32>
    %8 = arith.addf %5, %7 : vector<16x256xf32>
    %cst_6 = arith.constant 0.000000e+00 : f32
    %9 = vector.broadcast %cst_6 : f32 to vector<16x256xf32>
    %10 = arith.maximumf %8, %9 : vector<16x256xf32>
    %c0_7 = arith.constant 0 : index
    %c0_8 = arith.constant 0 : index
    %11 = vector.load %arg11[%c0_7, %c0_8] : memref<16x256xf32, #tpu.memory_space<vmem>>, vector<16x256xf32>
    %12 = arith.truncf %10 : vector<16x256xf32> to vector<16x256xbf16>
    %c0_9 = arith.constant 0 : index
    %c0_10 = arith.constant 0 : index
    %13 = vector.load %arg8[%c0_9, %c0_10] : memref<256x256xbf16, #tpu.memory_space<vmem>>, vector<256x256xbf16>
    %cst_11 = arith.constant dense<0.000000e+00> : vector<16x256xf32>
    %14 = tpu.matmul %12, %13, %cst_11 {dimension_numbers = #tpu.dot_dimension_numbers<[1], [0], [0], [1], [0, 0, 1, 1], [], []>} : vector<16x256xbf16>, vector<256x256xbf16>, vector<16x256xf32> -> vector<16x256xf32>
    %15 = arith.addf %11, %14 : vector<16x256xf32>
    %c0_12 = arith.constant 0 : index
    %c0_13 = arith.constant 0 : index
    %16 = vector.load %arg11[%c0_12, %c0_13] : memref<16x256xf32, #tpu.memory_space<vmem>>, vector<16x256xf32>
    tpu.vector_store %arg11[%c0_12, %c0_13], %15 {strides = array<i32>} : memref<16x256xf32, #tpu.memory_space<vmem>>, vector<16x256xf32>,
    %c1_i32 = arith.constant 1 : i32
    %17 = arith.cmpi eq, %arg2, %c1_i32 : i32
    %18 = arith.extui %17 : i1 to i32
    %c0_i32_14 = arith.constant 0 : i32
    %19 = arith.cmpi ne, %18, %c0_i32_14 : i32
    scf.if %19 {
      %c0_15 = arith.constant 0 : index
      %c0_16 = arith.constant 0 : index
      %c0_17 = arith.constant 0 : index
      %20 = vector.load %arg3[%c0_15, %c0_16, %c0_17] : memref<1x16x256xf32, #tpu.memory_space<vmem>>, vector<1x16x256xf32>
      %21 = vector.shape_cast %20 : vector<1x16x256xf32> to vector<16x256xf32>
      %c0_18 = arith.constant 0 : index
      %c0_19 = arith.constant 0 : index
      %22 = vector.load %arg11[%c0_18, %c0_19] : memref<16x256xf32, #tpu.memory_space<vmem>>, vector<16x256xf32>
      %23 = arith.addf %21, %22 : vector<16x256xf32>
      %c0_20 = arith.constant 0 : index
      %c0_21 = arith.constant 0 : index
      %24 = vector.load %arg9[%c0_20, %c0_21] : memref<1x256xf32, #tpu.memory_space<vmem>>, vector<1x256xf32>
      %25 = vector.broadcast %24 : vector<1x256xf32> to vector<16x256xf32>
      %26 = arith.addf %23, %25 : vector<16x256xf32>
      %c0_22 = arith.constant 0 : index
      %c0_23 = arith.constant 0 : index
      %c0_24 = arith.constant 0 : index
      %27 = vector.load %arg10[%c0_22, %c0_23, %c0_24] : memref<1x16x256xf32, #tpu.memory_space<vmem>>, vector<1x16x256xf32>
      %28 = vector.shape_cast %27 : vector<1x16x256xf32> to vector<16x256xf32>
      %29 = vector.shape_cast %26 : vector<16x256xf32> to vector<1x16x256xf32>
      tpu.vector_store %arg10[%c0_22, %c0_23, %c0_24], %29 {strides = array<i32>} : memref<1x16x256xf32, #tpu.memory_space<vmem>>, vector<1x16x256xf32>,
    } else {
    }
    return
  }
  func.func @transform_0(%arg0: i32, %arg1: i32, %arg2: i32) -> (i32, i32, i32) {
    %c0_i32 = arith.constant 0 : i32
    %c0_i32_0 = arith.constant 0 : i32
    return %arg0, %arg1, %c0_i32 : i32, i32, i32
  }
  func.func @transform_1(%arg0: i32, %arg1: i32, %arg2: i32) -> (i32, i32) {
    %c0_i32 = arith.constant 0 : i32
    %c0_i32_0 = arith.constant 0 : i32
    %c0_i32_1 = arith.constant 0 : i32
    return %c0_i32, %c0_i32_0 : i32, i32
  }
  func.func @transform_2(%arg0: i32, %arg1: i32, %arg2: i32) -> (i32, i32) {
    %c0_i32 = arith.constant 0 : i32
    %c0_i32_0 = arith.constant 0 : i32
    %c0_i32_1 = arith.constant 0 : i32
    return %c0_i32, %c0_i32_0 : i32, i32
  }
  func.func @transform_3(%arg0: i32, %arg1: i32, %arg2: i32) -> (i32, i32) {
    %c0_i32 = arith.constant 0 : i32
    %c0_i32_0 = arith.constant 0 : i32
    return %c0_i32, %arg2 : i32, i32
  }
  func.func @transform_4(%arg0: i32, %arg1: i32, %arg2: i32) -> (i32, i32) {
    %c0_i32 = arith.constant 0 : i32
    %c0_i32_0 = arith.constant 0 : i32
    return %c0_i32, %arg2 : i32, i32
  }
  func.func @transform_5(%arg0: i32, %arg1: i32, %arg2: i32) -> (i32, i32) {
    %c0_i32 = arith.constant 0 : i32
    %c0_i32_0 = arith.constant 0 : i32
    return %arg2, %c0_i32 : i32, i32
  }
  func.func @transform_6(%arg0: i32, %arg1: i32, %arg2: i32) -> (i32, i32) {
    %c0_i32 = arith.constant 0 : i32
    %c0_i32_0 = arith.constant 0 : i32
    %c0_i32_1 = arith.constant 0 : i32
    return %c0_i32, %c0_i32_0 : i32, i32
  }
  func.func @transform_7(%arg0: i32, %arg1: i32, %arg2: i32) -> (i32, i32, i32) {
    %c0_i32 = arith.constant 0 : i32
    %c0_i32_0 = arith.constant 0 : i32
    return %arg0, %arg1, %c0_i32 : i32, i32, i32
  }
}

</mosaic_0001>

<llo_original>
// kernel: encoder_layer.4
$region0: #{encoder_layer.4}
  #allocation0 [shape = 'u32[]', space=smem, size = 0x4, offset = 0x4, fixed_abs, tag = 'smem constant byte address 0x4 - core index']
  #allocation1 [shape = 'u32[72,128]{1,0:T(1,128)}', space=vmem, size = 0x9000, scoped, tag = 'internal scratch']
  #allocation2 [shape = 'f32[2,16,1]{2,1,0:T(8,128)}', space=vmem, size = 0x4000, scoped, tag = 'scratch operand']
  #allocation3 [shape = 'f32[2,16,1]{2,1,0:T(8,128)}', space=vmem, size = 0x4000, scoped, tag = 'scratch operand']
  #allocation4 [shape = 'f32[2,16,128]{2,1,0:T(8,128)}', space=vmem, size = 0x4000, scoped, tag = 'scratch operand']
  %s0 = inlined_call_operand.vmem [shape: f32[2,32,256], index: 0, kind: input, shape index: {}]
  %s1 = inlined_call_operand.vmem [shape: bf16[2,2,32,128], index: 1, kind: input, shape index: {}]
  %s2 = inlined_call_operand.vmem [shape: bf16[2,2,32,128], index: 2, kind: input, shape index: {}]
  %s3 = inlined_call_operand.vmem [shape: bf16[2,2,32,128], index: 3, kind: input, shape index: {}]
  %s4 = inlined_call_operand.vmem [shape: bf16[2,128,256], index: 4, kind: input, shape index: {}]
  %s5 = inlined_call_operand.vmem [shape: f32[1,256], index: 5, kind: input, shape index: {}]
  %s6 = inlined_call_operand.vmem [shape: f32[2,32,256], index: 6, kind: output, shape index: {}]
  %s7 = sld [smem:[#allocation0]]
  $region188: #{encoder_layer.4} parent=0
    _
  %s9 = ssub.s32 1, %s7
  %s10 = scalar_select 0, %s9, %s7
  $region1: #{encoder_layer.4} parent=0
    #allocation5 [shape = 'u8[16384]{0}', space=vmem, size = 0x4000, scoped, tag = 'input window, operand 1']
    #allocation6 [shape = 'u8[16384]{0}', space=vmem, size = 0x4000, scoped, tag = 'input window, operand 2']
    #allocation7 [shape = 'u8[16384]{0}', space=vmem, size = 0x4000, scoped, tag = 'input window, operand 3']
    loop: start=0, step=1, limit=10
    $region2: #{encoder_layer.4} parent=1 // loop_pre_header
      _
    $region3: #{encoder_layer.4} parent=1 // loop_header
      %s12 = sphi 0, %s16
      %p13 = scmp.ge.s32.totalorder %s12, 10
      %s19 = sphi 0, %s38
      %s20 = sphi 0, %s34
      %s21 = sphi 0, %s30
      %s22 = sphi 0, %s19
      %s23 = sphi 0, %s20
      %s24 = sphi 0, %s21
      %s25 = sphi 0, %s22
      %s26 = sphi 0, %s23
      %s27 = sphi 0, %s24
      %s43 = sphi 0, %s45
      %s46 = sphi 0, %s43
      %s47 = sphi 0, %s46
      %s63 = sphi 0, %s47
      %s71 = sphi 0, %s73
      %s74 = sphi 0, %s71
      %s75 = sphi 0, %s74
      %s91 = sphi 0, %s75
      %s99 = sphi 0, %s101
      %s102 = sphi 0, %s99
      %s103 = sphi 0, %s102
      %s119 = sphi 0, %s103
      %s127 = sphi 0, %s129
      %s130 = sphi 0, %s127
      %s131 = sphi 0, %s130
      %s147 = sphi 0, %s131
      %s151 = sphi 0, %s151
      %s153 = sphi 0, %s151
      %s154 = sphi 0, %s153
      %s168 = sphi 0, %s154
      %s172 = sphi 0, %s172
      %s174 = sphi 0, %s172
      %s175 = sphi 0, %s174
      %s189 = sphi 0, %s175
      %s197 = sphi 0, %s199
      %s200 = sphi 0, %s197
      %s201 = sphi 0, %s200
      %s217 = sphi 0, %s201
    $region4: #{encoder_layer.4} parent=1 // loop_header_branch
      %15 = sbr.rel (%p13) target = $region8
    $region5: #{encoder_layer.4} parent=1 // loop_body
      %s17 = ssub.s32 %s12, 1
      %s18 = ssub.s32 %s12, 2
      %s28 = sadd.s32 1, %s21
      %p29 = scmp.ge.s32.totalorder %s28, 2
      %s30 = scalar_select %p29, 0, %s28
      %s31 = sadd.s32 1, %s20
      %s32 = scalar_select %p29, %s31, %s20
      %p33 = scmp.ge.s32.totalorder %s32, 2
      %s34 = scalar_select %p33, 0, %s32
      %s35 = sadd.s32 1, %s19
      %s36 = scalar_select %p33, %s35, %s19
      %p37 = scmp.ge.s32.totalorder %s36, 2
      %s38 = scalar_select %p37, 0, %s36
      %s39 = ssub.s32 %s19, %s38
      %s40 = ssub.s32 %s20, %s34
      %s41 = sor.u32 %s39, %s40
      %p42 = scmp.eq.s32.totalorder %s41, 0
      %s44 = sadd.s32 %s43, 1
      %s45 = scalar_select %p42, %s43, %s44
      %p48 = pneg %p42
      %p49 = scmp.eq.s32.totalorder %s12, 7
      %p50 = por %p48, %p49
      %p51 = scmp.ne.s32.totalorder %s43, %s46
      %p52 = scmp.eq.s32.totalorder %s12, 0
      %p53 = por %p51, %p52
      %p54 = scmp.ne.s32.totalorder %s43, %s46
      %p55 = scmp.eq.s32.totalorder %s17, 7
      %p56 = por %p54, %p55
      %p57 = scmp.ne.s32.totalorder %s46, %s47
      %p58 = scmp.eq.s32.totalorder %s17, 0
      %p59 = por %p57, %p58
      %p60 = scmp.ne.s32.totalorder %s46, %s47
      %p61 = scmp.eq.s32.totalorder %s18, 7
      %p62 = por %p60, %p61
      %p64 = scmp.ne.s32.totalorder %s47, %s63
      %p65 = scmp.eq.s32.totalorder %s18, 0
      %p66 = por %p64, %p65
      %s67 = ssub.s32 %s19, %s38
      %s68 = ssub.s32 %s20, %s34
      %s69 = sor.u32 %s67, %s68
      %p70 = scmp.eq.s32.totalorder %s69, 0
      %s72 = sadd.s32 %s71, 1
      %s73 = scalar_select %p70, %s71, %s72
      %p76 = pneg %p70
      %p77 = scmp.eq.s32.totalorder %s12, 7
      %p78 = por %p76, %p77
      %p79 = scmp.ne.s32.totalorder %s71, %s74
      %p80 = scmp.eq.s32.totalorder %s12, 0
      %p81 = por %p79, %p80
      %p82 = scmp.ne.s32.totalorder %s71, %s74
      %p83 = scmp.eq.s32.totalorder %s17, 7
      %p84 = por %p82, %p83
      %p85 = scmp.ne.s32.totalorder %s74, %s75
      %p86 = scmp.eq.s32.totalorder %s17, 0
      %p87 = por %p85, %p86
      %p88 = scmp.ne.s32.totalorder %s74, %s75
      %p89 = scmp.eq.s32.totalorder %s18, 7
      %p90 = por %p88, %p89
      %p92 = scmp.ne.s32.totalorder %s75, %s91
      %p93 = scmp.eq.s32.totalorder %s18, 0
      %p94 = por %p92, %p93
      %s95 = ssub.s32 %s19, %s38
      %s96 = ssub.s32 %s21, %s30
      %s97 = sor.u32 %s95, %s96
      %p98 = scmp.eq.s32.totalorder %s97, 0
      %s100 = sadd.s32 %s99, 1
      %s101 = scalar_select %p98, %s99, %s100
      %p104 = pneg %p98
      %p105 = scmp.eq.s32.totalorder %s12, 7
      %p106 = por %p104, %p105
      %p107 = scmp.ne.s32.totalorder %s99, %s102
      %p108 = scmp.eq.s32.totalorder %s12, 0
      %p109 = por %p107, %p108
      %p110 = scmp.ne.s32.totalorder %s99, %s102
      %p111 = scmp.eq.s32.totalorder %s17, 7
      %p112 = por %p110, %p111
      %p113 = scmp.ne.s32.totalorder %s102, %s103
      %p114 = scmp.eq.s32.totalorder %s17, 0
      %p115 = por %p113, %p114
      %p116 = scmp.ne.s32.totalorder %s102, %s103
      %p117 = scmp.eq.s32.totalorder %s18, 7
      %p118 = por %p116, %p117
      %p120 = scmp.ne.s32.totalorder %s103, %s119
      %p121 = scmp.eq.s32.totalorder %s18, 0
      %p122 = por %p120, %p121
      %s123 = ssub.s32 %s19, %s38
      %s124 = ssub.s32 %s21, %s30
      %s125 = sor.u32 %s123, %s124
      %p126 = scmp.eq.s32.totalorder %s125, 0
      %s128 = sadd.s32 %s127, 1
      %s129 = scalar_select %p126, %s127, %s128
      %p132 = pneg %p126
      %p133 = scmp.eq.s32.totalorder %s12, 7
      %p134 = por %p132, %p133
      %p135 = scmp.ne.s32.totalorder %s127, %s130
      %p136 = scmp.eq.s32.totalorder %s12, 0
      %p137 = por %p135, %p136
      %p138 = scmp.ne.s32.totalorder %s127, %s130
      %p139 = scmp.eq.s32.totalorder %s17, 7
      %p140 = por %p138, %p139
      %p141 = scmp.ne.s32.totalorder %s130, %s131
      %p142 = scmp.eq.s32.totalorder %s17, 0
      %p143 = por %p141, %p142
      %p144 = scmp.ne.s32.totalorder %s130, %s131
      %p145 = scmp.eq.s32.totalorder %s18, 7
      %p146 = por %p144, %p145
      %p148 = scmp.ne.s32.totalorder %s131, %s147
      %p149 = scmp.eq.s32.totalorder %s18, 0
      %p150 = por %p148, %p149
      %s152 = sadd.s32 %s151, 1
      %p155 = scmp.eq.s32.totalorder %s12, 7
      %p156 = scmp.ne.s32.totalorder %s151, %s153
      %p157 = scmp.eq.s32.totalorder %s12, 0
      %p158 = por %p156, %p157
      %p159 = scmp.ne.s32.totalorder %s151, %s153
      %p160 = scmp.eq.s32.totalorder %s17, 7
      %p161 = por %p159, %p160
      %p162 = scmp.ne.s32.totalorder %s153, %s154
      %p163 = scmp.eq.s32.totalorder %s17, 0
      %p164 = por %p162, %p163
      %p165 = scmp.ne.s32.totalorder %s153, %s154
      %p166 = scmp.eq.s32.totalorder %s18, 7
      %p167 = por %p165, %p166
      %p169 = scmp.ne.s32.totalorder %s154, %s168
      %p170 = scmp.eq.s32.totalorder %s18, 0
      %p171 = por %p169, %p170
      %s173 = sadd.s32 %s172, 1
      %p176 = scmp.eq.s32.totalorder %s12, 7
      %p177 = scmp.ne.s32.totalorder %s172, %s174
      %p178 = scmp.eq.s32.totalorder %s12, 0
      %p179 = por %p177, %p178
      %p180 = scmp.ne.s32.totalorder %s172, %s174
      %p181 = scmp.eq.s32.totalorder %s17, 7
      %p182 = por %p180, %p181
      %p183 = scmp.ne.s32.totalorder %s174, %s175
      %p184 = scmp.eq.s32.totalorder %s17, 0
      %p185 = por %p183, %p184
      %p186 = scmp.ne.s32.totalorder %s174, %s175
      %p187 = scmp.eq.s32.totalorder %s18, 7
      %p188 = por %p186, %p187
      %p190 = scmp.ne.s32.totalorder %s175, %s189
      %p191 = scmp.eq.s32.totalorder %s18, 0
      %p192 = por %p190, %p191
      %s193 = ssub.s32 %s19, %s38
      %s194 = ssub.s32 %s20, %s34
      %s195 = sor.u32 %s193, %s194
      %p196 = scmp.eq.s32.totalorder %s195, 0
      %s198 = sadd.s32 %s197, 1
      %s199 = scalar_select %p196, %s197, %s198
      %p202 = pneg %p196
      %p203 = scmp.eq.s32.totalorder %s12, 7
      %p204 = por %p202, %p203
      %p205 = scmp.ne.s32.totalorder %s197, %s200
      %p206 = scmp.eq.s32.totalorder %s12, 0
      %p207 = por %p205, %p206
      %p208 = scmp.ne.s32.totalorder %s197, %s200
      %p209 = scmp.eq.s32.totalorder %s17, 7
      %p210 = por %p208, %p209
      %p211 = scmp.ne.s32.totalorder %s200, %s201
      %p212 = scmp.eq.s32.totalorder %s17, 0
      %p213 = por %p211, %p212
      %p214 = scmp.ne.s32.totalorder %s200, %s201
      %p215 = scmp.eq.s32.totalorder %s18, 7
      %p216 = por %p214, %p215
      %p218 = scmp.ne.s32.totalorder %s201, %s217
      %p219 = scmp.eq.s32.totalorder %s18, 0
      %p220 = por %p218, %p219
      %p221 = scmp.le.s32.totalorder 1, %s12
      %p222 = scmp.lt.s32.totalorder %s12, 9
      %p223 = pnand %p221, %p222
      %p224 = pneg %p223
      // Predicated region
      $region9: #{encoder_layer.4} parent=5 // pred_check
        _
      $region10: #{encoder_layer.4} parent=5 // pred_check_branch
        %226 = sbr.rel (%p223) target = $region12
      $region11: #{encoder_layer.4} parent=5 // pred_region
        %s227 = ssub.s32 %s12, 1
        // Predicated region
        $region13: #{encoder_layer.4} parent=11 // pred_check
          %p228 = pneg %p164
        $region14: #{encoder_layer.4} parent=11 // pred_check_branch
          %230 = sbr.rel (%p228) target = $region16
        $region15: #{encoder_layer.4} parent=11 // pred_region
          _
        $region16: #{encoder_layer.4} parent=11 // pred_fallthru
          _
        // Predicated region
        $region17: #{encoder_layer.4} parent=11 // pred_check
          %p231 = pneg %p185
        $region18: #{encoder_layer.4} parent=11 // pred_check_branch
          %233 = sbr.rel (%p231) target = $region20
        $region19: #{encoder_layer.4} parent=11 // pred_region
          _
        $region20: #{encoder_layer.4} parent=11 // pred_fallthru
          _
      $region12: #{encoder_layer.4} parent=5 // pred_fallthru
        _
      %p234 = scmp.lt.s32.totalorder %s12, 8
      // Predicated region
      $region21: #{encoder_layer.4} parent=5 // pred_check
        %p235 = pneg %p234
      $region22: #{encoder_layer.4} parent=5 // pred_check_branch
        %237 = sbr.rel (%p235) target = $region24
      $region23: #{encoder_layer.4} parent=5 // pred_region
        // Predicated region
        $region25: #{encoder_layer.4} parent=23 // pred_check
          %p238 = pneg %p53
        $region26: #{encoder_layer.4} parent=23 // pred_check_branch
          %240 = sbr.rel (%p238) target = $region28
        $region27: #{encoder_layer.4} parent=23 // pred_region
          %s241 = smul.u32 2, %s20
          %p242 = scmp.lt.s32.totalorder %s19, 1
          %s243 = scalar_select %p242, %s19, 1
          %p244 = scmp.lt.s32.totalorder %s241, 3
          %s245 = scalar_select %p244, %s241, 3
          %s246 = smul.addr %s245, 2
          %s247 = smul.addr %s243, 8
          %s248 = sadd.s32 %s246, %s247
          %s249 = smul.addr %s248, 8
          %s250 = scalar_lea.vmem %s0, %s249
          %s251 = smul.u32 2, %s20
        $region28: #{encoder_layer.4} parent=23 // pred_fallthru
          _
        // Predicated region
        $region29: #{encoder_layer.4} parent=23 // pred_check
          %p252 = pneg %p81
        $region30: #{encoder_layer.4} parent=23 // pred_check_branch
          %254 = sbr.rel (%p252) target = $region32
        $region31: #{encoder_layer.4} parent=23 // pred_region
          %s255 = sand.u32 %s71, 1
          %s256 = sand.u32 %s71, 1
          %s257 = smul.addr %s256, 16
          %s258 = scalar_lea.vmem [#allocation5], %s257
          %s259 = smul.u32 2, %s20
          %s260 = smul.addr %s19, 8
          %s261 = sadd.s32 %s259, %s260
          %s262 = smul.addr %s261, 4
          %s263 = scalar_lea.vmem %s1, %s262
          // Predicated region
          $region33: #{encoder_layer.4} parent=31 // pred_check
            _
          $region34: #{encoder_layer.4} parent=31 // pred_check_branch
            %265 = sbr.rel (0) target = $region36
          $region35: #{encoder_layer.4} parent=31 // pred_region
            // Predicated region
            $region37: #{encoder_layer.4} parent=35 // pred_check
              _
            $region38: #{encoder_layer.4} parent=35 // pred_check_branch
              %267 = sbr.rel target = $region40
            $region39: #{encoder_layer.4} parent=35 // pred_region
              // Predicated region
              $region52: #{encoder_layer.4} parent=39 // pred_check
                _
              $region53: #{encoder_layer.4} parent=39 // pred_check_branch
                %289 = sbr.rel (0) target = $region55
              $region54: #{encoder_layer.4} parent=39 // pred_region
                loop: start=0, step=1, limit=1
                $region56: #{encoder_layer.4} parent=54 // loop_pre_header
                  _
                $region57: #{encoder_layer.4} parent=54 // loop_header
                  %s291 = sphi 0, %s295
                  %p292 = scmp.ge.s32.totalorder %s291, 1
                  %s296 = sphi %s263, %s263
                  %s297 = sphi %s258, %s258
                $region58: #{encoder_layer.4} parent=54 // loop_header_branch
                  %294 = sbr.rel (%p292) target = $region62
                $region59: #{encoder_layer.4} parent=54 // loop_body
                  _
                $region60: #{encoder_layer.4} parent=54 // loop_footer
                  %s295 = sadd.s32 1, %s291
                $region61: #{encoder_layer.4} parent=54 // loop_footer_branch
                  %290 = sbr.rel target = $region57
                $region62: #{encoder_layer.4} parent=54 // loop_exit
                  _
                %s299 = ssub.s32 16, 1
                loop: start=0, step=1, limit=1
                $region63: #{encoder_layer.4} parent=54 // loop_pre_header
                  _
                $region64: #{encoder_layer.4} parent=54 // loop_header
                  %s301 = sphi 0, %s305
                  %p302 = scmp.ge.s32.totalorder %s301, 1
                  %s306 = sphi %s263, %s263
                  %s307 = sphi %s258, %s258
                $region65: #{encoder_layer.4} parent=54 // loop_header_branch
                  %304 = sbr.rel (%p302) target = $region69
                $region66: #{encoder_layer.4} parent=54 // loop_body
                  %v308 = vld [vmem:[%s306] sm:%s299]
                  %309 = vst [vmem:[%s307] sm:%s299] %v308
                  %v310 = vld [vmem:[%s306 + $0x4] sm:%s299]
                  %311 = vst [vmem:[%s307 + $0x4] sm:%s299] %v310
                  %v312 = vld [vmem:[%s306 + $0x10] sm:%s299]
                  %313 = vst [vmem:[%s307 + $0x8] sm:%s299] %v312
                  %v314 = vld [vmem:[%s306 + $0x14] sm:%s299]
                  %315 = vst [vmem:[%s307 + $0xc] sm:%s299] %v314
                $region67: #{encoder_layer.4} parent=54 // loop_footer
                  %s305 = sadd.s32 1, %s301
                $region68: #{encoder_layer.4} parent=54 // loop_footer_branch
                  %300 = sbr.rel target = $region64
                $region69: #{encoder_layer.4} parent=54 // loop_exit
                  _
              $region55: #{encoder_layer.4} parent=39 // pred_fallthru
                _
            $region40: #{encoder_layer.4} parent=35 // pred_fallthru
              _
            // Predicated region
            $region41: #{encoder_layer.4} parent=35 // pred_check
              _
            $region42: #{encoder_layer.4} parent=35 // pred_check_branch
              %269 = sbr.rel (0) target = $region44
            $region43: #{encoder_layer.4} parent=35 // pred_region
              %s271 = ssub.s32 16, 1
              loop: start=0, step=1, limit=1
              $region45: #{encoder_layer.4} parent=43 // loop_pre_header
                _
              $region46: #{encoder_layer.4} parent=43 // loop_header
                %s273 = sphi 0, %s277
                %p274 = scmp.ge.s32.totalorder %s273, 1
                %s278 = sphi %s263, %s263
                %s279 = sphi %s258, %s258
              $region47: #{encoder_layer.4} parent=43 // loop_header_branch
                %276 = sbr.rel (%p274) target = $region51
              $region48: #{encoder_layer.4} parent=43 // loop_body
                %v280 = vld [vmem:[%s278] sm:%s271]
                %281 = vst [vmem:[%s279] sm:%s271] %v280
                %v282 = vld [vmem:[%s278 + $0x4] sm:%s271]
                %283 = vst [vmem:[%s279 + $0x4] sm:%s271] %v282
                %v284 = vld [vmem:[%s278 + $0x10] sm:%s271]
                %285 = vst [vmem:[%s279 + $0x8] sm:%s271] %v284
                %v286 = vld [vmem:[%s278 + $0x14] sm:%s271]
                %287 = vst [vmem:[%s279 + $0xc] sm:%s271] %v286
              $region49: #{encoder_layer.4} parent=43 // loop_footer
                %s277 = sadd.s32 1, %s273
              $region50: #{encoder_layer.4} parent=43 // loop_footer_branch
                %272 = sbr.rel target = $region46
              $region51: #{encoder_layer.4} parent=43 // loop_exit
                _
            $region44: #{encoder_layer.4} parent=35 // pred_fallthru
              _
          $region36: #{encoder_layer.4} parent=31 // pred_fallthru
            _
          %316 = vnop
        $region32: #{encoder_layer.4} parent=23 // pred_fallthru
          _
        // Predicated region
        $region70: #{encoder_layer.4} parent=23 // pred_check
          %p317 = pneg %p109
        $region71: #{encoder_layer.4} parent=23 // pred_check_branch
          %319 = sbr.rel (%p317) target = $region73
        $region72: #{encoder_layer.4} parent=23 // pred_region
          %s320 = sand.u32 %s99, 1
          %s321 = sand.u32 %s99, 1
          %s322 = smul.addr %s321, 16
          %s323 = scalar_lea.vmem [#allocation6], %s322
          %s324 = smul.u32 2, %s21
          %s325 = smul.addr %s19, 8
          %s326 = sadd.s32 %s324, %s325
          %s327 = smul.addr %s326, 4
          %s328 = scalar_lea.vmem %s2, %s327
          // Predicated region
          $region74: #{encoder_layer.4} parent=72 // pred_check
            _
          $region75: #{encoder_layer.4} parent=72 // pred_check_branch
            %330 = sbr.rel (0) target = $region77
          $region76: #{encoder_layer.4} parent=72 // pred_region
            // Predicated region
            $region78: #{encoder_layer.4} parent=76 // pred_check
              _
            $region79: #{encoder_layer.4} parent=76 // pred_check_branch
              %332 = sbr.rel target = $region81
            $region80: #{encoder_layer.4} parent=76 // pred_region
              // Predicated region
              $region93: #{encoder_layer.4} parent=80 // pred_check
                _
              $region94: #{encoder_layer.4} parent=80 // pred_check_branch
                %354 = sbr.rel (0) target = $region96
              $region95: #{encoder_layer.4} parent=80 // pred_region
                loop: start=0, step=1, limit=1
                $region97: #{encoder_layer.4} parent=95 // loop_pre_header
                  _
                $region98: #{encoder_layer.4} parent=95 // loop_header
                  %s356 = sphi 0, %s360
                  %p357 = scmp.ge.s32.totalorder %s356, 1
                  %s361 = sphi %s328, %s328
                  %s362 = sphi %s323, %s323
                $region99: #{encoder_layer.4} parent=95 // loop_header_branch
                  %359 = sbr.rel (%p357) target = $region103
                $region100: #{encoder_layer.4} parent=95 // loop_body
                  _
                $region101: #{encoder_layer.4} parent=95 // loop_footer
                  %s360 = sadd.s32 1, %s356
                $region102: #{encoder_layer.4} parent=95 // loop_footer_branch
                  %355 = sbr.rel target = $region98
                $region103: #{encoder_layer.4} parent=95 // loop_exit
                  _
                %s364 = ssub.s32 16, 1
                loop: start=0, step=1, limit=1
                $region104: #{encoder_layer.4} parent=95 // loop_pre_header
                  _
                $region105: #{encoder_layer.4} parent=95 // loop_header
                  %s366 = sphi 0, %s370
                  %p367 = scmp.ge.s32.totalorder %s366, 1
                  %s371 = sphi %s328, %s328
                  %s372 = sphi %s323, %s323
                $region106: #{encoder_layer.4} parent=95 // loop_header_branch
                  %369 = sbr.rel (%p367) target = $region110
                $region107: #{encoder_layer.4} parent=95 // loop_body
                  %v373 = vld [vmem:[%s371] sm:%s364]
                  %374 = vst [vmem:[%s372] sm:%s364] %v373
                  %v375 = vld [vmem:[%s371 + $0x4] sm:%s364]
                  %376 = vst [vmem:[%s372 + $0x4] sm:%s364] %v375
                  %v377 = vld [vmem:[%s371 + $0x10] sm:%s364]
                  %378 = vst [vmem:[%s372 + $0x8] sm:%s364] %v377
                  %v379 = vld [vmem:[%s371 + $0x14] sm:%s364]
                  %380 = vst [vmem:[%s372 + $0xc] sm:%s364] %v379
                $region108: #{encoder_layer.4} parent=95 // loop_footer
                  %s370 = sadd.s32 1, %s366
                $region109: #{encoder_layer.4} parent=95 // loop_footer_branch
                  %365 = sbr.rel target = $region105
                $region110: #{encoder_layer.4} parent=95 // loop_exit
                  _
              $region96: #{encoder_layer.4} parent=80 // pred_fallthru
                _
            $region81: #{encoder_layer.4} parent=76 // pred_fallthru
              _
            // Predicated region
            $region82: #{encoder_layer.4} parent=76 // pred_check
              _
            $region83: #{encoder_layer.4} parent=76 // pred_check_branch
              %334 = sbr.rel (0) target = $region85
            $region84: #{encoder_layer.4} parent=76 // pred_region
              %s336 = ssub.s32 16, 1
              loop: start=0, step=1, limit=1
              $region86: #{encoder_layer.4} parent=84 // loop_pre_header
                _
              $region87: #{encoder_layer.4} parent=84 // loop_header
                %s338 = sphi 0, %s342
                %p339 = scmp.ge.s32.totalorder %s338, 1
                %s343 = sphi %s328, %s328
                %s344 = sphi %s323, %s323
              $region88: #{encoder_layer.4} parent=84 // loop_header_branch
                %341 = sbr.rel (%p339) target = $region92
              $region89: #{encoder_layer.4} parent=84 // loop_body
                %v345 = vld [vmem:[%s343] sm:%s336]
                %346 = vst [vmem:[%s344] sm:%s336] %v345
                %v347 = vld [vmem:[%s343 + $0x4] sm:%s336]
                %348 = vst [vmem:[%s344 + $0x4] sm:%s336] %v347
                %v349 = vld [vmem:[%s343 + $0x10] sm:%s336]
                %350 = vst [vmem:[%s344 + $0x8] sm:%s336] %v349
                %v351 = vld [vmem:[%s343 + $0x14] sm:%s336]
                %352 = vst [vmem:[%s344 + $0xc] sm:%s336] %v351
              $region90: #{encoder_layer.4} parent=84 // loop_footer
                %s342 = sadd.s32 1, %s338
              $region91: #{encoder_layer.4} parent=84 // loop_footer_branch
                %337 = sbr.rel target = $region87
              $region92: #{encoder_layer.4} parent=84 // loop_exit
                _
            $region85: #{encoder_layer.4} parent=76 // pred_fallthru
              _
          $region77: #{encoder_layer.4} parent=72 // pred_fallthru
            _
          %381 = vnop
        $region73: #{encoder_layer.4} parent=23 // pred_fallthru
          _
        // Predicated region
        $region111: #{encoder_layer.4} parent=23 // pred_check
          %p382 = pneg %p137
        $region112: #{encoder_layer.4} parent=23 // pred_check_branch
          %384 = sbr.rel (%p382) target = $region114
        $region113: #{encoder_layer.4} parent=23 // pred_region
          %s385 = sand.u32 %s127, 1
          %s386 = sand.u32 %s127, 1
          %s387 = smul.addr %s386, 16
          %s388 = scalar_lea.vmem [#allocation7], %s387
          %s389 = smul.u32 2, %s21
          %s390 = smul.addr %s19, 8
          %s391 = sadd.s32 %s389, %s390
          %s392 = smul.addr %s391, 4
          %s393 = scalar_lea.vmem %s3, %s392
          // Predicated region
          $region115: #{encoder_layer.4} parent=113 // pred_check
            _
          $region116: #{encoder_layer.4} parent=113 // pred_check_branch
            %395 = sbr.rel (0) target = $region118
          $region117: #{encoder_layer.4} parent=113 // pred_region
            // Predicated region
            $region119: #{encoder_layer.4} parent=117 // pred_check
              _
            $region120: #{encoder_layer.4} parent=117 // pred_check_branch
              %397 = sbr.rel target = $region122
            $region121: #{encoder_layer.4} parent=117 // pred_region
              // Predicated region
              $region134: #{encoder_layer.4} parent=121 // pred_check
                _
              $region135: #{encoder_layer.4} parent=121 // pred_check_branch
                %419 = sbr.rel (0) target = $region137
              $region136: #{encoder_layer.4} parent=121 // pred_region
                loop: start=0, step=1, limit=1
                $region138: #{encoder_layer.4} parent=136 // loop_pre_header
                  _
                $region139: #{encoder_layer.4} parent=136 // loop_header
                  %s421 = sphi 0, %s425
                  %p422 = scmp.ge.s32.totalorder %s421, 1
                  %s426 = sphi %s393, %s393
                  %s427 = sphi %s388, %s388
                $region140: #{encoder_layer.4} parent=136 // loop_header_branch
                  %424 = sbr.rel (%p422) target = $region144
                $region141: #{encoder_layer.4} parent=136 // loop_body
                  _
                $region142: #{encoder_layer.4} parent=136 // loop_footer
                  %s425 = sadd.s32 1, %s421
                $region143: #{encoder_layer.4} parent=136 // loop_footer_branch
                  %420 = sbr.rel target = $region139
                $region144: #{encoder_layer.4} parent=136 // loop_exit
                  _
                %s429 = ssub.s32 16, 1
                loop: start=0, step=1, limit=1
                $region145: #{encoder_layer.4} parent=136 // loop_pre_header
                  _
                $region146: #{encoder_layer.4} parent=136 // loop_header
                  %s431 = sphi 0, %s435
                  %p432 = scmp.ge.s32.totalorder %s431, 1
                  %s436 = sphi %s393, %s393
                  %s437 = sphi %s388, %s388
                $region147: #{encoder_layer.4} parent=136 // loop_header_branch
                  %434 = sbr.rel (%p432) target = $region151
                $region148: #{encoder_layer.4} parent=136 // loop_body
                  %v438 = vld [vmem:[%s436] sm:%s429]
                  %439 = vst [vmem:[%s437] sm:%s429] %v438
                  %v440 = vld [vmem:[%s436 + $0x4] sm:%s429]
                  %441 = vst [vmem:[%s437 + $0x4] sm:%s429] %v440
                  %v442 = vld [vmem:[%s436 + $0x10] sm:%s429]
                  %443 = vst [vmem:[%s437 + $0x8] sm:%s429] %v442
                  %v444 = vld [vmem:[%s436 + $0x14] sm:%s429]
                  %445 = vst [vmem:[%s437 + $0xc] sm:%s429] %v444
                $region149: #{encoder_layer.4} parent=136 // loop_footer
                  %s435 = sadd.s32 1, %s431
                $region150: #{encoder_layer.4} parent=136 // loop_footer_branch
                  %430 = sbr.rel target = $region146
                $region151: #{encoder_layer.4} parent=136 // loop_exit
                  _
              $region137: #{encoder_layer.4} parent=121 // pred_fallthru
                _
            $region122: #{encoder_layer.4} parent=117 // pred_fallthru
              _
            // Predicated region
            $region123: #{encoder_layer.4} parent=117 // pred_check
              _
            $region124: #{encoder_layer.4} parent=117 // pred_check_branch
              %399 = sbr.rel (0) target = $region126
            $region125: #{encoder_layer.4} parent=117 // pred_region
              %s401 = ssub.s32 16, 1
              loop: start=0, step=1, limit=1
              $region127: #{encoder_layer.4} parent=125 // loop_pre_header
                _
              $region128: #{encoder_layer.4} parent=125 // loop_header
                %s403 = sphi 0, %s407
                %p404 = scmp.ge.s32.totalorder %s403, 1
                %s408 = sphi %s393, %s393
                %s409 = sphi %s388, %s388
              $region129: #{encoder_layer.4} parent=125 // loop_header_branch
                %406 = sbr.rel (%p404) target = $region133
              $region130: #{encoder_layer.4} parent=125 // loop_body
                %v410 = vld [vmem:[%s408] sm:%s401]
                %411 = vst [vmem:[%s409] sm:%s401] %v410
                %v412 = vld [vmem:[%s408 + $0x4] sm:%s401]
                %413 = vst [vmem:[%s409 + $0x4] sm:%s401] %v412
                %v414 = vld [vmem:[%s408 + $0x10] sm:%s401]
                %415 = vst [vmem:[%s409 + $0x8] sm:%s401] %v414
                %v416 = vld [vmem:[%s408 + $0x14] sm:%s401]
                %417 = vst [vmem:[%s409 + $0xc] sm:%s401] %v416
              $region131: #{encoder_layer.4} parent=125 // loop_footer
                %s407 = sadd.s32 1, %s403
              $region132: #{encoder_layer.4} parent=125 // loop_footer_branch
                %402 = sbr.rel target = $region128
              $region133: #{encoder_layer.4} parent=125 // loop_exit
                _
            $region126: #{encoder_layer.4} parent=117 // pred_fallthru
              _
          $region118: #{encoder_layer.4} parent=113 // pred_fallthru
            _
          %446 = vnop
        $region114: #{encoder_layer.4} parent=23 // pred_fallthru
          _
      $region24: #{encoder_layer.4} parent=5 // pred_fallthru
        _
      %p447 = scmp.le.s32.totalorder 1, %s12
      %p448 = scmp.lt.s32.totalorder %s12, 9
      %p449 = pnand %p447, %p448
      %p450 = pneg %p449
      // Predicated region
      $region152: #{encoder_layer.4} parent=5 // pred_check
        _
      $region153: #{encoder_layer.4} parent=5 // pred_check_branch
        %452 = sbr.rel (%p449) target = $region155
      $region154: #{encoder_layer.4} parent=5 // pred_region
        %s453 = ssub.s32 %s12, 1
        %s454 = sand.u32 %s74, 1
        %s455 = sand.u32 %s74, 1
        %s456 = smul.addr %s455, 16
        %s457 = scalar_lea.vmem [#allocation5], %s456
        // Predicated region
        $region156: #{encoder_layer.4} parent=154 // pred_check
          %p458 = pneg %p87
        $region157: #{encoder_layer.4} parent=154 // pred_check_branch
          %460 = sbr.rel (%p458) target = $region159
        $region158: #{encoder_layer.4} parent=154 // pred_region
          _
        $region159: #{encoder_layer.4} parent=154 // pred_fallthru
          _
        %s461 = sand.u32 %s102, 1
        %s462 = sand.u32 %s102, 1
        %s463 = smul.addr %s462, 16
        %s464 = scalar_lea.vmem [#allocation6], %s463
        // Predicated region
        $region160: #{encoder_layer.4} parent=154 // pred_check
          %p465 = pneg %p115
        $region161: #{encoder_layer.4} parent=154 // pred_check_branch
          %467 = sbr.rel (%p465) target = $region163
        $region162: #{encoder_layer.4} parent=154 // pred_region
          _
        $region163: #{encoder_layer.4} parent=154 // pred_fallthru
          _
        %s468 = sand.u32 %s130, 1
        %s469 = sand.u32 %s130, 1
        %s470 = smul.addr %s469, 16
        %s471 = scalar_lea.vmem [#allocation7], %s470
        // Predicated region
        $region164: #{encoder_layer.4} parent=154 // pred_check
          %p472 = pneg %p143
        $region165: #{encoder_layer.4} parent=154 // pred_check_branch
          %474 = sbr.rel (%p472) target = $region167
        $region166: #{encoder_layer.4} parent=154 // pred_region
          _
        $region167: #{encoder_layer.4} parent=154 // pred_fallthru
          _
        %s475 = smul.u32 2, %s23
        %p476 = scmp.lt.s32.totalorder %s22, 1
        %s477 = scalar_select %p476, %s22, 1
        %p478 = scmp.lt.s32.totalorder %s475, 3
        %s479 = scalar_select %p478, %s475, 3
        %s480 = smul.addr %s479, 2
        %s481 = smul.addr %s477, 8
        %s482 = sadd.s32 %s480, %s481
        %s483 = smul.addr %s482, 8
        %s484 = scalar_lea.vmem %s0, %s483
        %p485 = pneg %p59
        %p486 = pneg %p56
        %s487 = sand.u32 %s74, 1
        %s488 = sand.u32 %s74, 1
        %s489 = smul.addr %s488, 16
        %s490 = scalar_lea.vmem [#allocation5], %s489
        %p491 = pneg %p87
        %p492 = pneg %p84
        %s493 = sand.u32 %s102, 1
        %s494 = sand.u32 %s102, 1
        %s495 = smul.addr %s494, 16
        %s496 = scalar_lea.vmem [#allocation6], %s495
        %p497 = pneg %p115
        %p498 = pneg %p112
        %s499 = sand.u32 %s130, 1
        %s500 = sand.u32 %s130, 1
        %s501 = smul.addr %s500, 16
        %s502 = scalar_lea.vmem [#allocation7], %s501
        %p503 = pneg %p143
        %p504 = pneg %p140
        %p505 = pneg %p164
        %p506 = pneg %p161
        %p507 = pneg %p185
        %p508 = pneg %p182
        %p509 = pneg %p213
        %p510 = pneg %p210
        %s511 = smul.u32 2, %s23
        %p512 = scmp.lt.s32.totalorder %s22, 1
        %s513 = scalar_select %p512, %s22, 1
        %p514 = scmp.lt.s32.totalorder %s511, 3
        %s515 = scalar_select %p514, %s511, 3
        %s516 = smul.addr %s515, 2
        %s517 = smul.addr %s513, 8
        %s518 = sadd.s32 %s516, %s517
        %s519 = smul.addr %s518, 8
        %s520 = scalar_lea.vmem %s6, %s519
        %s521 = smul.u32 2, %s23
        %p522 = scmp.lt.s32.totalorder %s22, 1
        %s523 = scalar_select %p522, %s22, 1
        %p524 = scmp.lt.s32.totalorder %s521, 3
        %s525 = scalar_select %p524, %s521, 3
        %s526 = smul.addr %s525, 2
        %s527 = smul.addr %s523, 8
        %s528 = sadd.s32 %s526, %s527
        %s529 = smul.addr %s528, 8
        %s530 = scalar_lea.vmem %s0, %s529
        %s531 = smul.u32 2, %s23
        %s532 = smul.u32 2, %s23
        %s533 = smul.u32 2, %s24
        %s534 = smul.u32 2, %s24
        %s535 = smul.u32 2, %s23
        %p536 = scmp.lt.s32.totalorder %s22, 1
        %s537 = scalar_select %p536, %s22, 1
        %p538 = scmp.lt.s32.totalorder %s535, 3
        %s539 = scalar_select %p538, %s535, 3
        %s540 = smul.addr %s539, 2
        %s541 = smul.addr %s537, 8
        %s542 = sadd.s32 %s540, %s541
        %s543 = smul.addr %s542, 8
        %s544 = scalar_lea.vmem %s6, %s543
        %s545 = smul.u32 2, %s23
        %p547 = scmp.eq.s32.totalorder %s24, 0
        // Predicated region
        $region168: #{encoder_layer.4} parent=154 // pred_check
          %p548 = pneg %p547
        $region169: #{encoder_layer.4} parent=154 // pred_check_branch
          %550 = sbr.rel (%p548) target = $region171
        $region170: #{encoder_layer.4} parent=154 // pred_region
          %vm551 = vcmask 7168
          %552 = vst.msk [vmem:[#allocation2] sm:$0xff] %vm551, -inf
          %553 = vst.msk [vmem:[#allocation2 + $0x8] sm:$0xff] %vm551, -inf
          %554 = vst.msk [vmem:[#allocation2 + $0x10] sm:$0xff] %vm551, -inf
          %555 = vst.msk [vmem:[#allocation2 + $0x18] sm:$0xff] %vm551, -inf
          %556 = vst.msk [vmem:[#allocation3] sm:$0xff] %vm551, 0.0
          %557 = vst.msk [vmem:[#allocation3 + $0x8] sm:$0xff] %vm551, 0.0
          %558 = vst.msk [vmem:[#allocation3 + $0x10] sm:$0xff] %vm551, 0.0
          %559 = vst.msk [vmem:[#allocation3 + $0x18] sm:$0xff] %vm551, 0.0
          %560 = vst [vmem:[#allocation4] sm:$0xff] 0.0
          %561 = vst [vmem:[#allocation4 + $0x8] sm:$0xff] 0.0
          %562 = vst [vmem:[#allocation4 + $0x10] sm:$0xff] 0.0
          %563 = vst [vmem:[#allocation4 + $0x18] sm:$0xff] 0.0
        $region171: #{encoder_layer.4} parent=154 // pred_fallthru
          _
        %v564 = vld [vmem:[%s457] sm:$0xf]
        %v565 = vld [vmem:[%s457 + $0x4] sm:$0xf]
        %v566 = vld [vmem:[%s457 + $0x8] sm:$0xf]
        %v567 = vld [vmem:[%s457 + $0xc] sm:$0xf]
        %v568 = vld [vmem:[%s464] sm:$0xf]
        %v569 = vld [vmem:[%s464 + $0x4] sm:$0xf]
        %v570 = vld [vmem:[%s464 + $0x8] sm:$0xf]
        %v571 = vld [vmem:[%s464 + $0xc] sm:$0xf]
        %v574 = vunpack.c.l.b16 %v564
        %v575 = vunpack.c.l.b16 %v565
        %v576 = vpack.c.b16 %v575, %v574
        %v580 = vunpack.c.l.b16 %v568
        %v581 = vunpack.c.l.b16 %v569
        %v582 = vpack.c.b16 %v581, %v580
        %584 = vmatpush.bf16.xpose.msra.mxu0 0
        %585 = vmatpush.bf16.xpose.msra.mxu0 0
        %586 = vmatpush.bf16.xpose.msra.mxu0 0
        %587 = vmatpush.bf16.xpose.msra.mxu0 0
        %588 = vmatpush.bf16.xpose.msra.mxu0 0
        %589 = vmatpush.bf16.xpose.msra.mxu0 0
        %590 = vmatpush.bf16.xpose.msra.mxu0 0
        %591 = vmatpush.bf16.xpose.msra.mxu0 %v582
        %592 = vmatmul.bf16.gmra.mxu0 %v576
        %v593 = vpop.f32.mrf.mxu0
        %v594 = vadd.f32 0.0, %v593
        %v595 = vpop.f32.mrf.mxu0
        %v596 = vadd.f32 0.0, %v595
        %597 = vdwg.mxu0
        %v600 = vunpack.c.l.b16 %v566
        %v601 = vunpack.c.l.b16 %v567
        %v602 = vpack.c.b16 %v601, %v600
        %v606 = vunpack.c.l.b16 %v570
        %v607 = vunpack.c.l.b16 %v571
        %v608 = vpack.c.b16 %v607, %v606
        %610 = vmatpush.bf16.xpose.msra.mxu0 0
        %611 = vmatpush.bf16.xpose.msra.mxu0 0
        %612 = vmatpush.bf16.xpose.msra.mxu0 0
        %613 = vmatpush.bf16.xpose.msra.mxu0 0
        %614 = vmatpush.bf16.xpose.msra.mxu0 0
        %615 = vmatpush.bf16.xpose.msra.mxu0 0
        %616 = vmatpush.bf16.xpose.msra.mxu0 0
        %617 = vmatpush.bf16.xpose.msra.mxu0 %v608
        %618 = vmatmul.bf16.gmra.mxu0 %v602
        %v619 = vpop.f32.mrf.mxu0
        %v620 = vadd.f32 0.0, %v619
        %v621 = vpop.f32.mrf.mxu0
        %v622 = vadd.f32 0.0, %v621
        %623 = vdwg.mxu0
        %v624 = vmul.f32 %v594, 0.088388346
        %v625 = vmul.f32 %v596, 0.088388346
        %v626 = vmul.f32 %v620, 0.088388346
        %v627 = vmul.f32 %v622, 0.088388346
        %v628 = vld [vmem:[#allocation2] sm:$0xff]
        %v629 = vld [vmem:[#allocation2 + $0x8] sm:$0xff]
        %v630 = vld [vmem:[#allocation2 + $0x10] sm:$0xff]
        %v631 = vld [vmem:[#allocation2 + $0x18] sm:$0xff]
        %vm632 = vcmask 130048
        %v633 = vsel %vm632, %v624, -inf
        %634 = vmax.xlane.f32.xlu0 %v633
        %v635 = vpop.xlane.xlu0 %634
        %v636 = vsel %vm632, %v625, -inf
        %637 = vmax.xlane.f32.xlu0 %v636
        %v638 = vpop.xlane.xlu0 %637
        %v639 = vsel %vm632, %v626, -inf
        %640 = vmax.xlane.f32.xlu0 %v639
        %v641 = vpop.xlane.xlu0 %640
        %v642 = vsel %vm632, %v627, -inf
        %643 = vmax.xlane.f32.xlu0 %v642
        %v644 = vpop.xlane.xlu0 %643
        %v645 = vmax.f32 %v628, %v635
        %v646 = vmax.f32 %v629, %v638
        %v647 = vmax.f32 %v630, %v641
        %v648 = vmax.f32 %v631, %v644
        %v649 = vsub.f32 %v628, %v645
        %v650 = vsub.f32 %v629, %v646
        %v651 = vsub.f32 %v630, %v647
        %v652 = vsub.f32 %v631, %v648
        %v653 = vmul.f32 %v649, 1.442695
        %v654 = vpow.pop %v653
        %v655 = vmul.f32 %v650, 1.442695
        %v656 = vpow.pop %v655
        %v657 = vmul.f32 %v651, 1.442695
        %v658 = vpow.pop %v657
        %v659 = vmul.f32 %v652, 1.442695
        %v660 = vpow.pop %v659
        %662 = vset.pattern.permute.xlu0 0
        %663 = vperm.xlu0 %662, %v645
        %v664 = vpop.permute.xlu0 %663
        %667 = vset.pattern.permute.xlu0 0
        %668 = vperm.xlu0 %667, %v646
        %v669 = vpop.permute.xlu0 %668
        %672 = vset.pattern.permute.xlu0 0
        %673 = vperm.xlu0 %672, %v647
        %v674 = vpop.permute.xlu0 %673
        %677 = vset.pattern.permute.xlu0 0
        %678 = vperm.xlu0 %677, %v648
        %v679 = vpop.permute.xlu0 %678
        %v681 = vsub.f32 %v624, %v664
        %v682 = vsub.f32 %v625, %v669
        %v683 = vsub.f32 %v626, %v674
        %v684 = vsub.f32 %v627, %v679
        %v685 = vmul.f32 %v681, 1.442695
        %v686 = vpow.pop %v685
        %v687 = vmul.f32 %v682, 1.442695
        %v688 = vpow.pop %v687
        %v689 = vmul.f32 %v683, 1.442695
        %v690 = vpow.pop %v689
        %v691 = vmul.f32 %v684, 1.442695
        %v692 = vpow.pop %v691
        %v693 = vld [vmem:[#allocation3] sm:$0xff]
        %v694 = vld [vmem:[#allocation3 + $0x8] sm:$0xff]
        %v695 = vld [vmem:[#allocation3 + $0x10] sm:$0xff]
        %v696 = vld [vmem:[#allocation3 + $0x18] sm:$0xff]
        %v697 = vmul.f32 %v654, %v693
        %v698 = vmul.f32 %v656, %v694
        %v699 = vmul.f32 %v658, %v695
        %v700 = vmul.f32 %v660, %v696
        %v701 = vsel %vm632, %v686, 0.0
        %702 = vadd.xlane.f32.xlu0 %v701
        %v703 = vpop.xlane.xlu0 %702
        %v704 = vsel %vm632, %v688, 0.0
        %705 = vadd.xlane.f32.xlu0 %v704
        %v706 = vpop.xlane.xlu0 %705
        %v707 = vsel %vm632, %v690, 0.0
        %708 = vadd.xlane.f32.xlu0 %v707
        %v709 = vpop.xlane.xlu0 %708
        %v710 = vsel %vm632, %v692, 0.0
        %711 = vadd.xlane.f32.xlu0 %v710
        %v712 = vpop.xlane.xlu0 %711
        %v713 = vadd.f32 %v697, %v703
        %v714 = vadd.f32 %v698, %v706
        %v715 = vadd.f32 %v699, %v709
        %v716 = vadd.f32 %v700, %v712
        %vm717 = vcmask 7168
        %718 = vst.msk [vmem:[#allocation3] sm:$0xff] %vm717, %v713
        %719 = vst.msk [vmem:[#allocation3 + $0x8] sm:$0xff] %vm717, %v714
        %720 = vst.msk [vmem:[#allocation3 + $0x10] sm:$0xff] %vm717, %v715
        %721 = vst.msk [vmem:[#allocation3 + $0x18] sm:$0xff] %vm717, %v716
        %v722 = vld [vmem:[#allocation4] sm:$0xff]
        %v723 = vld [vmem:[#allocation4 + $0x8] sm:$0xff]
        %v724 = vld [vmem:[#allocation4 + $0x10] sm:$0xff]
        %v725 = vld [vmem:[#allocation4 + $0x18] sm:$0xff]
        %727 = vset.pattern.permute.xlu0 0
        %728 = vperm.xlu0 %727, %v654
        %v729 = vpop.permute.xlu0 %728
        %732 = vset.pattern.permute.xlu0 0
        %733 = vperm.xlu0 %732, %v656
        %v734 = vpop.permute.xlu0 %733
        %737 = vset.pattern.permute.xlu0 0
        %738 = vperm.xlu0 %737, %v658
        %v739 = vpop.permute.xlu0 %738
        %742 = vset.pattern.permute.xlu0 0
        %743 = vperm.xlu0 %742, %v660
        %v744 = vpop.permute.xlu0 %743
        %v746 = vmul.f32 %v729, %v722
        %v747 = vmul.f32 %v734, %v723
        %v748 = vmul.f32 %v739, %v724
        %v749 = vmul.f32 %v744, %v725
        %v750 = vpack.c.bf16 %v686, %v686
        %v751 = vpack.c.bf16 %v688, %v688
        %v752 = vpack.c.bf16 %v690, %v690
        %v753 = vpack.c.bf16 %v692, %v692
        %v754 = vld [vmem:[%s471] sm:$0xf]
        %v755 = vld [vmem:[%s471 + $0x4] sm:$0xf]
        %v756 = vld [vmem:[%s471 + $0x8] sm:$0xf]
        %v757 = vld [vmem:[%s471 + $0xc] sm:$0xf]
        %v760 = vunpack.c.l.b16 %v750
        %v761 = vunpack.c.l.b16 %v751
        %v762 = vpack.c.b16 %v761, %v760
        %v765 = vunpack.c.l.b16 %v754
        %v766 = vunpack.c.l.b16 %v755
        %v767 = vpack.c.b16 %v766, %v765
        %v770 = vsel %vm632, %v762, 0
        %772 = vmatpush.bf16.msra.mxu0 0
        %773 = vmatpush.bf16.msra.mxu0 0
        %774 = vmatpush.bf16.msra.mxu0 0
        %775 = vmatpush.bf16.msra.mxu0 0
        %776 = vmatpush.bf16.msra.mxu0 0
        %777 = vmatpush.bf16.msra.mxu0 0
        %778 = vmatpush.bf16.msra.mxu0 0
        %779 = vmatpush.bf16.msra.mxu0 %v767
        %780 = vmatmul.bf16.gmra.mxu0 %v770
        %v781 = vpop.f32.mrf.mxu0
        %v782 = vadd.f32 0.0, %v781
        %v783 = vpop.f32.mrf.mxu0
        %v784 = vadd.f32 0.0, %v783
        %785 = vdwg.mxu0
        %v788 = vunpack.c.l.b16 %v752
        %v789 = vunpack.c.l.b16 %v753
        %v790 = vpack.c.b16 %v789, %v788
        %v793 = vunpack.c.l.b16 %v756
        %v794 = vunpack.c.l.b16 %v757
        %v795 = vpack.c.b16 %v794, %v793
        %v798 = vsel %vm632, %v790, 0
        %800 = vmatpush.bf16.msra.mxu0 0
        %801 = vmatpush.bf16.msra.mxu0 0
        %802 = vmatpush.bf16.msra.mxu0 0
        %803 = vmatpush.bf16.msra.mxu0 0
        %804 = vmatpush.bf16.msra.mxu0 0
        %805 = vmatpush.bf16.msra.mxu0 0
        %806 = vmatpush.bf16.msra.mxu0 0
        %807 = vmatpush.bf16.msra.mxu0 %v795
        %808 = vmatmul.bf16.gmra.mxu0 %v798
        %v809 = vpop.f32.mrf.mxu0
        %v810 = vadd.f32 0.0, %v809
        %v811 = vpop.f32.mrf.mxu0
        %v812 = vadd.f32 0.0, %v811
        %813 = vdwg.mxu0
        %v814 = vadd.f32 %v746, %v782
        %v815 = vadd.f32 %v747, %v784
        %v816 = vadd.f32 %v748, %v810
        %v817 = vadd.f32 %v749, %v812
        %818 = vst [vmem:[#allocation4] sm:$0xff] %v814
        %819 = vst [vmem:[#allocation4 + $0x8] sm:$0xff] %v815
        %820 = vst [vmem:[#allocation4 + $0x10] sm:$0xff] %v816
        %821 = vst [vmem:[#allocation4 + $0x18] sm:$0xff] %v817
        %822 = vst.msk [vmem:[#allocation2] sm:$0xff] %vm717, %v645
        %823 = vst.msk [vmem:[#allocation2 + $0x8] sm:$0xff] %vm717, %v646
        %824 = vst.msk [vmem:[#allocation2 + $0x10] sm:$0xff] %vm717, %v647
        %825 = vst.msk [vmem:[#allocation2 + $0x18] sm:$0xff] %vm717, %v648
        %p826 = scmp.eq.s32.totalorder %s24, 1
        // Predicated region
        $region172: #{encoder_layer.4} parent=154 // pred_check
          %p827 = pneg %p826
        $region173: #{encoder_layer.4} parent=154 // pred_check_branch
          %829 = sbr.rel (%p827) target = $region175
        $region174: #{encoder_layer.4} parent=154 // pred_region
          %v830 = vld [vmem:[#allocation4] sm:$0xff]
          %v831 = vld [vmem:[#allocation4 + $0x8] sm:$0xff]
          %v832 = vld [vmem:[#allocation4 + $0x10] sm:$0xff]
          %v833 = vld [vmem:[#allocation4 + $0x18] sm:$0xff]
          %v834 = vld [vmem:[#allocation3] sm:$0xff]
          %v835 = vld [vmem:[#allocation3 + $0x8] sm:$0xff]
          %v836 = vld [vmem:[#allocation3 + $0x10] sm:$0xff]
          %v837 = vld [vmem:[#allocation3 + $0x18] sm:$0xff]
          %v838 = vrcp.pop %v834
          %v839 = vrcp.pop %v835
          %v840 = vrcp.pop %v836
          %v841 = vrcp.pop %v837
          %843 = vset.pattern.permute.xlu0 0
          %844 = vperm.xlu0 %843, %v838
          %v845 = vpop.permute.xlu0 %844
          %848 = vset.pattern.permute.xlu0 0
          %849 = vperm.xlu0 %848, %v839
          %v850 = vpop.permute.xlu0 %849
          %853 = vset.pattern.permute.xlu0 0
          %854 = vperm.xlu0 %853, %v840
          %v855 = vpop.permute.xlu0 %854
          %858 = vset.pattern.permute.xlu0 0
          %859 = vperm.xlu0 %858, %v841
          %v860 = vpop.permute.xlu0 %859
          %v862 = vmul.f32 %v830, %v845
          %v863 = vmul.f32 %v831, %v850
          %v864 = vmul.f32 %v832, %v855
          %v865 = vmul.f32 %v833, %v860
          %v866 = vpack.c.bf16 %v863, %v862
          %v867 = vld [vmem:[%s4] sm:$0xff]
          %v868 = vld [vmem:[%s4 + $0x8] sm:$0xff]
          %v869 = vld [vmem:[%s4 + $0x10] sm:$0xff]
          %v870 = vld [vmem:[%s4 + $0x18] sm:$0xff]
          %v871 = vld [vmem:[%s4 + $0x20] sm:$0xff]
          %v872 = vld [vmem:[%s4 + $0x28] sm:$0xff]
          %v873 = vld [vmem:[%s4 + $0x30] sm:$0xff]
          %v874 = vld [vmem:[%s4 + $0x38] sm:$0xff]
          %v875 = vld [vmem:[%s4 + $0x40] sm:$0xff]
          %v876 = vld [vmem:[%s4 + $0x48] sm:$0xff]
          %v877 = vld [vmem:[%s4 + $0x50] sm:$0xff]
          %v878 = vld [vmem:[%s4 + $0x58] sm:$0xff]
          %v879 = vld [vmem:[%s4 + $0x60] sm:$0xff]
          %v880 = vld [vmem:[%s4 + $0x68] sm:$0xff]
          %v881 = vld [vmem:[%s4 + $0x70] sm:$0xff]
          %v882 = vld [vmem:[%s4 + $0x78] sm:$0xff]
          %v883 = vpack.c.bf16 %v865, %v864
          %s884 = scalar_lea.vmem %s4, 128
          %v885 = vld [vmem:[%s884] sm:$0xff]
          %v886 = vld [vmem:[%s884 + $0x8] sm:$0xff]
          %v887 = vld [vmem:[%s884 + $0x10] sm:$0xff]
          %v888 = vld [vmem:[%s884 + $0x18] sm:$0xff]
          %v889 = vld [vmem:[%s884 + $0x20] sm:$0xff]
          %v890 = vld [vmem:[%s884 + $0x28] sm:$0xff]
          %v891 = vld [vmem:[%s884 + $0x30] sm:$0xff]
          %v892 = vld [vmem:[%s884 + $0x38] sm:$0xff]
          %v893 = vld [vmem:[%s884 + $0x40] sm:$0xff]
          %v894 = vld [vmem:[%s884 + $0x48] sm:$0xff]
          %v895 = vld [vmem:[%s884 + $0x50] sm:$0xff]
          %v896 = vld [vmem:[%s884 + $0x58] sm:$0xff]
          %v897 = vld [vmem:[%s884 + $0x60] sm:$0xff]
          %v898 = vld [vmem:[%s884 + $0x68] sm:$0xff]
          %v899 = vld [vmem:[%s884 + $0x70] sm:$0xff]
          %v900 = vld [vmem:[%s884 + $0x78] sm:$0xff]
          %v917 = vunpack.c.l.b16 %v885
          %v918 = vunpack.c.h.b16 %v885
          %v919 = vunpack.c.l.b16 %v886
          %v920 = vunpack.c.h.b16 %v886
          %v921 = vunpack.c.l.b16 %v887
          %v922 = vunpack.c.h.b16 %v887
          %v923 = vunpack.c.l.b16 %v888
          %v924 = vunpack.c.h.b16 %v888
          %v925 = vunpack.c.l.b16 %v889
          %v926 = vunpack.c.h.b16 %v889
          %v927 = vunpack.c.l.b16 %v890
          %v928 = vunpack.c.h.b16 %v890
          %v929 = vunpack.c.l.b16 %v891
          %v930 = vunpack.c.h.b16 %v891
          %v931 = vunpack.c.l.b16 %v892
          %v932 = vunpack.c.h.b16 %v892
          %v933 = vunpack.c.l.b16 %v893
          %v934 = vunpack.c.h.b16 %v893
          %v935 = vunpack.c.l.b16 %v894
          %v936 = vunpack.c.h.b16 %v894
          %v937 = vunpack.c.l.b16 %v895
          %v938 = vunpack.c.h.b16 %v895
          %v939 = vunpack.c.l.b16 %v896
          %v940 = vunpack.c.h.b16 %v896
          %v941 = vunpack.c.l.b16 %v897
          %v942 = vunpack.c.h.b16 %v897
          %v943 = vunpack.c.l.b16 %v898
          %v944 = vunpack.c.h.b16 %v898
          %v945 = vunpack.c.l.b16 %v899
          %v946 = vunpack.c.h.b16 %v899
          %v947 = vunpack.c.l.b16 %v900
          %v948 = vunpack.c.h.b16 %v900
          %v949 = vpack.c.b16 %v919, %v917
          %v950 = vpack.c.b16 %v920, %v918
          %v951 = vpack.c.b16 %v923, %v921
          %v952 = vpack.c.b16 %v924, %v922
          %v953 = vpack.c.b16 %v927, %v925
          %v954 = vpack.c.b16 %v928, %v926
          %v955 = vpack.c.b16 %v931, %v929
          %v956 = vpack.c.b16 %v932, %v930
          %v957 = vpack.c.b16 %v935, %v933
          %v958 = vpack.c.b16 %v936, %v934
          %v959 = vpack.c.b16 %v939, %v937
          %v960 = vpack.c.b16 %v940, %v938
          %v961 = vpack.c.b16 %v943, %v941
          %v962 = vpack.c.b16 %v944, %v942
          %v963 = vpack.c.b16 %v947, %v945
          %v964 = vpack.c.b16 %v948, %v946
          %981 = vmatpush.bf16.msra.mxu0 %v963
          %982 = vmatpush.bf16.msra.mxu0 %v961
          %983 = vmatpush.bf16.msra.mxu0 %v959
          %984 = vmatpush.bf16.msra.mxu0 %v957
          %985 = vmatpush.bf16.msra.mxu0 %v955
          %986 = vmatpush.bf16.msra.mxu0 %v953
          %987 = vmatpush.bf16.msra.mxu0 %v951
          %988 = vmatpush.bf16.msra.mxu0 %v949
          %989 = vmatmul.bf16.gmra.mxu0 %v883
          %v990 = vpop.f32.mrf.mxu0
          %v991 = vadd.f32 0.0, %v990
          %v992 = vpop.f32.mrf.mxu0
          %v993 = vadd.f32 0.0, %v992
          %994 = vdwg.mxu0
          %995 = vmatpush.bf16.msra.mxu0 %v964
          %996 = vmatpush.bf16.msra.mxu0 %v962
          %997 = vmatpush.bf16.msra.mxu0 %v960
          %998 = vmatpush.bf16.msra.mxu0 %v958
          %999 = vmatpush.bf16.msra.mxu0 %v956
          %1000 = vmatpush.bf16.msra.mxu0 %v954
          %1001 = vmatpush.bf16.msra.mxu0 %v952
          %1002 = vmatpush.bf16.msra.mxu0 %v950
          %1003 = vmatmul.bf16.gmra.mxu0 %v883
          %v1004 = vpop.f32.mrf.mxu0
          %v1005 = vadd.f32 0.0, %v1004
          %v1006 = vpop.f32.mrf.mxu0
          %v1007 = vadd.f32 0.0, %v1006
          %1008 = vdwg.mxu0
          %v1025 = vunpack.c.l.b16 %v867
          %v1026 = vunpack.c.h.b16 %v867
          %v1027 = vunpack.c.l.b16 %v868
          %v1028 = vunpack.c.h.b16 %v868
          %v1029 = vunpack.c.l.b16 %v869
          %v1030 = vunpack.c.h.b16 %v869
          %v1031 = vunpack.c.l.b16 %v870
          %v1032 = vunpack.c.h.b16 %v870
          %v1033 = vunpack.c.l.b16 %v871
          %v1034 = vunpack.c.h.b16 %v871
          %v1035 = vunpack.c.l.b16 %v872
          %v1036 = vunpack.c.h.b16 %v872
          %v1037 = vunpack.c.l.b16 %v873
          %v1038 = vunpack.c.h.b16 %v873
          %v1039 = vunpack.c.l.b16 %v874
          %v1040 = vunpack.c.h.b16 %v874
          %v1041 = vunpack.c.l.b16 %v875
          %v1042 = vunpack.c.h.b16 %v875
          %v1043 = vunpack.c.l.b16 %v876
          %v1044 = vunpack.c.h.b16 %v876
          %v1045 = vunpack.c.l.b16 %v877
          %v1046 = vunpack.c.h.b16 %v877
          %v1047 = vunpack.c.l.b16 %v878
          %v1048 = vunpack.c.h.b16 %v878
          %v1049 = vunpack.c.l.b16 %v879
          %v1050 = vunpack.c.h.b16 %v879
          %v1051 = vunpack.c.l.b16 %v880
          %v1052 = vunpack.c.h.b16 %v880
          %v1053 = vunpack.c.l.b16 %v881
          %v1054 = vunpack.c.h.b16 %v881
          %v1055 = vunpack.c.l.b16 %v882
          %v1056 = vunpack.c.h.b16 %v882
          %v1057 = vpack.c.b16 %v1027, %v1025
          %v1058 = vpack.c.b16 %v1028, %v1026
          %v1059 = vpack.c.b16 %v1031, %v1029
          %v1060 = vpack.c.b16 %v1032, %v1030
          %v1061 = vpack.c.b16 %v1035, %v1033
          %v1062 = vpack.c.b16 %v1036, %v1034
          %v1063 = vpack.c.b16 %v1039, %v1037
          %v1064 = vpack.c.b16 %v1040, %v1038
          %v1065 = vpack.c.b16 %v1043, %v1041
          %v1066 = vpack.c.b16 %v1044, %v1042
          %v1067 = vpack.c.b16 %v1047, %v1045
          %v1068 = vpack.c.b16 %v1048, %v1046
          %v1069 = vpack.c.b16 %v1051, %v1049
          %v1070 = vpack.c.b16 %v1052, %v1050
          %v1071 = vpack.c.b16 %v1055, %v1053
          %v1072 = vpack.c.b16 %v1056, %v1054
          %1089 = vmatpush.bf16.msra.mxu0 %v1071
          %1090 = vmatpush.bf16.msra.mxu0 %v1069
          %1091 = vmatpush.bf16.msra.mxu0 %v1067
          %1092 = vmatpush.bf16.msra.mxu0 %v1065
          %1093 = vmatpush.bf16.msra.mxu0 %v1063
          %1094 = vmatpush.bf16.msra.mxu0 %v1061
          %1095 = vmatpush.bf16.msra.mxu0 %v1059
          %1096 = vmatpush.bf16.msra.mxu0 %v1057
          %1097 = vmatmul.bf16.gmra.mxu0 %v866
          %v1098 = vpop.f32.mrf.mxu0
          %v1099 = vadd.f32 %v991, %v1098
          %v1100 = vpop.f32.mrf.mxu0
          %v1101 = vadd.f32 %v993, %v1100
          %1102 = vdwg.mxu0
          %1103 = vmatpush.bf16.msra.mxu0 %v1072
          %1104 = vmatpush.bf16.msra.mxu0 %v1070
          %1105 = vmatpush.bf16.msra.mxu0 %v1068
          %1106 = vmatpush.bf16.msra.mxu0 %v1066
          %1107 = vmatpush.bf16.msra.mxu0 %v1064
          %1108 = vmatpush.bf16.msra.mxu0 %v1062
          %1109 = vmatpush.bf16.msra.mxu0 %v1060
          %1110 = vmatpush.bf16.msra.mxu0 %v1058
          %1111 = vmatmul.bf16.gmra.mxu0 %v866
          %v1112 = vpop.f32.mrf.mxu0
          %v1113 = vadd.f32 %v1005, %v1112
          %v1114 = vpop.f32.mrf.mxu0
          %v1115 = vadd.f32 %v1007, %v1114
          %1116 = vdwg.mxu0
          %v1117 = vld [vmem:[%s5] sm:$0x3]
          %v1119 = vperm.slane %v1117, 0
          %v1120 = vperm.slane %v1117, 1
          %v1123 = vadd.f32 %v1099, %v1119
          %v1124 = vadd.f32 %v1113, %v1120
          %v1125 = vadd.f32 %v1101, %v1119
          %v1126 = vadd.f32 %v1115, %v1120
          %v1127 = vld [vmem:[%s530] sm:$0xff]
          %v1128 = vld [vmem:[%s530 + $0x8] sm:$0xff]
          %v1129 = vld [vmem:[%s530 + $0x10] sm:$0xff]
          %v1130 = vld [vmem:[%s530 + $0x18] sm:$0xff]
          %v1131 = vadd.f32 %v1127, %v1123
          %v1132 = vadd.f32 %v1128, %v1124
          %v1133 = vadd.f32 %v1129, %v1125
          %v1134 = vadd.f32 %v1130, %v1126
          %1135 = vst [vmem:[%s544] sm:$0xff] %v1131
          %1136 = vst [vmem:[%s544 + $0x8] sm:$0xff] %v1132
          %1137 = vst [vmem:[%s544 + $0x10] sm:$0xff] %v1133
          %1138 = vst [vmem:[%s544 + $0x18] sm:$0xff] %v1134
        $region175: #{encoder_layer.4} parent=154 // pred_fallthru
          _
        %s1139 = smul.u32 2, %s23
        %p1140 = scmp.lt.s32.totalorder %s22, 1
        %s1141 = scalar_select %p1140, %s22, 1
        %p1142 = scmp.lt.s32.totalorder %s1139, 3
        %s1143 = scalar_select %p1142, %s1139, 3
        %s1144 = smul.addr %s1143, 2
        %s1145 = smul.addr %s1141, 8
        %s1146 = sadd.s32 %s1144, %s1145
        %s1147 = smul.addr %s1146, 8
        %s1148 = scalar_lea.vmem %s6, %s1147
        // Predicated region
        $region176: #{encoder_layer.4} parent=154 // pred_check
          %p1149 = pneg %p210
        $region177: #{encoder_layer.4} parent=154 // pred_check_branch
          %1151 = sbr.rel (%p1149) target = $region179
        $region178: #{encoder_layer.4} parent=154 // pred_region
          %s1152 = smul.u32 2, %s23
        $region179: #{encoder_layer.4} parent=154 // pred_fallthru
          _
      $region155: #{encoder_layer.4} parent=5 // pred_fallthru
        _
      %p1153 = scmp.le.s32.totalorder 2, %s12
      // Predicated region
      $region180: #{encoder_layer.4} parent=5 // pred_check
        %p1154 = pneg %p1153
      $region181: #{encoder_layer.4} parent=5 // pred_check_branch
        %1156 = sbr.rel (%p1154) target = $region183
      $region182: #{encoder_layer.4} parent=5 // pred_region
        %s1157 = ssub.s32 %s12, 2
        // Predicated region
        $region184: #{encoder_layer.4} parent=182 // pred_check
          %p1158 = pneg %p216
        $region185: #{encoder_layer.4} parent=182 // pred_check_branch
          %1160 = sbr.rel (%p1158) target = $region187
        $region186: #{encoder_layer.4} parent=182 // pred_region
          %s1161 = smul.u32 2, %s26
          %p1162 = scmp.lt.s32.totalorder %s25, 1
          %s1163 = scalar_select %p1162, %s25, 1
          %p1164 = scmp.lt.s32.totalorder %s1161, 3
          %s1165 = scalar_select %p1164, %s1161, 3
          %s1166 = smul.addr %s1165, 2
          %s1167 = smul.addr %s1163, 8
          %s1168 = sadd.s32 %s1166, %s1167
          %s1169 = smul.addr %s1168, 8
          %s1170 = scalar_lea.vmem %s6, %s1169
        $region187: #{encoder_layer.4} parent=182 // pred_fallthru
          _
      $region183: #{encoder_layer.4} parent=5 // pred_fallthru
        _
    $region6: #{encoder_layer.4} parent=1 // loop_footer
      %s16 = sadd.s32 1, %s12
    $region7: #{encoder_layer.4} parent=1 // loop_footer_branch
      %11 = sbr.rel target = $region3
    $region8: #{encoder_layer.4} parent=1 // loop_exit
      _

// kernel: encoder_layer.3
$region0: #{encoder_layer.3}
  #allocation0 [shape = 'u32[]', space=smem, size = 0x4, offset = 0x4, fixed_abs, tag = 'smem constant byte address 0x4 - core index']
  #allocation1 [shape = 'u32[72,128]{1,0:T(1,128)}', space=vmem, size = 0x9000, scoped, tag = 'internal scratch']
  %s0 = inlined_call_operand.vmem [shape: f32[2,32,256], index: 0, kind: input, shape index: {}]
  %s1 = inlined_call_operand.vmem [shape: f32[1,256], index: 1, kind: input, shape index: {}]
  %s2 = inlined_call_operand.vmem [shape: f32[1,256], index: 2, kind: input, shape index: {}]
  %s3 = inlined_call_operand.vmem [shape: bf16[2,256,128], index: 3, kind: input, shape index: {}]
  %s4 = inlined_call_operand.vmem [shape: f32[2,1,128], index: 4, kind: input, shape index: {}]
  %s5 = inlined_call_operand.vmem [shape: bf16[2,256,128], index: 5, kind: input, shape index: {}]
  %s6 = inlined_call_operand.vmem [shape: f32[2,1,128], index: 6, kind: input, shape index: {}]
  %s7 = inlined_call_operand.vmem [shape: bf16[2,256,128], index: 7, kind: input, shape index: {}]
  %s8 = inlined_call_operand.vmem [shape: f32[2,1,128], index: 8, kind: input, shape index: {}]
  %s9 = inlined_call_operand.vmem [shape: bf16[2,2,32,128], index: 9, kind: output, shape index: {0}]
  %s10 = inlined_call_operand.vmem [shape: bf16[2,2,32,128], index: 10, kind: output, shape index: {1}]
  %s11 = inlined_call_operand.vmem [shape: bf16[2,2,32,128], index: 11, kind: output, shape index: {2}]
  %12 = xla_tuple %s9, %s10, %s11
  %s13 = sld [smem:[#allocation0]]
  $region85: #{encoder_layer.3} parent=0
    _
  %s15 = ssub.s32 1, %s13
  %s16 = scalar_select 0, %s15, %s13
  loop: start=0, step=1, limit=10
  $region2: #{encoder_layer.3} parent=0 // loop_pre_header
    _
  $region3: #{encoder_layer.3} parent=0 // loop_header
    %s18 = sphi 0, %s22
    %p19 = scmp.ge.s32.totalorder %s18, 10
    %s25 = sphi 0, %s44
    %s26 = sphi 0, %s40
    %s27 = sphi 0, %s36
    %s28 = sphi 0, %s25
    %s29 = sphi 0, %s26
    %s30 = sphi 0, %s27
    %s31 = sphi 0, %s28
    %s32 = sphi 0, %s29
    %s33 = sphi 0, %s30
    %s49 = sphi 0, %s51
    %s52 = sphi 0, %s49
    %s53 = sphi 0, %s52
    %s69 = sphi 0, %s53
    %s73 = sphi 0, %s73
    %s75 = sphi 0, %s73
    %s76 = sphi 0, %s75
    %s90 = sphi 0, %s76
    %s94 = sphi 0, %s94
    %s96 = sphi 0, %s94
    %s97 = sphi 0, %s96
    %s111 = sphi 0, %s97
    %s117 = sphi 0, %s119
    %s120 = sphi 0, %s117
    %s121 = sphi 0, %s120
    %s137 = sphi 0, %s121
    %s143 = sphi 0, %s145
    %s146 = sphi 0, %s143
    %s147 = sphi 0, %s146
    %s163 = sphi 0, %s147
    %s169 = sphi 0, %s171
    %s172 = sphi 0, %s169
    %s173 = sphi 0, %s172
    %s189 = sphi 0, %s173
    %s195 = sphi 0, %s197
    %s198 = sphi 0, %s195
    %s199 = sphi 0, %s198
    %s215 = sphi 0, %s199
    %s221 = sphi 0, %s223
    %s224 = sphi 0, %s221
    %s225 = sphi 0, %s224
    %s241 = sphi 0, %s225
    %s247 = sphi 0, %s249
    %s250 = sphi 0, %s247
    %s251 = sphi 0, %s250
    %s267 = sphi 0, %s251
    %s277 = sphi 0, %s279
    %s280 = sphi 0, %s277
    %s281 = sphi 0, %s280
    %s297 = sphi 0, %s281
    %s307 = sphi 0, %s309
    %s310 = sphi 0, %s307
    %s311 = sphi 0, %s310
    %s327 = sphi 0, %s311
    %s337 = sphi 0, %s339
    %s340 = sphi 0, %s337
    %s341 = sphi 0, %s340
    %s357 = sphi 0, %s341
  $region4: #{encoder_layer.3} parent=0 // loop_header_branch
    %21 = sbr.rel (%p19) target = $region8
  $region5: #{encoder_layer.3} parent=0 // loop_body
    %s23 = ssub.s32 %s18, 1
    %s24 = ssub.s32 %s18, 2
    %s34 = sadd.s32 1, %s27
    %p35 = scmp.ge.s32.totalorder %s34, 2
    %s36 = scalar_select %p35, 0, %s34
    %s37 = sadd.s32 1, %s26
    %s38 = scalar_select %p35, %s37, %s26
    %p39 = scmp.ge.s32.totalorder %s38, 2
    %s40 = scalar_select %p39, 0, %s38
    %s41 = sadd.s32 1, %s25
    %s42 = scalar_select %p39, %s41, %s25
    %p43 = scmp.ge.s32.totalorder %s42, 2
    %s44 = scalar_select %p43, 0, %s42
    %s45 = ssub.s32 %s25, %s44
    %s46 = ssub.s32 %s26, %s40
    %s47 = sor.u32 %s45, %s46
    %p48 = scmp.eq.s32.totalorder %s47, 0
    %s50 = sadd.s32 %s49, 1
    %s51 = scalar_select %p48, %s49, %s50
    %p54 = pneg %p48
    %p55 = scmp.eq.s32.totalorder %s18, 7
    %p56 = por %p54, %p55
    %p57 = scmp.ne.s32.totalorder %s49, %s52
    %p58 = scmp.eq.s32.totalorder %s18, 0
    %p59 = por %p57, %p58
    %p60 = scmp.ne.s32.totalorder %s49, %s52
    %p61 = scmp.eq.s32.totalorder %s23, 7
    %p62 = por %p60, %p61
    %p63 = scmp.ne.s32.totalorder %s52, %s53
    %p64 = scmp.eq.s32.totalorder %s23, 0
    %p65 = por %p63, %p64
    %p66 = scmp.ne.s32.totalorder %s52, %s53
    %p67 = scmp.eq.s32.totalorder %s24, 7
    %p68 = por %p66, %p67
    %p70 = scmp.ne.s32.totalorder %s53, %s69
    %p71 = scmp.eq.s32.totalorder %s24, 0
    %p72 = por %p70, %p71
    %s74 = sadd.s32 %s73, 1
    %p77 = scmp.eq.s32.totalorder %s18, 7
    %p78 = scmp.ne.s32.totalorder %s73, %s75
    %p79 = scmp.eq.s32.totalorder %s18, 0
    %p80 = por %p78, %p79
    %p81 = scmp.ne.s32.totalorder %s73, %s75
    %p82 = scmp.eq.s32.totalorder %s23, 7
    %p83 = por %p81, %p82
    %p84 = scmp.ne.s32.totalorder %s75, %s76
    %p85 = scmp.eq.s32.totalorder %s23, 0
    %p86 = por %p84, %p85
    %p87 = scmp.ne.s32.totalorder %s75, %s76
    %p88 = scmp.eq.s32.totalorder %s24, 7
    %p89 = por %p87, %p88
    %p91 = scmp.ne.s32.totalorder %s76, %s90
    %p92 = scmp.eq.s32.totalorder %s24, 0
    %p93 = por %p91, %p92
    %s95 = sadd.s32 %s94, 1
    %p98 = scmp.eq.s32.totalorder %s18, 7
    %p99 = scmp.ne.s32.totalorder %s94, %s96
    %p100 = scmp.eq.s32.totalorder %s18, 0
    %p101 = por %p99, %p100
    %p102 = scmp.ne.s32.totalorder %s94, %s96
    %p103 = scmp.eq.s32.totalorder %s23, 7
    %p104 = por %p102, %p103
    %p105 = scmp.ne.s32.totalorder %s96, %s97
    %p106 = scmp.eq.s32.totalorder %s23, 0
    %p107 = por %p105, %p106
    %p108 = scmp.ne.s32.totalorder %s96, %s97
    %p109 = scmp.eq.s32.totalorder %s24, 7
    %p110 = por %p108, %p109
    %p112 = scmp.ne.s32.totalorder %s97, %s111
    %p113 = scmp.eq.s32.totalorder %s24, 0
    %p114 = por %p112, %p113
    %s115 = ssub.s32 %s27, %s36
    %p116 = scmp.eq.s32.totalorder %s115, 0
    %s118 = sadd.s32 %s117, 1
    %s119 = scalar_select %p116, %s117, %s118
    %p122 = pneg %p116
    %p123 = scmp.eq.s32.totalorder %s18, 7
    %p124 = por %p122, %p123
    %p125 = scmp.ne.s32.totalorder %s117, %s120
    %p126 = scmp.eq.s32.totalorder %s18, 0
    %p127 = por %p125, %p126
    %p128 = scmp.ne.s32.totalorder %s117, %s120
    %p129 = scmp.eq.s32.totalorder %s23, 7
    %p130 = por %p128, %p129
    %p131 = scmp.ne.s32.totalorder %s120, %s121
    %p132 = scmp.eq.s32.totalorder %s23, 0
    %p133 = por %p131, %p132
    %p134 = scmp.ne.s32.totalorder %s120, %s121
    %p135 = scmp.eq.s32.totalorder %s24, 7
    %p136 = por %p134, %p135
    %p138 = scmp.ne.s32.totalorder %s121, %s137
    %p139 = scmp.eq.s32.totalorder %s24, 0
    %p140 = por %p138, %p139
    %s141 = ssub.s32 %s27, %s36
    %p142 = scmp.eq.s32.totalorder %s141, 0
    %s144 = sadd.s32 %s143, 1
    %s145 = scalar_select %p142, %s143, %s144
    %p148 = pneg %p142
    %p149 = scmp.eq.s32.totalorder %s18, 7
    %p150 = por %p148, %p149
    %p151 = scmp.ne.s32.totalorder %s143, %s146
    %p152 = scmp.eq.s32.totalorder %s18, 0
    %p153 = por %p151, %p152
    %p154 = scmp.ne.s32.totalorder %s143, %s146
    %p155 = scmp.eq.s32.totalorder %s23, 7
    %p156 = por %p154, %p155
    %p157 = scmp.ne.s32.totalorder %s146, %s147
    %p158 = scmp.eq.s32.totalorder %s23, 0
    %p159 = por %p157, %p158
    %p160 = scmp.ne.s32.totalorder %s146, %s147
    %p161 = scmp.eq.s32.totalorder %s24, 7
    %p162 = por %p160, %p161
    %p164 = scmp.ne.s32.totalorder %s147, %s163
    %p165 = scmp.eq.s32.totalorder %s24, 0
    %p166 = por %p164, %p165
    %s167 = ssub.s32 %s27, %s36
    %p168 = scmp.eq.s32.totalorder %s167, 0
    %s170 = sadd.s32 %s169, 1
    %s171 = scalar_select %p168, %s169, %s170
    %p174 = pneg %p168
    %p175 = scmp.eq.s32.totalorder %s18, 7
    %p176 = por %p174, %p175
    %p177 = scmp.ne.s32.totalorder %s169, %s172
    %p178 = scmp.eq.s32.totalorder %s18, 0
    %p179 = por %p177, %p178
    %p180 = scmp.ne.s32.totalorder %s169, %s172
    %p181 = scmp.eq.s32.totalorder %s23, 7
    %p182 = por %p180, %p181
    %p183 = scmp.ne.s32.totalorder %s172, %s173
    %p184 = scmp.eq.s32.totalorder %s23, 0
    %p185 = por %p183, %p184
    %p186 = scmp.ne.s32.totalorder %s172, %s173
    %p187 = scmp.eq.s32.totalorder %s24, 7
    %p188 = por %p186, %p187
    %p190 = scmp.ne.s32.totalorder %s173, %s189
    %p191 = scmp.eq.s32.totalorder %s24, 0
    %p192 = por %p190, %p191
    %s193 = ssub.s32 %s27, %s36
    %p194 = scmp.eq.s32.totalorder %s193, 0
    %s196 = sadd.s32 %s195, 1
    %s197 = scalar_select %p194, %s195, %s196
    %p200 = pneg %p194
    %p201 = scmp.eq.s32.totalorder %s18, 7
    %p202 = por %p200, %p201
    %p203 = scmp.ne.s32.totalorder %s195, %s198
    %p204 = scmp.eq.s32.totalorder %s18, 0
    %p205 = por %p203, %p204
    %p206 = scmp.ne.s32.totalorder %s195, %s198
    %p207 = scmp.eq.s32.totalorder %s23, 7
    %p208 = por %p206, %p207
    %p209 = scmp.ne.s32.totalorder %s198, %s199
    %p210 = scmp.eq.s32.totalorder %s23, 0
    %p211 = por %p209, %p210
    %p212 = scmp.ne.s32.totalorder %s198, %s199
    %p213 = scmp.eq.s32.totalorder %s24, 7
    %p214 = por %p212, %p213
    %p216 = scmp.ne.s32.totalorder %s199, %s215
    %p217 = scmp.eq.s32.totalorder %s24, 0
    %p218 = por %p216, %p217
    %s219 = ssub.s32 %s27, %s36
    %p220 = scmp.eq.s32.totalorder %s219, 0
    %s222 = sadd.s32 %s221, 1
    %s223 = scalar_select %p220, %s221, %s222
    %p226 = pneg %p220
    %p227 = scmp.eq.s32.totalorder %s18, 7
    %p228 = por %p226, %p227
    %p229 = scmp.ne.s32.totalorder %s221, %s224
    %p230 = scmp.eq.s32.totalorder %s18, 0
    %p231 = por %p229, %p230
    %p232 = scmp.ne.s32.totalorder %s221, %s224
    %p233 = scmp.eq.s32.totalorder %s23, 7
    %p234 = por %p232, %p233
    %p235 = scmp.ne.s32.totalorder %s224, %s225
    %p236 = scmp.eq.s32.totalorder %s23, 0
    %p237 = por %p235, %p236
    %p238 = scmp.ne.s32.totalorder %s224, %s225
    %p239 = scmp.eq.s32.totalorder %s24, 7
    %p240 = por %p238, %p239
    %p242 = scmp.ne.s32.totalorder %s225, %s241
    %p243 = scmp.eq.s32.totalorder %s24, 0
    %p244 = por %p242, %p243
    %s245 = ssub.s32 %s27, %s36
    %p246 = scmp.eq.s32.totalorder %s245, 0
    %s248 = sadd.s32 %s247, 1
    %s249 = scalar_select %p246, %s247, %s248
    %p252 = pneg %p246
    %p253 = scmp.eq.s32.totalorder %s18, 7
    %p254 = por %p252, %p253
    %p255 = scmp.ne.s32.totalorder %s247, %s250
    %p256 = scmp.eq.s32.totalorder %s18, 0
    %p257 = por %p255, %p256
    %p258 = scmp.ne.s32.totalorder %s247, %s250
    %p259 = scmp.eq.s32.totalorder %s23, 7
    %p260 = por %p258, %p259
    %p261 = scmp.ne.s32.totalorder %s250, %s251
    %p262 = scmp.eq.s32.totalorder %s23, 0
    %p263 = por %p261, %p262
    %p264 = scmp.ne.s32.totalorder %s250, %s251
    %p265 = scmp.eq.s32.totalorder %s24, 7
    %p266 = por %p264, %p265
    %p268 = scmp.ne.s32.totalorder %s251, %s267
    %p269 = scmp.eq.s32.totalorder %s24, 0
    %p270 = por %p268, %p269
    %s271 = ssub.s32 %s25, %s44
    %s272 = ssub.s32 %s27, %s36
    %s273 = sor.u32 %s271, %s272
    %s274 = ssub.s32 %s26, %s40
    %s275 = sor.u32 %s273, %s274
    %p276 = scmp.eq.s32.totalorder %s275, 0
    %s278 = sadd.s32 %s277, 1
    %s279 = scalar_select %p276, %s277, %s278
    %p282 = pneg %p276
    %p283 = scmp.eq.s32.totalorder %s18, 7
    %p284 = por %p282, %p283
    %p285 = scmp.ne.s32.totalorder %s277, %s280
    %p286 = scmp.eq.s32.totalorder %s18, 0
    %p287 = por %p285, %p286
    %p288 = scmp.ne.s32.totalorder %s277, %s280
    %p289 = scmp.eq.s32.totalorder %s23, 7
    %p290 = por %p288, %p289
    %p291 = scmp.ne.s32.totalorder %s280, %s281
    %p292 = scmp.eq.s32.totalorder %s23, 0
    %p293 = por %p291, %p292
    %p294 = scmp.ne.s32.totalorder %s280, %s281
    %p295 = scmp.eq.s32.totalorder %s24, 7
    %p296 = por %p294, %p295
    %p298 = scmp.ne.s32.totalorder %s281, %s297
    %p299 = scmp.eq.s32.totalorder %s24, 0
    %p300 = por %p298, %p299
    %s301 = ssub.s32 %s25, %s44
    %s302 = ssub.s32 %s27, %s36
    %s303 = sor.u32 %s301, %s302
    %s304 = ssub.s32 %s26, %s40
    %s305 = sor.u32 %s303, %s304
    %p306 = scmp.eq.s32.totalorder %s305, 0
    %s308 = sadd.s32 %s307, 1
    %s309 = scalar_select %p306, %s307, %s308
    %p312 = pneg %p306
    %p313 = scmp.eq.s32.totalorder %s18, 7
    %p314 = por %p312, %p313
    %p315 = scmp.ne.s32.totalorder %s307, %s310
    %p316 = scmp.eq.s32.totalorder %s18, 0
    %p317 = por %p315, %p316
    %p318 = scmp.ne.s32.totalorder %s307, %s310
    %p319 = scmp.eq.s32.totalorder %s23, 7
    %p320 = por %p318, %p319
    %p321 = scmp.ne.s32.totalorder %s310, %s311
    %p322 = scmp.eq.s32.totalorder %s23, 0
    %p323 = por %p321, %p322
    %p324 = scmp.ne.s32.totalorder %s310, %s311
    %p325 = scmp.eq.s32.totalorder %s24, 7
    %p326 = por %p324, %p325
    %p328 = scmp.ne.s32.totalorder %s311, %s327
    %p329 = scmp.eq.s32.totalorder %s24, 0
    %p330 = por %p328, %p329
    %s331 = ssub.s32 %s25, %s44
    %s332 = ssub.s32 %s27, %s36
    %s333 = sor.u32 %s331, %s332
    %s334 = ssub.s32 %s26, %s40
    %s335 = sor.u32 %s333, %s334
    %p336 = scmp.eq.s32.totalorder %s335, 0
    %s338 = sadd.s32 %s337, 1
    %s339 = scalar_select %p336, %s337, %s338
    %p342 = pneg %p336
    %p343 = scmp.eq.s32.totalorder %s18, 7
    %p344 = por %p342, %p343
    %p345 = scmp.ne.s32.totalorder %s337, %s340
    %p346 = scmp.eq.s32.totalorder %s18, 0
    %p347 = por %p345, %p346
    %p348 = scmp.ne.s32.totalorder %s337, %s340
    %p349 = scmp.eq.s32.totalorder %s23, 7
    %p350 = por %p348, %p349
    %p351 = scmp.ne.s32.totalorder %s340, %s341
    %p352 = scmp.eq.s32.totalorder %s23, 0
    %p353 = por %p351, %p352
    %p354 = scmp.ne.s32.totalorder %s340, %s341
    %p355 = scmp.eq.s32.totalorder %s24, 7
    %p356 = por %p354, %p355
    %p358 = scmp.ne.s32.totalorder %s341, %s357
    %p359 = scmp.eq.s32.totalorder %s24, 0
    %p360 = por %p358, %p359
    %p361 = scmp.le.s32.totalorder 1, %s18
    %p362 = scmp.lt.s32.totalorder %s18, 9
    %p363 = pnand %p361, %p362
    %p364 = pneg %p363
    // Predicated region
    $region9: #{encoder_layer.3} parent=5 // pred_check
      _
    $region10: #{encoder_layer.3} parent=5 // pred_check_branch
      %366 = sbr.rel (%p363) target = $region12
    $region11: #{encoder_layer.3} parent=5 // pred_region
      %s367 = ssub.s32 %s18, 1
      // Predicated region
      $region13: #{encoder_layer.3} parent=11 // pred_check
        %p368 = pneg %p86
      $region14: #{encoder_layer.3} parent=11 // pred_check_branch
        %370 = sbr.rel (%p368) target = $region16
      $region15: #{encoder_layer.3} parent=11 // pred_region
        _
      $region16: #{encoder_layer.3} parent=11 // pred_fallthru
        _
      // Predicated region
      $region17: #{encoder_layer.3} parent=11 // pred_check
        %p371 = pneg %p107
      $region18: #{encoder_layer.3} parent=11 // pred_check_branch
        %373 = sbr.rel (%p371) target = $region20
      $region19: #{encoder_layer.3} parent=11 // pred_region
        _
      $region20: #{encoder_layer.3} parent=11 // pred_fallthru
        _
    $region12: #{encoder_layer.3} parent=5 // pred_fallthru
      _
    %p374 = scmp.lt.s32.totalorder %s18, 8
    // Predicated region
    $region21: #{encoder_layer.3} parent=5 // pred_check
      %p375 = pneg %p374
    $region22: #{encoder_layer.3} parent=5 // pred_check_branch
      %377 = sbr.rel (%p375) target = $region24
    $region23: #{encoder_layer.3} parent=5 // pred_region
      // Predicated region
      $region25: #{encoder_layer.3} parent=23 // pred_check
        %p378 = pneg %p59
      $region26: #{encoder_layer.3} parent=23 // pred_check_branch
        %380 = sbr.rel (%p378) target = $region28
      $region27: #{encoder_layer.3} parent=23 // pred_region
        %s381 = smul.u32 2, %s26
        %p382 = scmp.lt.s32.totalorder %s25, 1
        %s383 = scalar_select %p382, %s25, 1
        %p384 = scmp.lt.s32.totalorder %s381, 3
        %s385 = scalar_select %p384, %s381, 3
        %s386 = smul.addr %s385, 2
        %s387 = smul.addr %s383, 8
        %s388 = sadd.s32 %s386, %s387
        %s389 = smul.addr %s388, 8
        %s390 = scalar_lea.vmem %s0, %s389
        %s391 = smul.u32 2, %s26
      $region28: #{encoder_layer.3} parent=23 // pred_fallthru
        _
      // Predicated region
      $region29: #{encoder_layer.3} parent=23 // pred_check
        %p392 = pneg %p127
      $region30: #{encoder_layer.3} parent=23 // pred_check_branch
        %394 = sbr.rel (%p392) target = $region32
      $region31: #{encoder_layer.3} parent=23 // pred_region
        %p395 = scmp.lt.s32.totalorder %s27, 1
        %s396 = scalar_select %p395, %s27, 1
        %s397 = smul.addr %s396, 32
        %s398 = smul.addr %s397, 4
        %s399 = scalar_lea.vmem %s3, %s398
      $region32: #{encoder_layer.3} parent=23 // pred_fallthru
        _
      // Predicated region
      $region33: #{encoder_layer.3} parent=23 // pred_check
        %p400 = pneg %p153
      $region34: #{encoder_layer.3} parent=23 // pred_check_branch
        %402 = sbr.rel (%p400) target = $region36
      $region35: #{encoder_layer.3} parent=23 // pred_region
        %p403 = scmp.lt.s32.totalorder %s27, 1
        %s404 = scalar_select %p403, %s27, 1
        %s405 = scalar_lea.vmem %s4, %s404
      $region36: #{encoder_layer.3} parent=23 // pred_fallthru
        _
      // Predicated region
      $region37: #{encoder_layer.3} parent=23 // pred_check
        %p406 = pneg %p179
      $region38: #{encoder_layer.3} parent=23 // pred_check_branch
        %408 = sbr.rel (%p406) target = $region40
      $region39: #{encoder_layer.3} parent=23 // pred_region
        %p409 = scmp.lt.s32.totalorder %s27, 1
        %s410 = scalar_select %p409, %s27, 1
        %s411 = smul.addr %s410, 32
        %s412 = smul.addr %s411, 4
        %s413 = scalar_lea.vmem %s5, %s412
      $region40: #{encoder_layer.3} parent=23 // pred_fallthru
        _
      // Predicated region
      $region41: #{encoder_layer.3} parent=23 // pred_check
        %p414 = pneg %p205
      $region42: #{encoder_layer.3} parent=23 // pred_check_branch
        %416 = sbr.rel (%p414) target = $region44
      $region43: #{encoder_layer.3} parent=23 // pred_region
        %p417 = scmp.lt.s32.totalorder %s27, 1
        %s418 = scalar_select %p417, %s27, 1
        %s419 = scalar_lea.vmem %s6, %s418
      $region44: #{encoder_layer.3} parent=23 // pred_fallthru
        _
      // Predicated region
      $region45: #{encoder_layer.3} parent=23 // pred_check
        %p420 = pneg %p231
      $region46: #{encoder_layer.3} parent=23 // pred_check_branch
        %422 = sbr.rel (%p420) target = $region48
      $region47: #{encoder_layer.3} parent=23 // pred_region
        %p423 = scmp.lt.s32.totalorder %s27, 1
        %s424 = scalar_select %p423, %s27, 1
        %s425 = smul.addr %s424, 32
        %s426 = smul.addr %s425, 4
        %s427 = scalar_lea.vmem %s7, %s426
      $region48: #{encoder_layer.3} parent=23 // pred_fallthru
        _
      // Predicated region
      $region49: #{encoder_layer.3} parent=23 // pred_check
        %p428 = pneg %p257
      $region50: #{encoder_layer.3} parent=23 // pred_check_branch
        %430 = sbr.rel (%p428) target = $region52
      $region51: #{encoder_layer.3} parent=23 // pred_region
        %p431 = scmp.lt.s32.totalorder %s27, 1
        %s432 = scalar_select %p431, %s27, 1
        %s433 = scalar_lea.vmem %s8, %s432
      $region52: #{encoder_layer.3} parent=23 // pred_fallthru
        _
    $region24: #{encoder_layer.3} parent=5 // pred_fallthru
      _
    %p434 = scmp.le.s32.totalorder 1, %s18
    %p435 = scmp.lt.s32.totalorder %s18, 9
    %p436 = pnand %p434, %p435
    %p437 = pneg %p436
    // Predicated region
    $region53: #{encoder_layer.3} parent=5 // pred_check
      _
    $region54: #{encoder_layer.3} parent=5 // pred_check_branch
      %439 = sbr.rel (%p436) target = $region56
    $region55: #{encoder_layer.3} parent=5 // pred_region
      %s440 = ssub.s32 %s18, 1
      %s441 = smul.u32 2, %s29
      %p442 = scmp.lt.s32.totalorder %s28, 1
      %s443 = scalar_select %p442, %s28, 1
      %p444 = scmp.lt.s32.totalorder %s441, 3
      %s445 = scalar_select %p444, %s441, 3
      %s446 = smul.addr %s445, 2
      %s447 = smul.addr %s443, 8
      %s448 = sadd.s32 %s446, %s447
      %s449 = smul.addr %s448, 8
      %s450 = scalar_lea.vmem %s0, %s449
      %p451 = pneg %p65
      %p452 = pneg %p62
      %p453 = pneg %p86
      %p454 = pneg %p83
      %p455 = pneg %p107
      %p456 = pneg %p104
      %p457 = scmp.lt.s32.totalorder %s30, 1
      %s458 = scalar_select %p457, %s30, 1
      %s459 = smul.addr %s458, 32
      %s460 = smul.addr %s459, 4
      %s461 = scalar_lea.vmem %s3, %s460
      %p462 = pneg %p133
      %p463 = pneg %p130
      %p464 = scmp.lt.s32.totalorder %s30, 1
      %s465 = scalar_select %p464, %s30, 1
      %s466 = scalar_lea.vmem %s4, %s465
      %p467 = pneg %p159
      %p468 = pneg %p156
      %p469 = scmp.lt.s32.totalorder %s30, 1
      %s470 = scalar_select %p469, %s30, 1
      %s471 = smul.addr %s470, 32
      %s472 = smul.addr %s471, 4
      %s473 = scalar_lea.vmem %s5, %s472
      %p474 = pneg %p185
      %p475 = pneg %p182
      %p476 = scmp.lt.s32.totalorder %s30, 1
      %s477 = scalar_select %p476, %s30, 1
      %s478 = scalar_lea.vmem %s6, %s477
      %p479 = pneg %p211
      %p480 = pneg %p208
      %p481 = scmp.lt.s32.totalorder %s30, 1
      %s482 = scalar_select %p481, %s30, 1
      %s483 = smul.addr %s482, 32
      %s484 = smul.addr %s483, 4
      %s485 = scalar_lea.vmem %s7, %s484
      %p486 = pneg %p237
      %p487 = pneg %p234
      %p488 = scmp.lt.s32.totalorder %s30, 1
      %s489 = scalar_select %p488, %s30, 1
      %s490 = scalar_lea.vmem %s8, %s489
      %p491 = pneg %p263
      %p492 = pneg %p260
      %p493 = pneg %p293
      %p494 = pneg %p290
      %s495 = smul.u32 2, %s29
      %p496 = scmp.lt.s32.totalorder %s28, 1
      %s497 = scalar_select %p496, %s28, 1
      %p498 = scmp.lt.s32.totalorder %s30, 1
      %s499 = scalar_select %p498, %s30, 1
      %p500 = scmp.lt.s32.totalorder %s495, 3
      %s501 = scalar_select %p500, %s495, 3
      %s502 = smul.addr %s499, 4
      %s503 = sadd.s32 %s501, %s502
      %s504 = smul.addr %s497, 8
      %s505 = sadd.s32 %s503, %s504
      %s506 = smul.addr %s505, 4
      %s507 = scalar_lea.vmem %s9, %s506
      %p508 = pneg %p323
      %p509 = pneg %p320
      %s510 = smul.u32 2, %s29
      %p511 = scmp.lt.s32.totalorder %s28, 1
      %s512 = scalar_select %p511, %s28, 1
      %p513 = scmp.lt.s32.totalorder %s30, 1
      %s514 = scalar_select %p513, %s30, 1
      %p515 = scmp.lt.s32.totalorder %s510, 3
      %s516 = scalar_select %p515, %s510, 3
      %s517 = smul.addr %s514, 4
      %s518 = sadd.s32 %s516, %s517
      %s519 = smul.addr %s512, 8
      %s520 = sadd.s32 %s518, %s519
      %s521 = smul.addr %s520, 4
      %s522 = scalar_lea.vmem %s10, %s521
      %p523 = pneg %p353
      %p524 = pneg %p350
      %s525 = smul.u32 2, %s29
      %p526 = scmp.lt.s32.totalorder %s28, 1
      %s527 = scalar_select %p526, %s28, 1
      %p528 = scmp.lt.s32.totalorder %s30, 1
      %s529 = scalar_select %p528, %s30, 1
      %p530 = scmp.lt.s32.totalorder %s525, 3
      %s531 = scalar_select %p530, %s525, 3
      %s532 = smul.addr %s529, 4
      %s533 = sadd.s32 %s531, %s532
      %s534 = smul.addr %s527, 8
      %s535 = sadd.s32 %s533, %s534
      %s536 = smul.addr %s535, 4
      %s537 = scalar_lea.vmem %s11, %s536
      %s538 = smul.u32 2, %s29
      %p539 = scmp.lt.s32.totalorder %s28, 1
      %s540 = scalar_select %p539, %s28, 1
      %p541 = scmp.lt.s32.totalorder %s538, 3
      %s542 = scalar_select %p541, %s538, 3
      %s543 = smul.addr %s542, 2
      %s544 = smul.addr %s540, 8
      %s545 = sadd.s32 %s543, %s544
      %s546 = smul.addr %s545, 8
      %s547 = scalar_lea.vmem %s0, %s546
      %s548 = smul.u32 2, %s29
      %p549 = scmp.lt.s32.totalorder %s30, 1
      %s550 = scalar_select %p549, %s30, 1
      %s551 = smul.addr %s550, 32
      %s552 = smul.addr %s551, 4
      %s553 = scalar_lea.vmem %s3, %s552
      %p554 = scmp.lt.s32.totalorder %s30, 1
      %s555 = scalar_select %p554, %s30, 1
      %s556 = scalar_lea.vmem %s4, %s555
      %p557 = scmp.lt.s32.totalorder %s30, 1
      %s558 = scalar_select %p557, %s30, 1
      %s559 = smul.addr %s558, 32
      %s560 = smul.addr %s559, 4
      %s561 = scalar_lea.vmem %s5, %s560
      %p562 = scmp.lt.s32.totalorder %s30, 1
      %s563 = scalar_select %p562, %s30, 1
      %s564 = scalar_lea.vmem %s6, %s563
      %p565 = scmp.lt.s32.totalorder %s30, 1
      %s566 = scalar_select %p565, %s30, 1
      %s567 = smul.addr %s566, 32
      %s568 = smul.addr %s567, 4
      %s569 = scalar_lea.vmem %s7, %s568
      %p570 = scmp.lt.s32.totalorder %s30, 1
      %s571 = scalar_select %p570, %s30, 1
      %s572 = scalar_lea.vmem %s8, %s571
      %s573 = smul.u32 2, %s29
      %p574 = scmp.lt.s32.totalorder %s28, 1
      %s575 = scalar_select %p574, %s28, 1
      %p576 = scmp.lt.s32.totalorder %s30, 1
      %s577 = scalar_select %p576, %s30, 1
      %p578 = scmp.lt.s32.totalorder %s573, 3
      %s579 = scalar_select %p578, %s573, 3
      %s580 = smul.addr %s577, 4
      %s581 = sadd.s32 %s579, %s580
      %s582 = smul.addr %s575, 8
      %s583 = sadd.s32 %s581, %s582
      %s584 = smul.addr %s583, 4
      %s585 = scalar_lea.vmem %s9, %s584
      %s586 = smul.u32 2, %s29
      %s587 = smul.u32 2, %s29
      %p588 = scmp.lt.s32.totalorder %s28, 1
      %s589 = scalar_select %p588, %s28, 1
      %p590 = scmp.lt.s32.totalorder %s30, 1
      %s591 = scalar_select %p590, %s30, 1
      %p592 = scmp.lt.s32.totalorder %s587, 3
      %s593 = scalar_select %p592, %s587, 3
      %s594 = smul.addr %s591, 4
      %s595 = sadd.s32 %s593, %s594
      %s596 = smul.addr %s589, 8
      %s597 = sadd.s32 %s595, %s596
      %s598 = smul.addr %s597, 4
      %s599 = scalar_lea.vmem %s10, %s598
      %s600 = smul.u32 2, %s29
      %s601 = smul.u32 2, %s29
      %p602 = scmp.lt.s32.totalorder %s28, 1
      %s603 = scalar_select %p602, %s28, 1
      %p604 = scmp.lt.s32.totalorder %s30, 1
      %s605 = scalar_select %p604, %s30, 1
      %p606 = scmp.lt.s32.totalorder %s601, 3
      %s607 = scalar_select %p606, %s601, 3
      %s608 = smul.addr %s605, 4
      %s609 = sadd.s32 %s607, %s608
      %s610 = smul.addr %s603, 8
      %s611 = sadd.s32 %s609, %s610
      %s612 = smul.addr %s611, 4
      %s613 = scalar_lea.vmem %s11, %s612
      %s614 = smul.u32 2, %s29
      %v615 = vld [vmem:[%s547] sm:$0xff]
      %v616 = vld [vmem:[%s547 + $0x8] sm:$0xff]
      %v617 = vld [vmem:[%s547 + $0x10] sm:$0xff]
      %v618 = vld [vmem:[%s547 + $0x18] sm:$0xff]
      %v619 = vld [vmem:[%s1] sm:$0x3]
      %v620 = vld [vmem:[%s2] sm:$0x3]
      %v621 = vadd.f32 %v615, %v616
      %622 = vadd.xlane.f32.xlu0 %v621
      %v623 = vpop.xlane.xlu0 %622
      %v624 = vadd.f32 %v617, %v618
      %625 = vadd.xlane.f32.xlu0 %v624
      %v626 = vpop.xlane.xlu0 %625
      %v627 = vrcp.pop 256.0
      %v628 = vmul.f32 256.0, %v627
      %v629 = vsub.f32 1.0, %v628
      %v630 = vmul.f32 %v627, %v629
      %v631 = vadd.f32 %v627, %v630
      %vm632 = vweird.f32 %v627
      %v633 = vsel %vm632, %v627, %v631
      %v634 = vmul.f32 %v623, %v633
      %v635 = vmul.f32 %v626, %v633
      %v636 = vsub.f32 %v615, %v634
      %v637 = vsub.f32 %v616, %v634
      %v638 = vsub.f32 %v617, %v635
      %v639 = vsub.f32 %v618, %v635
      %v640 = vmul.f32 %v636, %v636
      %v641 = vmul.f32 %v637, %v637
      %v642 = vmul.f32 %v638, %v638
      %v643 = vmul.f32 %v639, %v639
      %v644 = vadd.f32 %v640, %v641
      %645 = vadd.xlane.f32.xlu0 %v644
      %v646 = vpop.xlane.xlu0 %645
      %v647 = vadd.f32 %v642, %v643
      %648 = vadd.xlane.f32.xlu0 %v647
      %v649 = vpop.xlane.xlu0 %648
      %v650 = vmul.f32 %v646, 0.003921569
      %v651 = vmul.f32 %v649, 0.003921569
      %v652 = vrsqrt.pop %v650
      %v653 = vmul.f32 %v652, %v650
      %v654 = vmul.f32 %v653, %v652
      %v655 = vmul.f32 0.5, %v654
      %v656 = vsub.f32 1.5, %v655
      %v657 = vmul.f32 %v652, %v656
      %v658 = vmul.f32 %v650, %v657
      %vm659 = vcmp.eq.f32.partialorder %v650, inf
      %v660 = vsel %vm659, %v650, %v658
      %vm661 = vcmp.eq.f32.partialorder %v650, 0.0
      %v662 = vand.u32 %v650, 2147483648
      %v663 = vsel %vm661, %v662, %v660
      %v664 = vrsqrt.pop %v651
      %v665 = vmul.f32 %v664, %v651
      %v666 = vmul.f32 %v665, %v664
      %v667 = vmul.f32 0.5, %v666
      %v668 = vsub.f32 1.5, %v667
      %v669 = vmul.f32 %v664, %v668
      %v670 = vmul.f32 %v651, %v669
      %vm671 = vcmp.eq.f32.partialorder %v651, inf
      %v672 = vsel %vm671, %v651, %v670
      %vm673 = vcmp.eq.f32.partialorder %v651, 0.0
      %v674 = vand.u32 %v651, 2147483648
      %v675 = vsel %vm673, %v674, %v672
      %v676 = vadd.f32 %v663, 1e-06
      %v677 = vadd.f32 %v675, 1e-06
      %v678 = vrcp.pop %v676
      %v679 = vrcp.pop %v677
      %v681 = vperm.slane %v619, 0
      %v682 = vperm.slane %v619, 1
      %v685 = vmul.f32 %v681, %v636
      %v686 = vmul.f32 %v682, %v637
      %v687 = vmul.f32 %v681, %v638
      %v688 = vmul.f32 %v682, %v639
      %v689 = vmul.f32 %v685, %v678
      %v690 = vmul.f32 %v686, %v678
      %v691 = vmul.f32 %v687, %v679
      %v692 = vmul.f32 %v688, %v679
      %v694 = vperm.slane %v620, 0
      %v695 = vperm.slane %v620, 1
      %v698 = vadd.f32 %v689, %v694
      %v699 = vadd.f32 %v690, %v695
      %v700 = vadd.f32 %v691, %v694
      %v701 = vadd.f32 %v692, %v695
      %v702 = vpack.c.bf16 %v700, %v698
      %v703 = vpack.c.bf16 %v701, %v699
      %v704 = vld [vmem:[%s553] sm:$0xf]
      %v705 = vld [vmem:[%s553 + $0x4] sm:$0xf]
      %v706 = vld [vmem:[%s553 + $0x8] sm:$0xf]
      %v707 = vld [vmem:[%s553 + $0xc] sm:$0xf]
      %v708 = vld [vmem:[%s553 + $0x10] sm:$0xf]
      %v709 = vld [vmem:[%s553 + $0x14] sm:$0xf]
      %v710 = vld [vmem:[%s553 + $0x18] sm:$0xf]
      %v711 = vld [vmem:[%s553 + $0x1c] sm:$0xf]
      %v712 = vld [vmem:[%s553 + $0x20] sm:$0xf]
      %v713 = vld [vmem:[%s553 + $0x24] sm:$0xf]
      %v714 = vld [vmem:[%s553 + $0x28] sm:$0xf]
      %v715 = vld [vmem:[%s553 + $0x2c] sm:$0xf]
      %v716 = vld [vmem:[%s553 + $0x30] sm:$0xf]
      %v717 = vld [vmem:[%s553 + $0x34] sm:$0xf]
      %v718 = vld [vmem:[%s553 + $0x38] sm:$0xf]
      %v719 = vld [vmem:[%s553 + $0x3c] sm:$0xf]
      %v720 = vld [vmem:[%s553 + $0x40] sm:$0xf]
      %v721 = vld [vmem:[%s553 + $0x44] sm:$0xf]
      %v722 = vld [vmem:[%s553 + $0x48] sm:$0xf]
      %v723 = vld [vmem:[%s553 + $0x4c] sm:$0xf]
      %v724 = vld [vmem:[%s553 + $0x50] sm:$0xf]
      %v725 = vld [vmem:[%s553 + $0x54] sm:$0xf]
      %v726 = vld [vmem:[%s553 + $0x58] sm:$0xf]
      %v727 = vld [vmem:[%s553 + $0x5c] sm:$0xf]
      %v728 = vld [vmem:[%s553 + $0x60] sm:$0xf]
      %v729 = vld [vmem:[%s553 + $0x64] sm:$0xf]
      %v730 = vld [vmem:[%s553 + $0x68] sm:$0xf]
      %v731 = vld [vmem:[%s553 + $0x6c] sm:$0xf]
      %v732 = vld [vmem:[%s553 + $0x70] sm:$0xf]
      %v733 = vld [vmem:[%s553 + $0x74] sm:$0xf]
      %v734 = vld [vmem:[%s553 + $0x78] sm:$0xf]
      %v735 = vld [vmem:[%s553 + $0x7c] sm:$0xf]
      %v736 = vld [vmem:[%s556] sm:$0x1]
      %v738 = vperm.slane %v736, 0
      %v772 = vunpack.c.l.b16 %v704
      %v773 = vunpack.c.l.b16 %v705
      %v774 = vunpack.c.l.b16 %v706
      %v775 = vunpack.c.l.b16 %v707
      %v776 = vunpack.c.l.b16 %v708
      %v777 = vunpack.c.l.b16 %v709
      %v778 = vunpack.c.l.b16 %v710
      %v779 = vunpack.c.l.b16 %v711
      %v780 = vunpack.c.l.b16 %v712
      %v781 = vunpack.c.l.b16 %v713
      %v782 = vunpack.c.l.b16 %v714
      %v783 = vunpack.c.l.b16 %v715
      %v784 = vunpack.c.l.b16 %v716
      %v785 = vunpack.c.l.b16 %v717
      %v786 = vunpack.c.l.b16 %v718
      %v787 = vunpack.c.l.b16 %v719
      %v788 = vunpack.c.l.b16 %v720
      %v789 = vunpack.c.l.b16 %v721
      %v790 = vunpack.c.l.b16 %v722
      %v791 = vunpack.c.l.b16 %v723
      %v792 = vunpack.c.l.b16 %v724
      %v793 = vunpack.c.l.b16 %v725
      %v794 = vunpack.c.l.b16 %v726
      %v795 = vunpack.c.l.b16 %v727
      %v796 = vunpack.c.l.b16 %v728
      %v797 = vunpack.c.l.b16 %v729
      %v798 = vunpack.c.l.b16 %v730
      %v799 = vunpack.c.l.b16 %v731
      %v800 = vunpack.c.l.b16 %v732
      %v801 = vunpack.c.l.b16 %v733
      %v802 = vunpack.c.l.b16 %v734
      %v803 = vunpack.c.l.b16 %v735
      %v804 = vpack.c.b16 %v773, %v772
      %v805 = vpack.c.b16 %v775, %v774
      %v806 = vpack.c.b16 %v777, %v776
      %v807 = vpack.c.b16 %v779, %v778
      %v808 = vpack.c.b16 %v781, %v780
      %v809 = vpack.c.b16 %v783, %v782
      %v810 = vpack.c.b16 %v785, %v784
      %v811 = vpack.c.b16 %v787, %v786
      %v812 = vpack.c.b16 %v789, %v788
      %v813 = vpack.c.b16 %v791, %v790
      %v814 = vpack.c.b16 %v793, %v792
      %v815 = vpack.c.b16 %v795, %v794
      %v816 = vpack.c.b16 %v797, %v796
      %v817 = vpack.c.b16 %v799, %v798
      %v818 = vpack.c.b16 %v801, %v800
      %v819 = vpack.c.b16 %v803, %v802
      %836 = vmatpush.bf16.msra.mxu0 %v811
      %837 = vmatpush.bf16.msra.mxu0 %v810
      %838 = vmatpush.bf16.msra.mxu0 %v809
      %839 = vmatpush.bf16.msra.mxu0 %v808
      %840 = vmatpush.bf16.msra.mxu0 %v807
      %841 = vmatpush.bf16.msra.mxu0 %v806
      %842 = vmatpush.bf16.msra.mxu0 %v805
      %843 = vmatpush.bf16.msra.mxu0 %v804
      %844 = vmatmul.bf16.gmra.mxu0 %v702
      %v845 = vpop.f32.mrf.mxu0
      %v846 = vadd.f32 %v738, %v845
      %v847 = vpop.f32.mrf.mxu0
      %v848 = vadd.f32 %v738, %v847
      %849 = vdwg.mxu0
      %850 = vmatpush.bf16.msra.mxu0 %v819
      %851 = vmatpush.bf16.msra.mxu0 %v818
      %852 = vmatpush.bf16.msra.mxu0 %v817
      %853 = vmatpush.bf16.msra.mxu0 %v816
      %854 = vmatpush.bf16.msra.mxu0 %v815
      %855 = vmatpush.bf16.msra.mxu0 %v814
      %856 = vmatpush.bf16.msra.mxu0 %v813
      %857 = vmatpush.bf16.msra.mxu0 %v812
      %858 = vmatmul.bf16.gmra.mxu0 %v703
      %v859 = vpop.f32.mrf.mxu0
      %v860 = vadd.f32 %v846, %v859
      %v861 = vpop.f32.mrf.mxu0
      %v862 = vadd.f32 %v848, %v861
      %863 = vdwg.mxu0
      %v864 = vpack.c.bf16 %v860, %v860
      %v865 = vpack.c.bf16 %v862, %v862
      %866 = vst [vmem:[%s585] sm:$0xf] %v864
      %867 = vst [vmem:[%s585 + $0x4] sm:$0xf] %v865
      %v868 = vld [vmem:[%s561] sm:$0xf]
      %v869 = vld [vmem:[%s561 + $0x4] sm:$0xf]
      %v870 = vld [vmem:[%s561 + $0x8] sm:$0xf]
      %v871 = vld [vmem:[%s561 + $0xc] sm:$0xf]
      %v872 = vld [vmem:[%s561 + $0x10] sm:$0xf]
      %v873 = vld [vmem:[%s561 + $0x14] sm:$0xf]
      %v874 = vld [vmem:[%s561 + $0x18] sm:$0xf]
      %v875 = vld [vmem:[%s561 + $0x1c] sm:$0xf]
      %v876 = vld [vmem:[%s561 + $0x20] sm:$0xf]
      %v877 = vld [vmem:[%s561 + $0x24] sm:$0xf]
      %v878 = vld [vmem:[%s561 + $0x28] sm:$0xf]
      %v879 = vld [vmem:[%s561 + $0x2c] sm:$0xf]
      %v880 = vld [vmem:[%s561 + $0x30] sm:$0xf]
      %v881 = vld [vmem:[%s561 + $0x34] sm:$0xf]
      %v882 = vld [vmem:[%s561 + $0x38] sm:$0xf]
      %v883 = vld [vmem:[%s561 + $0x3c] sm:$0xf]
      %v884 = vld [vmem:[%s561 + $0x40] sm:$0xf]
      %v885 = vld [vmem:[%s561 + $0x44] sm:$0xf]
      %v886 = vld [vmem:[%s561 + $0x48] sm:$0xf]
      %v887 = vld [vmem:[%s561 + $0x4c] sm:$0xf]
      %v888 = vld [vmem:[%s561 + $0x50] sm:$0xf]
      %v889 = vld [vmem:[%s561 + $0x54] sm:$0xf]
      %v890 = vld [vmem:[%s561 + $0x58] sm:$0xf]
      %v891 = vld [vmem:[%s561 + $0x5c] sm:$0xf]
      %v892 = vld [vmem:[%s561 + $0x60] sm:$0xf]
      %v893 = vld [vmem:[%s561 + $0x64] sm:$0xf]
      %v894 = vld [vmem:[%s561 + $0x68] sm:$0xf]
      %v895 = vld [vmem:[%s561 + $0x6c] sm:$0xf]
      %v896 = vld [vmem:[%s561 + $0x70] sm:$0xf]
      %v897 = vld [vmem:[%s561 + $0x74] sm:$0xf]
      %v898 = vld [vmem:[%s561 + $0x78] sm:$0xf]
      %v899 = vld [vmem:[%s561 + $0x7c] sm:$0xf]
      %v900 = vld [vmem:[%s564] sm:$0x1]
      %v902 = vperm.slane %v900, 0
      %v936 = vunpack.c.l.b16 %v868
      %v937 = vunpack.c.l.b16 %v869
      %v938 = vunpack.c.l.b16 %v870
      %v939 = vunpack.c.l.b16 %v871
      %v940 = vunpack.c.l.b16 %v872
      %v941 = vunpack.c.l.b16 %v873
      %v942 = vunpack.c.l.b16 %v874
      %v943 = vunpack.c.l.b16 %v875
      %v944 = vunpack.c.l.b16 %v876
      %v945 = vunpack.c.l.b16 %v877
      %v946 = vunpack.c.l.b16 %v878
      %v947 = vunpack.c.l.b16 %v879
      %v948 = vunpack.c.l.b16 %v880
      %v949 = vunpack.c.l.b16 %v881
      %v950 = vunpack.c.l.b16 %v882
      %v951 = vunpack.c.l.b16 %v883
      %v952 = vunpack.c.l.b16 %v884
      %v953 = vunpack.c.l.b16 %v885
      %v954 = vunpack.c.l.b16 %v886
      %v955 = vunpack.c.l.b16 %v887
      %v956 = vunpack.c.l.b16 %v888
      %v957 = vunpack.c.l.b16 %v889
      %v958 = vunpack.c.l.b16 %v890
      %v959 = vunpack.c.l.b16 %v891
      %v960 = vunpack.c.l.b16 %v892
      %v961 = vunpack.c.l.b16 %v893
      %v962 = vunpack.c.l.b16 %v894
      %v963 = vunpack.c.l.b16 %v895
      %v964 = vunpack.c.l.b16 %v896
      %v965 = vunpack.c.l.b16 %v897
      %v966 = vunpack.c.l.b16 %v898
      %v967 = vunpack.c.l.b16 %v899
      %v968 = vpack.c.b16 %v937, %v936
      %v969 = vpack.c.b16 %v939, %v938
      %v970 = vpack.c.b16 %v941, %v940
      %v971 = vpack.c.b16 %v943, %v942
      %v972 = vpack.c.b16 %v945, %v944
      %v973 = vpack.c.b16 %v947, %v946
      %v974 = vpack.c.b16 %v949, %v948
      %v975 = vpack.c.b16 %v951, %v950
      %v976 = vpack.c.b16 %v953, %v952
      %v977 = vpack.c.b16 %v955, %v954
      %v978 = vpack.c.b16 %v957, %v956
      %v979 = vpack.c.b16 %v959, %v958
      %v980 = vpack.c.b16 %v961, %v960
      %v981 = vpack.c.b16 %v963, %v962
      %v982 = vpack.c.b16 %v965, %v964
      %v983 = vpack.c.b16 %v967, %v966
      %1000 = vmatpush.bf16.msra.mxu0 %v975
      %1001 = vmatpush.bf16.msra.mxu0 %v974
      %1002 = vmatpush.bf16.msra.mxu0 %v973
      %1003 = vmatpush.bf16.msra.mxu0 %v972
      %1004 = vmatpush.bf16.msra.mxu0 %v971
      %1005 = vmatpush.bf16.msra.mxu0 %v970
      %1006 = vmatpush.bf16.msra.mxu0 %v969
      %1007 = vmatpush.bf16.msra.mxu0 %v968
      %1008 = vmatmul.bf16.gmra.mxu0 %v702
      %v1009 = vpop.f32.mrf.mxu0
      %v1010 = vadd.f32 %v902, %v1009
      %v1011 = vpop.f32.mrf.mxu0
      %v1012 = vadd.f32 %v902, %v1011
      %1013 = vdwg.mxu0
      %1014 = vmatpush.bf16.msra.mxu0 %v983
      %1015 = vmatpush.bf16.msra.mxu0 %v982
      %1016 = vmatpush.bf16.msra.mxu0 %v981
      %1017 = vmatpush.bf16.msra.mxu0 %v980
      %1018 = vmatpush.bf16.msra.mxu0 %v979
      %1019 = vmatpush.bf16.msra.mxu0 %v978
      %1020 = vmatpush.bf16.msra.mxu0 %v977
      %1021 = vmatpush.bf16.msra.mxu0 %v976
      %1022 = vmatmul.bf16.gmra.mxu0 %v703
      %v1023 = vpop.f32.mrf.mxu0
      %v1024 = vadd.f32 %v1010, %v1023
      %v1025 = vpop.f32.mrf.mxu0
      %v1026 = vadd.f32 %v1012, %v1025
      %1027 = vdwg.mxu0
      %v1028 = vpack.c.bf16 %v1024, %v1024
      %v1029 = vpack.c.bf16 %v1026, %v1026
      %1030 = vst [vmem:[%s599] sm:$0xf] %v1028
      %1031 = vst [vmem:[%s599 + $0x4] sm:$0xf] %v1029
      %v1032 = vld [vmem:[%s569] sm:$0xf]
      %v1033 = vld [vmem:[%s569 + $0x4] sm:$0xf]
      %v1034 = vld [vmem:[%s569 + $0x8] sm:$0xf]
      %v1035 = vld [vmem:[%s569 + $0xc] sm:$0xf]
      %v1036 = vld [vmem:[%s569 + $0x10] sm:$0xf]
      %v1037 = vld [vmem:[%s569 + $0x14] sm:$0xf]
      %v1038 = vld [vmem:[%s569 + $0x18] sm:$0xf]
      %v1039 = vld [vmem:[%s569 + $0x1c] sm:$0xf]
      %v1040 = vld [vmem:[%s569 + $0x20] sm:$0xf]
      %v1041 = vld [vmem:[%s569 + $0x24] sm:$0xf]
      %v1042 = vld [vmem:[%s569 + $0x28] sm:$0xf]
      %v1043 = vld [vmem:[%s569 + $0x2c] sm:$0xf]
      %v1044 = vld [vmem:[%s569 + $0x30] sm:$0xf]
      %v1045 = vld [vmem:[%s569 + $0x34] sm:$0xf]
      %v1046 = vld [vmem:[%s569 + $0x38] sm:$0xf]
      %v1047 = vld [vmem:[%s569 + $0x3c] sm:$0xf]
      %v1048 = vld [vmem:[%s569 + $0x40] sm:$0xf]
      %v1049 = vld [vmem:[%s569 + $0x44] sm:$0xf]
      %v1050 = vld [vmem:[%s569 + $0x48] sm:$0xf]
      %v1051 = vld [vmem:[%s569 + $0x4c] sm:$0xf]
      %v1052 = vld [vmem:[%s569 + $0x50] sm:$0xf]
      %v1053 = vld [vmem:[%s569 + $0x54] sm:$0xf]
      %v1054 = vld [vmem:[%s569 + $0x58] sm:$0xf]
      %v1055 = vld [vmem:[%s569 + $0x5c] sm:$0xf]
      %v1056 = vld [vmem:[%s569 + $0x60] sm:$0xf]
      %v1057 = vld [vmem:[%s569 + $0x64] sm:$0xf]
      %v1058 = vld [vmem:[%s569 + $0x68] sm:$0xf]
      %v1059 = vld [vmem:[%s569 + $0x6c] sm:$0xf]
      %v1060 = vld [vmem:[%s569 + $0x70] sm:$0xf]
      %v1061 = vld [vmem:[%s569 + $0x74] sm:$0xf]
      %v1062 = vld [vmem:[%s569 + $0x78] sm:$0xf]
      %v1063 = vld [vmem:[%s569 + $0x7c] sm:$0xf]
      %v1064 = vld [vmem:[%s572] sm:$0x1]
      %v1066 = vperm.slane %v1064, 0
      %v1100 = vunpack.c.l.b16 %v1032
      %v1101 = vunpack.c.l.b16 %v1033
      %v1102 = vunpack.c.l.b16 %v1034
      %v1103 = vunpack.c.l.b16 %v1035
      %v1104 = vunpack.c.l.b16 %v1036
      %v1105 = vunpack.c.l.b16 %v1037
      %v1106 = vunpack.c.l.b16 %v1038
      %v1107 = vunpack.c.l.b16 %v1039
      %v1108 = vunpack.c.l.b16 %v1040
      %v1109 = vunpack.c.l.b16 %v1041
      %v1110 = vunpack.c.l.b16 %v1042
      %v1111 = vunpack.c.l.b16 %v1043
      %v1112 = vunpack.c.l.b16 %v1044
      %v1113 = vunpack.c.l.b16 %v1045
      %v1114 = vunpack.c.l.b16 %v1046
      %v1115 = vunpack.c.l.b16 %v1047
      %v1116 = vunpack.c.l.b16 %v1048
      %v1117 = vunpack.c.l.b16 %v1049
      %v1118 = vunpack.c.l.b16 %v1050
      %v1119 = vunpack.c.l.b16 %v1051
      %v1120 = vunpack.c.l.b16 %v1052
      %v1121 = vunpack.c.l.b16 %v1053
      %v1122 = vunpack.c.l.b16 %v1054
      %v1123 = vunpack.c.l.b16 %v1055
      %v1124 = vunpack.c.l.b16 %v1056
      %v1125 = vunpack.c.l.b16 %v1057
      %v1126 = vunpack.c.l.b16 %v1058
      %v1127 = vunpack.c.l.b16 %v1059
      %v1128 = vunpack.c.l.b16 %v1060
      %v1129 = vunpack.c.l.b16 %v1061
      %v1130 = vunpack.c.l.b16 %v1062
      %v1131 = vunpack.c.l.b16 %v1063
      %v1132 = vpack.c.b16 %v1101, %v1100
      %v1133 = vpack.c.b16 %v1103, %v1102
      %v1134 = vpack.c.b16 %v1105, %v1104
      %v1135 = vpack.c.b16 %v1107, %v1106
      %v1136 = vpack.c.b16 %v1109, %v1108
      %v1137 = vpack.c.b16 %v1111, %v1110
      %v1138 = vpack.c.b16 %v1113, %v1112
      %v1139 = vpack.c.b16 %v1115, %v1114
      %v1140 = vpack.c.b16 %v1117, %v1116
      %v1141 = vpack.c.b16 %v1119, %v1118
      %v1142 = vpack.c.b16 %v1121, %v1120
      %v1143 = vpack.c.b16 %v1123, %v1122
      %v1144 = vpack.c.b16 %v1125, %v1124
      %v1145 = vpack.c.b16 %v1127, %v1126
      %v1146 = vpack.c.b16 %v1129, %v1128
      %v1147 = vpack.c.b16 %v1131, %v1130
      %1164 = vmatpush.bf16.msra.mxu0 %v1139
      %1165 = vmatpush.bf16.msra.mxu0 %v1138
      %1166 = vmatpush.bf16.msra.mxu0 %v1137
      %1167 = vmatpush.bf16.msra.mxu0 %v1136
      %1168 = vmatpush.bf16.msra.mxu0 %v1135
      %1169 = vmatpush.bf16.msra.mxu0 %v1134
      %1170 = vmatpush.bf16.msra.mxu0 %v1133
      %1171 = vmatpush.bf16.msra.mxu0 %v1132
      %1172 = vmatmul.bf16.gmra.mxu0 %v702
      %v1173 = vpop.f32.mrf.mxu0
      %v1174 = vadd.f32 %v1066, %v1173
      %v1175 = vpop.f32.mrf.mxu0
      %v1176 = vadd.f32 %v1066, %v1175
      %1177 = vdwg.mxu0
      %1178 = vmatpush.bf16.msra.mxu0 %v1147
      %1179 = vmatpush.bf16.msra.mxu0 %v1146
      %1180 = vmatpush.bf16.msra.mxu0 %v1145
      %1181 = vmatpush.bf16.msra.mxu0 %v1144
      %1182 = vmatpush.bf16.msra.mxu0 %v1143
      %1183 = vmatpush.bf16.msra.mxu0 %v1142
      %1184 = vmatpush.bf16.msra.mxu0 %v1141
      %1185 = vmatpush.bf16.msra.mxu0 %v1140
      %1186 = vmatmul.bf16.gmra.mxu0 %v703
      %v1187 = vpop.f32.mrf.mxu0
      %v1188 = vadd.f32 %v1174, %v1187
      %v1189 = vpop.f32.mrf.mxu0
      %v1190 = vadd.f32 %v1176, %v1189
      %1191 = vdwg.mxu0
      %v1192 = vpack.c.bf16 %v1188, %v1188
      %v1193 = vpack.c.bf16 %v1190, %v1190
      %1194 = vst [vmem:[%s613] sm:$0xf] %v1192
      %1195 = vst [vmem:[%s613 + $0x4] sm:$0xf] %v1193
      %s1196 = smul.u32 2, %s29
      %p1197 = scmp.lt.s32.totalorder %s28, 1
      %s1198 = scalar_select %p1197, %s28, 1
      %p1199 = scmp.lt.s32.totalorder %s30, 1
      %s1200 = scalar_select %p1199, %s30, 1
      %p1201 = scmp.lt.s32.totalorder %s1196, 3
      %s1202 = scalar_select %p1201, %s1196, 3
      %s1203 = smul.addr %s1200, 4
      %s1204 = sadd.s32 %s1202, %s1203
      %s1205 = smul.addr %s1198, 8
      %s1206 = sadd.s32 %s1204, %s1205
      %s1207 = smul.addr %s1206, 4
      %s1208 = scalar_lea.vmem %s9, %s1207
      %s1209 = smul.u32 2, %s29
      %p1210 = scmp.lt.s32.totalorder %s28, 1
      %s1211 = scalar_select %p1210, %s28, 1
      %p1212 = scmp.lt.s32.totalorder %s30, 1
      %s1213 = scalar_select %p1212, %s30, 1
      %p1214 = scmp.lt.s32.totalorder %s1209, 3
      %s1215 = scalar_select %p1214, %s1209, 3
      %s1216 = smul.addr %s1213, 4
      %s1217 = sadd.s32 %s1215, %s1216
      %s1218 = smul.addr %s1211, 8
      %s1219 = sadd.s32 %s1217, %s1218
      %s1220 = smul.addr %s1219, 4
      %s1221 = scalar_lea.vmem %s10, %s1220
      %s1222 = smul.u32 2, %s29
      %p1223 = scmp.lt.s32.totalorder %s28, 1
      %s1224 = scalar_select %p1223, %s28, 1
      %p1225 = scmp.lt.s32.totalorder %s30, 1
      %s1226 = scalar_select %p1225, %s30, 1
      %p1227 = scmp.lt.s32.totalorder %s1222, 3
      %s1228 = scalar_select %p1227, %s1222, 3
      %s1229 = smul.addr %s1226, 4
      %s1230 = sadd.s32 %s1228, %s1229
      %s1231 = smul.addr %s1224, 8
      %s1232 = sadd.s32 %s1230, %s1231
      %s1233 = smul.addr %s1232, 4
      %s1234 = scalar_lea.vmem %s11, %s1233
      // Predicated region
      $region57: #{encoder_layer.3} parent=55 // pred_check
        %p1235 = pneg %p290
      $region58: #{encoder_layer.3} parent=55 // pred_check_branch
        %1237 = sbr.rel (%p1235) target = $region60
      $region59: #{encoder_layer.3} parent=55 // pred_region
        %s1238 = smul.u32 2, %s29
      $region60: #{encoder_layer.3} parent=55 // pred_fallthru
        _
      // Predicated region
      $region61: #{encoder_layer.3} parent=55 // pred_check
        %p1239 = pneg %p320
      $region62: #{encoder_layer.3} parent=55 // pred_check_branch
        %1241 = sbr.rel (%p1239) target = $region64
      $region63: #{encoder_layer.3} parent=55 // pred_region
        %s1242 = smul.u32 2, %s29
      $region64: #{encoder_layer.3} parent=55 // pred_fallthru
        _
      // Predicated region
      $region65: #{encoder_layer.3} parent=55 // pred_check
        %p1243 = pneg %p350
      $region66: #{encoder_layer.3} parent=55 // pred_check_branch
        %1245 = sbr.rel (%p1243) target = $region68
      $region67: #{encoder_layer.3} parent=55 // pred_region
        %s1246 = smul.u32 2, %s29
      $region68: #{encoder_layer.3} parent=55 // pred_fallthru
        _
    $region56: #{encoder_layer.3} parent=5 // pred_fallthru
      _
    %p1247 = scmp.le.s32.totalorder 2, %s18
    // Predicated region
    $region69: #{encoder_layer.3} parent=5 // pred_check
      %p1248 = pneg %p1247
    $region70: #{encoder_layer.3} parent=5 // pred_check_branch
      %1250 = sbr.rel (%p1248) target = $region72
    $region71: #{encoder_layer.3} parent=5 // pred_region
      %s1251 = ssub.s32 %s18, 2
      // Predicated region
      $region73: #{encoder_layer.3} parent=71 // pred_check
        %p1252 = pneg %p296
      $region74: #{encoder_layer.3} parent=71 // pred_check_branch
        %1254 = sbr.rel (%p1252) target = $region76
      $region75: #{encoder_layer.3} parent=71 // pred_region
        %s1255 = smul.u32 2, %s32
        %p1256 = scmp.lt.s32.totalorder %s31, 1
        %s1257 = scalar_select %p1256, %s31, 1
        %p1258 = scmp.lt.s32.totalorder %s33, 1
        %s1259 = scalar_select %p1258, %s33, 1
        %p1260 = scmp.lt.s32.totalorder %s1255, 3
        %s1261 = scalar_select %p1260, %s1255, 3
        %s1262 = smul.addr %s1259, 4
        %s1263 = sadd.s32 %s1261, %s1262
        %s1264 = smul.addr %s1257, 8
        %s1265 = sadd.s32 %s1263, %s1264
        %s1266 = smul.addr %s1265, 4
        %s1267 = scalar_lea.vmem %s9, %s1266
      $region76: #{encoder_layer.3} parent=71 // pred_fallthru
        _
      // Predicated region
      $region77: #{encoder_layer.3} parent=71 // pred_check
        %p1268 = pneg %p326
      $region78: #{encoder_layer.3} parent=71 // pred_check_branch
        %1270 = sbr.rel (%p1268) target = $region80
      $region79: #{encoder_layer.3} parent=71 // pred_region
        %s1271 = smul.u32 2, %s32
        %p1272 = scmp.lt.s32.totalorder %s31, 1
        %s1273 = scalar_select %p1272, %s31, 1
        %p1274 = scmp.lt.s32.totalorder %s33, 1
        %s1275 = scalar_select %p1274, %s33, 1
        %p1276 = scmp.lt.s32.totalorder %s1271, 3
        %s1277 = scalar_select %p1276, %s1271, 3
        %s1278 = smul.addr %s1275, 4
        %s1279 = sadd.s32 %s1277, %s1278
        %s1280 = smul.addr %s1273, 8
        %s1281 = sadd.s32 %s1279, %s1280
        %s1282 = smul.addr %s1281, 4
        %s1283 = scalar_lea.vmem %s10, %s1282
      $region80: #{encoder_layer.3} parent=71 // pred_fallthru
        _
      // Predicated region
      $region81: #{encoder_layer.3} parent=71 // pred_check
        %p1284 = pneg %p356
      $region82: #{encoder_layer.3} parent=71 // pred_check_branch
        %1286 = sbr.rel (%p1284) target = $region84
      $region83: #{encoder_layer.3} parent=71 // pred_region
        %s1287 = smul.u32 2, %s32
        %p1288 = scmp.lt.s32.totalorder %s31, 1
        %s1289 = scalar_select %p1288, %s31, 1
        %p1290 = scmp.lt.s32.totalorder %s33, 1
        %s1291 = scalar_select %p1290, %s33, 1
        %p1292 = scmp.lt.s32.totalorder %s1287, 3
        %s1293 = scalar_select %p1292, %s1287, 3
        %s1294 = smul.addr %s1291, 4
        %s1295 = sadd.s32 %s1293, %s1294
        %s1296 = smul.addr %s1289, 8
        %s1297 = sadd.s32 %s1295, %s1296
        %s1298 = smul.addr %s1297, 4
        %s1299 = scalar_lea.vmem %s11, %s1298
      $region84: #{encoder_layer.3} parent=71 // pred_fallthru
        _
    $region72: #{encoder_layer.3} parent=5 // pred_fallthru
      _
  $region6: #{encoder_layer.3} parent=0 // loop_footer
    %s22 = sadd.s32 1, %s18
  $region7: #{encoder_layer.3} parent=0 // loop_footer_branch
    %17 = sbr.rel target = $region3
  $region8: #{encoder_layer.3} parent=0 // loop_exit
    _

// kernel: encoder_layer.5
$region0: #{encoder_layer.5}
  #allocation0 [shape = 'u32[]', space=smem, size = 0x4, offset = 0x4, fixed_abs, tag = 'smem constant byte address 0x4 - core index']
  #allocation1 [shape = 'u32[72,128]{1,0:T(1,128)}', space=vmem, size = 0x9000, scoped, tag = 'internal scratch']
  #allocation2 [shape = 'f32[16,256]{1,0:T(8,128)}', space=vmem, size = 0x4000, scoped, tag = 'scratch operand']
  #allocation3 [shape = 'bf16[16,256]{1,0:T(8,128)(2,1)}', space=vmem, size = 0x2000, scoped, tag = 'scratch operand']
  %s0 = inlined_call_operand.vmem [shape: f32[2,32,256], index: 0, kind: input, shape index: {}]
  %s1 = inlined_call_operand.vmem [shape: f32[1,256], index: 1, kind: input, shape index: {}]
  %s2 = inlined_call_operand.vmem [shape: f32[1,256], index: 2, kind: input, shape index: {}]
  %s3 = inlined_call_operand.vmem [shape: bf16[256,512], index: 3, kind: input, shape index: {}]
  %s4 = inlined_call_operand.vmem [shape: f32[1,512], index: 4, kind: input, shape index: {}]
  %s5 = inlined_call_operand.vmem [shape: bf16[512,256], index: 5, kind: input, shape index: {}]
  %s6 = inlined_call_operand.vmem [shape: f32[1,256], index: 6, kind: input, shape index: {}]
  %s7 = inlined_call_operand.hbm [shape: f32[2,32,256], index: 7, kind: output, shape index: {}]
  %s8 = sld [smem:[#allocation0]]
  $region107: #{encoder_layer.5} parent=0
    _
  %s10 = ssub.s32 1, %s8
  %s11 = scalar_select 0, %s10, %s8
  $region1: #{encoder_layer.5} parent=0
    #allocation4 [shape = 'u8[262144]{0}', space=vmem, size = 0x40000, scoped, tag = 'input window, operand 3']
    #allocation5 [shape = 'u8[32768]{0}', space=vmem, size = 0x8000, scoped, tag = 'output window, operand 0']
    #allocation6 [shape = 's32[2]{0}', space=sflag, size = 0x8, scoped, tag = 'scoped memory for encoder_layer.5']
    %12 = vsyncpa [#allocation6], 0
    %s13 = scalar_lea.sflag [#allocation6], 1
    %14 = vsyncpa %s13, 0
    loop: start=0, step=1, limit=10
    $region2: #{encoder_layer.5} parent=1 // loop_pre_header
      _
    $region3: #{encoder_layer.5} parent=1 // loop_header
      %s16 = sphi 0, %s20
      %p17 = scmp.ge.s32.totalorder %s16, 10
      %s23 = sphi 0, %s42
      %s24 = sphi 0, %s38
      %s25 = sphi 0, %s34
      %s26 = sphi 0, %s23
      %s27 = sphi 0, %s24
      %s28 = sphi 0, %s25
      %s29 = sphi 0, %s26
      %s30 = sphi 0, %s27
      %s31 = sphi 0, %s28
      %s47 = sphi 0, %s49
      %s50 = sphi 0, %s47
      %s51 = sphi 0, %s50
      %s67 = sphi 0, %s51
      %s71 = sphi 0, %s71
      %s73 = sphi 0, %s71
      %s74 = sphi 0, %s73
      %s88 = sphi 0, %s74
      %s92 = sphi 0, %s92
      %s94 = sphi 0, %s92
      %s95 = sphi 0, %s94
      %s109 = sphi 0, %s95
      %s115 = sphi 0, %s117
      %s118 = sphi 0, %s115
      %s119 = sphi 0, %s118
      %s135 = sphi 0, %s119
      %s141 = sphi 0, %s143
      %s144 = sphi 0, %s141
      %s145 = sphi 0, %s144
      %s161 = sphi 0, %s145
      %s167 = sphi 0, %s169
      %s170 = sphi 0, %s167
      %s171 = sphi 0, %s170
      %s187 = sphi 0, %s171
      %s191 = sphi 0, %s191
      %s193 = sphi 0, %s191
      %s194 = sphi 0, %s193
      %s208 = sphi 0, %s194
      %s216 = sphi 0, %s218
      %s219 = sphi 0, %s216
      %s220 = sphi 0, %s219
      %s236 = sphi 0, %s220
    $region4: #{encoder_layer.5} parent=1 // loop_header_branch
      %19 = sbr.rel (%p17) target = $region8
    $region5: #{encoder_layer.5} parent=1 // loop_body
      %s21 = ssub.s32 %s16, 1
      %s22 = ssub.s32 %s16, 2
      %s32 = sadd.s32 1, %s25
      %p33 = scmp.ge.s32.totalorder %s32, 2
      %s34 = scalar_select %p33, 0, %s32
      %s35 = sadd.s32 1, %s24
      %s36 = scalar_select %p33, %s35, %s24
      %p37 = scmp.ge.s32.totalorder %s36, 2
      %s38 = scalar_select %p37, 0, %s36
      %s39 = sadd.s32 1, %s23
      %s40 = scalar_select %p37, %s39, %s23
      %p41 = scmp.ge.s32.totalorder %s40, 2
      %s42 = scalar_select %p41, 0, %s40
      %s43 = ssub.s32 %s23, %s42
      %s44 = ssub.s32 %s24, %s38
      %s45 = sor.u32 %s43, %s44
      %p46 = scmp.eq.s32.totalorder %s45, 0
      %s48 = sadd.s32 %s47, 1
      %s49 = scalar_select %p46, %s47, %s48
      %p52 = pneg %p46
      %p53 = scmp.eq.s32.totalorder %s16, 7
      %p54 = por %p52, %p53
      %p55 = scmp.ne.s32.totalorder %s47, %s50
      %p56 = scmp.eq.s32.totalorder %s16, 0
      %p57 = por %p55, %p56
      %p58 = scmp.ne.s32.totalorder %s47, %s50
      %p59 = scmp.eq.s32.totalorder %s21, 7
      %p60 = por %p58, %p59
      %p61 = scmp.ne.s32.totalorder %s50, %s51
      %p62 = scmp.eq.s32.totalorder %s21, 0
      %p63 = por %p61, %p62
      %p64 = scmp.ne.s32.totalorder %s50, %s51
      %p65 = scmp.eq.s32.totalorder %s22, 7
      %p66 = por %p64, %p65
      %p68 = scmp.ne.s32.totalorder %s51, %s67
      %p69 = scmp.eq.s32.totalorder %s22, 0
      %p70 = por %p68, %p69
      %s72 = sadd.s32 %s71, 1
      %p75 = scmp.eq.s32.totalorder %s16, 7
      %p76 = scmp.ne.s32.totalorder %s71, %s73
      %p77 = scmp.eq.s32.totalorder %s16, 0
      %p78 = por %p76, %p77
      %p79 = scmp.ne.s32.totalorder %s71, %s73
      %p80 = scmp.eq.s32.totalorder %s21, 7
      %p81 = por %p79, %p80
      %p82 = scmp.ne.s32.totalorder %s73, %s74
      %p83 = scmp.eq.s32.totalorder %s21, 0
      %p84 = por %p82, %p83
      %p85 = scmp.ne.s32.totalorder %s73, %s74
      %p86 = scmp.eq.s32.totalorder %s22, 7
      %p87 = por %p85, %p86
      %p89 = scmp.ne.s32.totalorder %s74, %s88
      %p90 = scmp.eq.s32.totalorder %s22, 0
      %p91 = por %p89, %p90
      %s93 = sadd.s32 %s92, 1
      %p96 = scmp.eq.s32.totalorder %s16, 7
      %p97 = scmp.ne.s32.totalorder %s92, %s94
      %p98 = scmp.eq.s32.totalorder %s16, 0
      %p99 = por %p97, %p98
      %p100 = scmp.ne.s32.totalorder %s92, %s94
      %p101 = scmp.eq.s32.totalorder %s21, 7
      %p102 = por %p100, %p101
      %p103 = scmp.ne.s32.totalorder %s94, %s95
      %p104 = scmp.eq.s32.totalorder %s21, 0
      %p105 = por %p103, %p104
      %p106 = scmp.ne.s32.totalorder %s94, %s95
      %p107 = scmp.eq.s32.totalorder %s22, 7
      %p108 = por %p106, %p107
      %p110 = scmp.ne.s32.totalorder %s95, %s109
      %p111 = scmp.eq.s32.totalorder %s22, 0
      %p112 = por %p110, %p111
      %s113 = ssub.s32 %s25, %s34
      %p114 = scmp.eq.s32.totalorder %s113, 0
      %s116 = sadd.s32 %s115, 1
      %s117 = scalar_select %p114, %s115, %s116
      %p120 = pneg %p114
      %p121 = scmp.eq.s32.totalorder %s16, 7
      %p122 = por %p120, %p121
      %p123 = scmp.ne.s32.totalorder %s115, %s118
      %p124 = scmp.eq.s32.totalorder %s16, 0
      %p125 = por %p123, %p124
      %p126 = scmp.ne.s32.totalorder %s115, %s118
      %p127 = scmp.eq.s32.totalorder %s21, 7
      %p128 = por %p126, %p127
      %p129 = scmp.ne.s32.totalorder %s118, %s119
      %p130 = scmp.eq.s32.totalorder %s21, 0
      %p131 = por %p129, %p130
      %p132 = scmp.ne.s32.totalorder %s118, %s119
      %p133 = scmp.eq.s32.totalorder %s22, 7
      %p134 = por %p132, %p133
      %p136 = scmp.ne.s32.totalorder %s119, %s135
      %p137 = scmp.eq.s32.totalorder %s22, 0
      %p138 = por %p136, %p137
      %s139 = ssub.s32 %s25, %s34
      %p140 = scmp.eq.s32.totalorder %s139, 0
      %s142 = sadd.s32 %s141, 1
      %s143 = scalar_select %p140, %s141, %s142
      %p146 = pneg %p140
      %p147 = scmp.eq.s32.totalorder %s16, 7
      %p148 = por %p146, %p147
      %p149 = scmp.ne.s32.totalorder %s141, %s144
      %p150 = scmp.eq.s32.totalorder %s16, 0
      %p151 = por %p149, %p150
      %p152 = scmp.ne.s32.totalorder %s141, %s144
      %p153 = scmp.eq.s32.totalorder %s21, 7
      %p154 = por %p152, %p153
      %p155 = scmp.ne.s32.totalorder %s144, %s145
      %p156 = scmp.eq.s32.totalorder %s21, 0
      %p157 = por %p155, %p156
      %p158 = scmp.ne.s32.totalorder %s144, %s145
      %p159 = scmp.eq.s32.totalorder %s22, 7
      %p160 = por %p158, %p159
      %p162 = scmp.ne.s32.totalorder %s145, %s161
      %p163 = scmp.eq.s32.totalorder %s22, 0
      %p164 = por %p162, %p163
      %s165 = ssub.s32 %s25, %s34
      %p166 = scmp.eq.s32.totalorder %s165, 0
      %s168 = sadd.s32 %s167, 1
      %s169 = scalar_select %p166, %s167, %s168
      %p172 = pneg %p166
      %p173 = scmp.eq.s32.totalorder %s16, 7
      %p174 = por %p172, %p173
      %p175 = scmp.ne.s32.totalorder %s167, %s170
      %p176 = scmp.eq.s32.totalorder %s16, 0
      %p177 = por %p175, %p176
      %p178 = scmp.ne.s32.totalorder %s167, %s170
      %p179 = scmp.eq.s32.totalorder %s21, 7
      %p180 = por %p178, %p179
      %p181 = scmp.ne.s32.totalorder %s170, %s171
      %p182 = scmp.eq.s32.totalorder %s21, 0
      %p183 = por %p181, %p182
      %p184 = scmp.ne.s32.totalorder %s170, %s171
      %p185 = scmp.eq.s32.totalorder %s22, 7
      %p186 = por %p184, %p185
      %p188 = scmp.ne.s32.totalorder %s171, %s187
      %p189 = scmp.eq.s32.totalorder %s22, 0
      %p190 = por %p188, %p189
      %s192 = sadd.s32 %s191, 1
      %p195 = scmp.eq.s32.totalorder %s16, 7
      %p196 = scmp.ne.s32.totalorder %s191, %s193
      %p197 = scmp.eq.s32.totalorder %s16, 0
      %p198 = por %p196, %p197
      %p199 = scmp.ne.s32.totalorder %s191, %s193
      %p200 = scmp.eq.s32.totalorder %s21, 7
      %p201 = por %p199, %p200
      %p202 = scmp.ne.s32.totalorder %s193, %s194
      %p203 = scmp.eq.s32.totalorder %s21, 0
      %p204 = por %p202, %p203
      %p205 = scmp.ne.s32.totalorder %s193, %s194
      %p206 = scmp.eq.s32.totalorder %s22, 7
      %p207 = por %p205, %p206
      %p209 = scmp.ne.s32.totalorder %s194, %s208
      %p210 = scmp.eq.s32.totalorder %s22, 0
      %p211 = por %p209, %p210
      %s212 = ssub.s32 %s23, %s42
      %s213 = ssub.s32 %s24, %s38
      %s214 = sor.u32 %s212, %s213
      %p215 = scmp.eq.s32.totalorder %s214, 0
      %s217 = sadd.s32 %s216, 1
      %s218 = scalar_select %p215, %s216, %s217
      %p221 = pneg %p215
      %p222 = scmp.eq.s32.totalorder %s16, 7
      %p223 = por %p221, %p222
      %p224 = scmp.ne.s32.totalorder %s216, %s219
      %p225 = scmp.eq.s32.totalorder %s16, 0
      %p226 = por %p224, %p225
      %p227 = scmp.ne.s32.totalorder %s216, %s219
      %p228 = scmp.eq.s32.totalorder %s21, 7
      %p229 = por %p227, %p228
      %p230 = scmp.ne.s32.totalorder %s219, %s220
      %p231 = scmp.eq.s32.totalorder %s21, 0
      %p232 = por %p230, %p231
      %p233 = scmp.ne.s32.totalorder %s219, %s220
      %p234 = scmp.eq.s32.totalorder %s22, 7
      %p235 = por %p233, %p234
      %p237 = scmp.ne.s32.totalorder %s220, %s236
      %p238 = scmp.eq.s32.totalorder %s22, 0
      %p239 = por %p237, %p238
      %p240 = scmp.le.s32.totalorder 1, %s16
      %p241 = scmp.lt.s32.totalorder %s16, 9
      %p242 = pnand %p240, %p241
      %p243 = pneg %p242
      // Predicated region
      $region9: #{encoder_layer.5} parent=5 // pred_check
        _
      $region10: #{encoder_layer.5} parent=5 // pred_check_branch
        %245 = sbr.rel (%p242) target = $region12
      $region11: #{encoder_layer.5} parent=5 // pred_region
        %s246 = ssub.s32 %s16, 1
        // Predicated region
        $region13: #{encoder_layer.5} parent=11 // pred_check
          %p247 = pneg %p84
        $region14: #{encoder_layer.5} parent=11 // pred_check_branch
          %249 = sbr.rel (%p247) target = $region16
        $region15: #{encoder_layer.5} parent=11 // pred_region
          _
        $region16: #{encoder_layer.5} parent=11 // pred_fallthru
          _
        // Predicated region
        $region17: #{encoder_layer.5} parent=11 // pred_check
          %p250 = pneg %p105
        $region18: #{encoder_layer.5} parent=11 // pred_check_branch
          %252 = sbr.rel (%p250) target = $region20
        $region19: #{encoder_layer.5} parent=11 // pred_region
          _
        $region20: #{encoder_layer.5} parent=11 // pred_fallthru
          _
        // Predicated region
        $region21: #{encoder_layer.5} parent=11 // pred_check
          %p253 = pneg %p204
        $region22: #{encoder_layer.5} parent=11 // pred_check_branch
          %255 = sbr.rel (%p253) target = $region24
        $region23: #{encoder_layer.5} parent=11 // pred_region
          _
        $region24: #{encoder_layer.5} parent=11 // pred_fallthru
          _
      $region12: #{encoder_layer.5} parent=5 // pred_fallthru
        _
      %p256 = scmp.lt.s32.totalorder %s16, 8
      // Predicated region
      $region25: #{encoder_layer.5} parent=5 // pred_check
        %p257 = pneg %p256
      $region26: #{encoder_layer.5} parent=5 // pred_check_branch
        %259 = sbr.rel (%p257) target = $region28
      $region27: #{encoder_layer.5} parent=5 // pred_region
        // Predicated region
        $region29: #{encoder_layer.5} parent=27 // pred_check
          %p260 = pneg %p57
        $region30: #{encoder_layer.5} parent=27 // pred_check_branch
          %262 = sbr.rel (%p260) target = $region32
        $region31: #{encoder_layer.5} parent=27 // pred_region
          %s263 = smul.u32 2, %s24
          %p264 = scmp.lt.s32.totalorder %s23, 1
          %s265 = scalar_select %p264, %s23, 1
          %p266 = scmp.lt.s32.totalorder %s263, 3
          %s267 = scalar_select %p266, %s263, 3
          %s268 = smul.addr %s267, 2
          %s269 = smul.addr %s265, 8
          %s270 = sadd.s32 %s268, %s269
          %s271 = smul.addr %s270, 8
          %s272 = scalar_lea.vmem %s0, %s271
          %s273 = smul.u32 2, %s24
        $region32: #{encoder_layer.5} parent=27 // pred_fallthru
          _
        // Predicated region
        $region33: #{encoder_layer.5} parent=27 // pred_check
          %p274 = pneg %p125
        $region34: #{encoder_layer.5} parent=27 // pred_check_branch
          %276 = sbr.rel (%p274) target = $region36
        $region35: #{encoder_layer.5} parent=27 // pred_region
          %s277 = sand.u32 %s115, 1
          %s278 = sand.u32 %s115, 1
          %s279 = smul.addr %s278, 256
          %s280 = scalar_lea.vmem [#allocation4], %s279
          %s281 = smul.u32 2, %s25
          %s282 = smul.addr %s281, 4
          %s283 = scalar_lea.vmem %s3, %s282
          // Predicated region
          $region37: #{encoder_layer.5} parent=35 // pred_check
            _
          $region38: #{encoder_layer.5} parent=35 // pred_check_branch
            %285 = sbr.rel (0) target = $region40
          $region39: #{encoder_layer.5} parent=35 // pred_region
            // Predicated region
            $region41: #{encoder_layer.5} parent=39 // pred_check
              _
            $region42: #{encoder_layer.5} parent=39 // pred_check_branch
              %287 = sbr.rel (0) target = $region44
            $region43: #{encoder_layer.5} parent=39 // pred_region
              // Predicated region
              $region56: #{encoder_layer.5} parent=43 // pred_check
                _
              $region57: #{encoder_layer.5} parent=43 // pred_check_branch
                %365 = sbr.rel (0) target = $region59
              $region58: #{encoder_layer.5} parent=43 // pred_region
                loop: start=0, step=1, limit=1
                $region60: #{encoder_layer.5} parent=58 // loop_pre_header
                  _
                $region61: #{encoder_layer.5} parent=58 // loop_header
                  %s367 = sphi 0, %s371
                  %p368 = scmp.ge.s32.totalorder %s367, 1
                  %s372 = sphi %s283, %s283
                  %s373 = sphi %s280, %s280
                $region62: #{encoder_layer.5} parent=58 // loop_header_branch
                  %370 = sbr.rel (%p368) target = $region66
                $region63: #{encoder_layer.5} parent=58 // loop_body
                  %v374 = vld [vmem:[%s372] sm:$0xff]
                  %375 = vst [vmem:[%s373] sm:$0xff] %v374
                  %v376 = vld [vmem:[%s372 + $0x10] sm:$0xff]
                  %377 = vst [vmem:[%s373 + $0x8] sm:$0xff] %v376
                  %v378 = vld [vmem:[%s372 + $0x20] sm:$0xff]
                  %379 = vst [vmem:[%s373 + $0x10] sm:$0xff] %v378
                  %v380 = vld [vmem:[%s372 + $0x30] sm:$0xff]
                  %381 = vst [vmem:[%s373 + $0x18] sm:$0xff] %v380
                  %v382 = vld [vmem:[%s372 + $0x40] sm:$0xff]
                  %383 = vst [vmem:[%s373 + $0x20] sm:$0xff] %v382
                  %v384 = vld [vmem:[%s372 + $0x50] sm:$0xff]
                  %385 = vst [vmem:[%s373 + $0x28] sm:$0xff] %v384
                  %v386 = vld [vmem:[%s372 + $0x60] sm:$0xff]
                  %387 = vst [vmem:[%s373 + $0x30] sm:$0xff] %v386
                  %v388 = vld [vmem:[%s372 + $0x70] sm:$0xff]
                  %389 = vst [vmem:[%s373 + $0x38] sm:$0xff] %v388
                  %v390 = vld [vmem:[%s372 + $0x80] sm:$0xff]
                  %391 = vst [vmem:[%s373 + $0x40] sm:$0xff] %v390
                  %v392 = vld [vmem:[%s372 + $0x90] sm:$0xff]
                  %393 = vst [vmem:[%s373 + $0x48] sm:$0xff] %v392
                  %v394 = vld [vmem:[%s372 + $0xa0] sm:$0xff]
                  %395 = vst [vmem:[%s373 + $0x50] sm:$0xff] %v394
                  %v396 = vld [vmem:[%s372 + $0xb0] sm:$0xff]
                  %397 = vst [vmem:[%s373 + $0x58] sm:$0xff] %v396
                  %v398 = vld [vmem:[%s372 + $0xc0] sm:$0xff]
                  %399 = vst [vmem:[%s373 + $0x60] sm:$0xff] %v398
                  %v400 = vld [vmem:[%s372 + $0xd0] sm:$0xff]
                  %401 = vst [vmem:[%s373 + $0x68] sm:$0xff] %v400
                  %v402 = vld [vmem:[%s372 + $0xe0] sm:$0xff]
                  %403 = vst [vmem:[%s373 + $0x70] sm:$0xff] %v402
                  %v404 = vld [vmem:[%s372 + $0xf0] sm:$0xff]
                  %405 = vst [vmem:[%s373 + $0x78] sm:$0xff] %v404
                  %v406 = vld [vmem:[%s372 + $0x100] sm:$0xff]
                  %407 = vst [vmem:[%s373 + $0x80] sm:$0xff] %v406
                  %v408 = vld [vmem:[%s372 + $0x110] sm:$0xff]
                  %409 = vst [vmem:[%s373 + $0x88] sm:$0xff] %v408
                  %v410 = vld [vmem:[%s372 + $0x120] sm:$0xff]
                  %411 = vst [vmem:[%s373 + $0x90] sm:$0xff] %v410
                  %v412 = vld [vmem:[%s372 + $0x130] sm:$0xff]
                  %413 = vst [vmem:[%s373 + $0x98] sm:$0xff] %v412
                  %v414 = vld [vmem:[%s372 + $0x140] sm:$0xff]
                  %415 = vst [vmem:[%s373 + $0xa0] sm:$0xff] %v414
                  %v416 = vld [vmem:[%s372 + $0x150] sm:$0xff]
                  %417 = vst [vmem:[%s373 + $0xa8] sm:$0xff] %v416
                  %v418 = vld [vmem:[%s372 + $0x160] sm:$0xff]
                  %419 = vst [vmem:[%s373 + $0xb0] sm:$0xff] %v418
                  %v420 = vld [vmem:[%s372 + $0x170] sm:$0xff]
                  %421 = vst [vmem:[%s373 + $0xb8] sm:$0xff] %v420
                  %v422 = vld [vmem:[%s372 + $0x180] sm:$0xff]
                  %423 = vst [vmem:[%s373 + $0xc0] sm:$0xff] %v422
                  %v424 = vld [vmem:[%s372 + $0x190] sm:$0xff]
                  %425 = vst [vmem:[%s373 + $0xc8] sm:$0xff] %v424
                  %v426 = vld [vmem:[%s372 + $0x1a0] sm:$0xff]
                  %427 = vst [vmem:[%s373 + $0xd0] sm:$0xff] %v426
                  %v428 = vld [vmem:[%s372 + $0x1b0] sm:$0xff]
                  %429 = vst [vmem:[%s373 + $0xd8] sm:$0xff] %v428
                  %v430 = vld [vmem:[%s372 + $0x1c0] sm:$0xff]
                  %431 = vst [vmem:[%s373 + $0xe0] sm:$0xff] %v430
                  %v432 = vld [vmem:[%s372 + $0x1d0] sm:$0xff]
                  %433 = vst [vmem:[%s373 + $0xe8] sm:$0xff] %v432
                  %v434 = vld [vmem:[%s372 + $0x1e0] sm:$0xff]
                  %435 = vst [vmem:[%s373 + $0xf0] sm:$0xff] %v434
                  %v436 = vld [vmem:[%s372 + $0x1f0] sm:$0xff]
                  %437 = vst [vmem:[%s373 + $0xf8] sm:$0xff] %v436
                $region64: #{encoder_layer.5} parent=58 // loop_footer
                  %s371 = sadd.s32 1, %s367
                $region65: #{encoder_layer.5} parent=58 // loop_footer_branch
                  %366 = sbr.rel target = $region61
                $region66: #{encoder_layer.5} parent=58 // loop_exit
                  _
              $region59: #{encoder_layer.5} parent=43 // pred_fallthru
                _
              // Predicated region
              $region67: #{encoder_layer.5} parent=43 // pred_check
                _
              $region68: #{encoder_layer.5} parent=43 // pred_check_branch
                %439 = sbr.rel target = $region70
              $region69: #{encoder_layer.5} parent=43 // pred_region
                _
              $region70: #{encoder_layer.5} parent=43 // pred_fallthru
                _
            $region44: #{encoder_layer.5} parent=39 // pred_fallthru
              _
            // Predicated region
            $region45: #{encoder_layer.5} parent=39 // pred_check
              _
            $region46: #{encoder_layer.5} parent=39 // pred_check_branch
              %289 = sbr.rel target = $region48
            $region47: #{encoder_layer.5} parent=39 // pred_region
              %s291 = ssub.s32 256, 1
              loop: start=0, step=1, limit=1
              $region49: #{encoder_layer.5} parent=47 // loop_pre_header
                _
              $region50: #{encoder_layer.5} parent=47 // loop_header
                %s293 = sphi 0, %s297
                %p294 = scmp.ge.s32.totalorder %s293, 1
                %s298 = sphi %s283, %s283
                %s299 = sphi %s280, %s280
              $region51: #{encoder_layer.5} parent=47 // loop_header_branch
                %296 = sbr.rel (%p294) target = $region55
              $region52: #{encoder_layer.5} parent=47 // loop_body
                %v300 = vld [vmem:[%s298] sm:%s291]
                %301 = vst [vmem:[%s299] sm:%s291] %v300
                %v302 = vld [vmem:[%s298 + $0x10] sm:%s291]
                %303 = vst [vmem:[%s299 + $0x8] sm:%s291] %v302
                %v304 = vld [vmem:[%s298 + $0x20] sm:%s291]
                %305 = vst [vmem:[%s299 + $0x10] sm:%s291] %v304
                %v306 = vld [vmem:[%s298 + $0x30] sm:%s291]
                %307 = vst [vmem:[%s299 + $0x18] sm:%s291] %v306
                %v308 = vld [vmem:[%s298 + $0x40] sm:%s291]
                %309 = vst [vmem:[%s299 + $0x20] sm:%s291] %v308
                %v310 = vld [vmem:[%s298 + $0x50] sm:%s291]
                %311 = vst [vmem:[%s299 + $0x28] sm:%s291] %v310
                %v312 = vld [vmem:[%s298 + $0x60] sm:%s291]
                %313 = vst [vmem:[%s299 + $0x30] sm:%s291] %v312
                %v314 = vld [vmem:[%s298 + $0x70] sm:%s291]
                %315 = vst [vmem:[%s299 + $0x38] sm:%s291] %v314
                %v316 = vld [vmem:[%s298 + $0x80] sm:%s291]
                %317 = vst [vmem:[%s299 + $0x40] sm:%s291] %v316
                %v318 = vld [vmem:[%s298 + $0x90] sm:%s291]
                %319 = vst [vmem:[%s299 + $0x48] sm:%s291] %v318
                %v320 = vld [vmem:[%s298 + $0xa0] sm:%s291]
                %321 = vst [vmem:[%s299 + $0x50] sm:%s291] %v320
                %v322 = vld [vmem:[%s298 + $0xb0] sm:%s291]
                %323 = vst [vmem:[%s299 + $0x58] sm:%s291] %v322
                %v324 = vld [vmem:[%s298 + $0xc0] sm:%s291]
                %325 = vst [vmem:[%s299 + $0x60] sm:%s291] %v324
                %v326 = vld [vmem:[%s298 + $0xd0] sm:%s291]
                %327 = vst [vmem:[%s299 + $0x68] sm:%s291] %v326
                %v328 = vld [vmem:[%s298 + $0xe0] sm:%s291]
                %329 = vst [vmem:[%s299 + $0x70] sm:%s291] %v328
                %v330 = vld [vmem:[%s298 + $0xf0] sm:%s291]
                %331 = vst [vmem:[%s299 + $0x78] sm:%s291] %v330
                %v332 = vld [vmem:[%s298 + $0x100] sm:%s291]
                %333 = vst [vmem:[%s299 + $0x80] sm:%s291] %v332
                %v334 = vld [vmem:[%s298 + $0x110] sm:%s291]
                %335 = vst [vmem:[%s299 + $0x88] sm:%s291] %v334
                %v336 = vld [vmem:[%s298 + $0x120] sm:%s291]
                %337 = vst [vmem:[%s299 + $0x90] sm:%s291] %v336
                %v338 = vld [vmem:[%s298 + $0x130] sm:%s291]
                %339 = vst [vmem:[%s299 + $0x98] sm:%s291] %v338
                %v340 = vld [vmem:[%s298 + $0x140] sm:%s291]
                %341 = vst [vmem:[%s299 + $0xa0] sm:%s291] %v340
                %v342 = vld [vmem:[%s298 + $0x150] sm:%s291]
                %343 = vst [vmem:[%s299 + $0xa8] sm:%s291] %v342
                %v344 = vld [vmem:[%s298 + $0x160] sm:%s291]
                %345 = vst [vmem:[%s299 + $0xb0] sm:%s291] %v344
                %v346 = vld [vmem:[%s298 + $0x170] sm:%s291]
                %347 = vst [vmem:[%s299 + $0xb8] sm:%s291] %v346
                %v348 = vld [vmem:[%s298 + $0x180] sm:%s291]
                %349 = vst [vmem:[%s299 + $0xc0] sm:%s291] %v348
                %v350 = vld [vmem:[%s298 + $0x190] sm:%s291]
                %351 = vst [vmem:[%s299 + $0xc8] sm:%s291] %v350
                %v352 = vld [vmem:[%s298 + $0x1a0] sm:%s291]
                %353 = vst [vmem:[%s299 + $0xd0] sm:%s291] %v352
                %v354 = vld [vmem:[%s298 + $0x1b0] sm:%s291]
                %355 = vst [vmem:[%s299 + $0xd8] sm:%s291] %v354
                %v356 = vld [vmem:[%s298 + $0x1c0] sm:%s291]
                %357 = vst [vmem:[%s299 + $0xe0] sm:%s291] %v356
                %v358 = vld [vmem:[%s298 + $0x1d0] sm:%s291]
                %359 = vst [vmem:[%s299 + $0xe8] sm:%s291] %v358
                %v360 = vld [vmem:[%s298 + $0x1e0] sm:%s291]
                %361 = vst [vmem:[%s299 + $0xf0] sm:%s291] %v360
                %v362 = vld [vmem:[%s298 + $0x1f0] sm:%s291]
                %363 = vst [vmem:[%s299 + $0xf8] sm:%s291] %v362
              $region53: #{encoder_layer.5} parent=47 // loop_footer
                %s297 = sadd.s32 1, %s293
              $region54: #{encoder_layer.5} parent=47 // loop_footer_branch
                %292 = sbr.rel target = $region50
              $region55: #{encoder_layer.5} parent=47 // loop_exit
                _
            $region48: #{encoder_layer.5} parent=39 // pred_fallthru
              _
          $region40: #{encoder_layer.5} parent=35 // pred_fallthru
            _
          %440 = vnop
        $region36: #{encoder_layer.5} parent=27 // pred_fallthru
          _
        // Predicated region
        $region71: #{encoder_layer.5} parent=27 // pred_check
          %p441 = pneg %p151
        $region72: #{encoder_layer.5} parent=27 // pred_check_branch
          %443 = sbr.rel (%p441) target = $region74
        $region73: #{encoder_layer.5} parent=27 // pred_region
          %s444 = smul.u32 2, %s25
          %p445 = scmp.lt.s32.totalorder %s444, 3
          %s446 = scalar_select %p445, %s444, 3
          %s447 = scalar_lea.vmem %s4, %s446
          %s448 = smul.u32 2, %s25
        $region74: #{encoder_layer.5} parent=27 // pred_fallthru
          _
        // Predicated region
        $region75: #{encoder_layer.5} parent=27 // pred_check
          %p449 = pneg %p177
        $region76: #{encoder_layer.5} parent=27 // pred_check_branch
          %451 = sbr.rel (%p449) target = $region78
        $region77: #{encoder_layer.5} parent=27 // pred_region
          %s452 = smul.u32 32, %s25
          %p453 = scmp.lt.s32.totalorder %s452, 63
          %s454 = scalar_select %p453, %s452, 63
          %s455 = smul.addr %s454, 2
          %s456 = smul.addr %s455, 4
          %s457 = scalar_lea.vmem %s5, %s456
          %s458 = smul.u32 32, %s25
        $region78: #{encoder_layer.5} parent=27 // pred_fallthru
          _
      $region28: #{encoder_layer.5} parent=5 // pred_fallthru
        _
      %p459 = scmp.le.s32.totalorder 1, %s16
      %p460 = scmp.lt.s32.totalorder %s16, 9
      %p461 = pnand %p459, %p460
      %p462 = pneg %p461
      // Predicated region
      $region79: #{encoder_layer.5} parent=5 // pred_check
        _
      $region80: #{encoder_layer.5} parent=5 // pred_check_branch
        %464 = sbr.rel (%p461) target = $region82
      $region81: #{encoder_layer.5} parent=5 // pred_region
        %s465 = ssub.s32 %s16, 1
        %s466 = sand.u32 %s118, 1
        %s467 = sand.u32 %s118, 1
        %s468 = smul.addr %s467, 256
        %s469 = scalar_lea.vmem [#allocation4], %s468
        // Predicated region
        $region83: #{encoder_layer.5} parent=81 // pred_check
          %p470 = pneg %p131
        $region84: #{encoder_layer.5} parent=81 // pred_check_branch
          %472 = sbr.rel (%p470) target = $region86
        $region85: #{encoder_layer.5} parent=81 // pred_region
          _
        $region86: #{encoder_layer.5} parent=81 // pred_fallthru
          _
        %s473 = smul.u32 2, %s27
        %p474 = scmp.lt.s32.totalorder %s26, 1
        %s475 = scalar_select %p474, %s26, 1
        %p476 = scmp.lt.s32.totalorder %s473, 3
        %s477 = scalar_select %p476, %s473, 3
        %s478 = smul.addr %s477, 2
        %s479 = smul.addr %s475, 8
        %s480 = sadd.s32 %s478, %s479
        %s481 = smul.addr %s480, 8
        %s482 = scalar_lea.vmem %s0, %s481
        %p483 = pneg %p63
        %p484 = pneg %p60
        %p485 = pneg %p84
        %p486 = pneg %p81
        %p487 = pneg %p105
        %p488 = pneg %p102
        %s489 = sand.u32 %s118, 1
        %s490 = sand.u32 %s118, 1
        %s491 = smul.addr %s490, 256
        %s492 = scalar_lea.vmem [#allocation4], %s491
        %p493 = pneg %p131
        %p494 = pneg %p128
        %s495 = smul.u32 2, %s28
        %p496 = scmp.lt.s32.totalorder %s495, 3
        %s497 = scalar_select %p496, %s495, 3
        %s498 = scalar_lea.vmem %s4, %s497
        %p499 = pneg %p157
        %p500 = pneg %p154
        %s501 = smul.u32 32, %s28
        %p502 = scmp.lt.s32.totalorder %s501, 63
        %s503 = scalar_select %p502, %s501, 63
        %s504 = smul.addr %s503, 2
        %s505 = smul.addr %s504, 4
        %s506 = scalar_lea.vmem %s5, %s505
        %p507 = pneg %p183
        %p508 = pneg %p180
        %p509 = pneg %p204
        %p510 = pneg %p201
        %p511 = pneg %p232
        %p512 = pneg %p229
        %s513 = sand.u32 %s219, 1
        %s514 = scalar_lea.sflag [#allocation6], %s513
        %s515 = sand.u32 %s219, 1
        %s516 = smul.addr %s515, 32
        %s517 = scalar_lea.vmem [#allocation5], %s516
        %s518 = smul.u32 2, %s27
        %p519 = scmp.lt.s32.totalorder %s26, 1
        %s520 = scalar_select %p519, %s26, 1
        %p521 = scmp.lt.s32.totalorder %s518, 3
        %s522 = scalar_select %p521, %s518, 3
        %s523 = smul.addr %s522, 2
        %s524 = smul.addr %s520, 8
        %s525 = sadd.s32 %s523, %s524
        %s526 = smul.addr %s525, 8
        %s527 = scalar_lea.vmem %s0, %s526
        %s528 = smul.u32 2, %s27
        %s529 = smul.u32 2, %s28
        %s530 = smul.u32 2, %s28
        %p531 = scmp.lt.s32.totalorder %s530, 3
        %s532 = scalar_select %p531, %s530, 3
        %s533 = scalar_lea.vmem %s4, %s532
        %s534 = smul.u32 2, %s28
        %s535 = smul.u32 32, %s28
        %p536 = scmp.lt.s32.totalorder %s535, 63
        %s537 = scalar_select %p536, %s535, 63
        %s538 = smul.addr %s537, 2
        %s539 = smul.addr %s538, 4
        %s540 = scalar_lea.vmem %s5, %s539
        %s541 = smul.u32 32, %s28
        %s542 = smul.u32 2, %s27
        %p543 = scmp.eq.s32.totalorder %s28, 0
        // Predicated region
        $region87: #{encoder_layer.5} parent=81 // pred_check
          %p544 = pneg %p543
        $region88: #{encoder_layer.5} parent=81 // pred_check_branch
          %546 = sbr.rel (%p544) target = $region90
        $region89: #{encoder_layer.5} parent=81 // pred_region
          %v547 = vld [vmem:[%s527] sm:$0xff]
          %v548 = vld [vmem:[%s527 + $0x8] sm:$0xff]
          %v549 = vld [vmem:[%s527 + $0x10] sm:$0xff]
          %v550 = vld [vmem:[%s527 + $0x18] sm:$0xff]
          %v551 = vld [vmem:[%s1] sm:$0x3]
          %v552 = vld [vmem:[%s2] sm:$0x3]
          %v553 = vadd.f32 %v547, %v548
          %554 = vadd.xlane.f32.xlu0 %v553
          %v555 = vpop.xlane.xlu0 %554
          %v556 = vadd.f32 %v549, %v550
          %557 = vadd.xlane.f32.xlu0 %v556
          %v558 = vpop.xlane.xlu0 %557
          %v559 = vrcp.pop 256.0
          %v560 = vmul.f32 256.0, %v559
          %v561 = vsub.f32 1.0, %v560
          %v562 = vmul.f32 %v559, %v561
          %v563 = vadd.f32 %v559, %v562
          %vm564 = vweird.f32 %v559
          %v565 = vsel %vm564, %v559, %v563
          %v566 = vmul.f32 %v555, %v565
          %v567 = vmul.f32 %v558, %v565
          %v568 = vsub.f32 %v547, %v566
          %v569 = vsub.f32 %v548, %v566
          %v570 = vsub.f32 %v549, %v567
          %v571 = vsub.f32 %v550, %v567
          %v572 = vmul.f32 %v568, %v568
          %v573 = vmul.f32 %v569, %v569
          %v574 = vmul.f32 %v570, %v570
          %v575 = vmul.f32 %v571, %v571
          %v576 = vadd.f32 %v572, %v573
          %577 = vadd.xlane.f32.xlu0 %v576
          %v578 = vpop.xlane.xlu0 %577
          %v579 = vadd.f32 %v574, %v575
          %580 = vadd.xlane.f32.xlu0 %v579
          %v581 = vpop.xlane.xlu0 %580
          %v582 = vmul.f32 %v578, 0.003921569
          %v583 = vmul.f32 %v581, 0.003921569
          %v584 = vrsqrt.pop %v582
          %v585 = vmul.f32 %v584, %v582
          %v586 = vmul.f32 %v585, %v584
          %v587 = vmul.f32 0.5, %v586
          %v588 = vsub.f32 1.5, %v587
          %v589 = vmul.f32 %v584, %v588
          %v590 = vmul.f32 %v582, %v589
          %vm591 = vcmp.eq.f32.partialorder %v582, inf
          %v592 = vsel %vm591, %v582, %v590
          %vm593 = vcmp.eq.f32.partialorder %v582, 0.0
          %v594 = vand.u32 %v582, 2147483648
          %v595 = vsel %vm593, %v594, %v592
          %v596 = vrsqrt.pop %v583
          %v597 = vmul.f32 %v596, %v583
          %v598 = vmul.f32 %v597, %v596
          %v599 = vmul.f32 0.5, %v598
          %v600 = vsub.f32 1.5, %v599
          %v601 = vmul.f32 %v596, %v600
          %v602 = vmul.f32 %v583, %v601
          %vm603 = vcmp.eq.f32.partialorder %v583, inf
          %v604 = vsel %vm603, %v583, %v602
          %vm605 = vcmp.eq.f32.partialorder %v583, 0.0
          %v606 = vand.u32 %v583, 2147483648
          %v607 = vsel %vm605, %v606, %v604
          %v608 = vadd.f32 %v595, 1e-06
          %v609 = vadd.f32 %v607, 1e-06
          %v610 = vrcp.pop %v608
          %v611 = vrcp.pop %v609
          %v613 = vperm.slane %v551, 0
          %v614 = vperm.slane %v551, 1
          %v617 = vmul.f32 %v613, %v568
          %v618 = vmul.f32 %v614, %v569
          %v619 = vmul.f32 %v613, %v570
          %v620 = vmul.f32 %v614, %v571
          %v621 = vmul.f32 %v617, %v610
          %v622 = vmul.f32 %v618, %v610
          %v623 = vmul.f32 %v619, %v611
          %v624 = vmul.f32 %v620, %v611
          %v626 = vperm.slane %v552, 0
          %v627 = vperm.slane %v552, 1
          %v630 = vadd.f32 %v621, %v626
          %v631 = vadd.f32 %v622, %v627
          %v632 = vadd.f32 %v623, %v626
          %v633 = vadd.f32 %v624, %v627
          %v634 = vpack.c.bf16 %v631, %v630
          %v635 = vpack.c.bf16 %v633, %v632
          %636 = vst [vmem:[#allocation3] sm:$0xff] %v634
          %637 = vst [vmem:[#allocation3 + $0x8] sm:$0xff] %v635
          %638 = vst [vmem:[#allocation2] sm:$0xff] 0.0
          %639 = vst [vmem:[#allocation2 + $0x8] sm:$0xff] 0.0
          %640 = vst [vmem:[#allocation2 + $0x10] sm:$0xff] 0.0
          %641 = vst [vmem:[#allocation2 + $0x18] sm:$0xff] 0.0
        $region90: #{encoder_layer.5} parent=81 // pred_fallthru
          _
        %v642 = vld [vmem:[#allocation3] sm:$0xff]
        %v643 = vld [vmem:[#allocation3 + $0x8] sm:$0xff]
        %v644 = vld [vmem:[%s469] sm:$0xff]
        %v645 = vld [vmem:[%s469 + $0x8] sm:$0xff]
        %v646 = vld [vmem:[%s469 + $0x10] sm:$0xff]
        %v647 = vld [vmem:[%s469 + $0x18] sm:$0xff]
        %v648 = vld [vmem:[%s469 + $0x20] sm:$0xff]
        %v649 = vld [vmem:[%s469 + $0x28] sm:$0xff]
        %v650 = vld [vmem:[%s469 + $0x30] sm:$0xff]
        %v651 = vld [vmem:[%s469 + $0x38] sm:$0xff]
        %v652 = vld [vmem:[%s469 + $0x40] sm:$0xff]
        %v653 = vld [vmem:[%s469 + $0x48] sm:$0xff]
        %v654 = vld [vmem:[%s469 + $0x50] sm:$0xff]
        %v655 = vld [vmem:[%s469 + $0x58] sm:$0xff]
        %v656 = vld [vmem:[%s469 + $0x60] sm:$0xff]
        %v657 = vld [vmem:[%s469 + $0x68] sm:$0xff]
        %v658 = vld [vmem:[%s469 + $0x70] sm:$0xff]
        %v659 = vld [vmem:[%s469 + $0x78] sm:$0xff]
        %v660 = vld [vmem:[%s469 + $0x80] sm:$0xff]
        %v661 = vld [vmem:[%s469 + $0x88] sm:$0xff]
        %v662 = vld [vmem:[%s469 + $0x90] sm:$0xff]
        %v663 = vld [vmem:[%s469 + $0x98] sm:$0xff]
        %v664 = vld [vmem:[%s469 + $0xa0] sm:$0xff]
        %v665 = vld [vmem:[%s469 + $0xa8] sm:$0xff]
        %v666 = vld [vmem:[%s469 + $0xb0] sm:$0xff]
        %v667 = vld [vmem:[%s469 + $0xb8] sm:$0xff]
        %v668 = vld [vmem:[%s469 + $0xc0] sm:$0xff]
        %v669 = vld [vmem:[%s469 + $0xc8] sm:$0xff]
        %v670 = vld [vmem:[%s469 + $0xd0] sm:$0xff]
        %v671 = vld [vmem:[%s469 + $0xd8] sm:$0xff]
        %v672 = vld [vmem:[%s469 + $0xe0] sm:$0xff]
        %v673 = vld [vmem:[%s469 + $0xe8] sm:$0xff]
        %v674 = vld [vmem:[%s469 + $0xf0] sm:$0xff]
        %v675 = vld [vmem:[%s469 + $0xf8] sm:$0xff]
        %v676 = vld [vmem:[%s533] sm:$0x3]
        %v678 = vperm.slane %v676, 0
        %v679 = vperm.slane %v676, 1
        %v684 = vunpack.c.l.b16 %v642
        %v685 = vunpack.c.h.b16 %v642
        %v686 = vunpack.c.l.b16 %v643
        %v687 = vunpack.c.h.b16 %v643
        %v688 = vpack.c.b16 %v686, %v684
        %v689 = vpack.c.b16 %v687, %v685
        %v724 = vunpack.c.l.b16 %v644
        %v725 = vunpack.c.h.b16 %v644
        %v726 = vunpack.c.l.b16 %v645
        %v727 = vunpack.c.h.b16 %v645
        %v728 = vunpack.c.l.b16 %v646
        %v729 = vunpack.c.h.b16 %v646
        %v730 = vunpack.c.l.b16 %v647
        %v731 = vunpack.c.h.b16 %v647
        %v732 = vunpack.c.l.b16 %v648
        %v733 = vunpack.c.h.b16 %v648
        %v734 = vunpack.c.l.b16 %v649
        %v735 = vunpack.c.h.b16 %v649
        %v736 = vunpack.c.l.b16 %v650
        %v737 = vunpack.c.h.b16 %v650
        %v738 = vunpack.c.l.b16 %v651
        %v739 = vunpack.c.h.b16 %v651
        %v740 = vunpack.c.l.b16 %v652
        %v741 = vunpack.c.h.b16 %v652
        %v742 = vunpack.c.l.b16 %v653
        %v743 = vunpack.c.h.b16 %v653
        %v744 = vunpack.c.l.b16 %v654
        %v745 = vunpack.c.h.b16 %v654
        %v746 = vunpack.c.l.b16 %v655
        %v747 = vunpack.c.h.b16 %v655
        %v748 = vunpack.c.l.b16 %v656
        %v749 = vunpack.c.h.b16 %v656
        %v750 = vunpack.c.l.b16 %v657
        %v751 = vunpack.c.h.b16 %v657
        %v752 = vunpack.c.l.b16 %v658
        %v753 = vunpack.c.h.b16 %v658
        %v754 = vunpack.c.l.b16 %v659
        %v755 = vunpack.c.h.b16 %v659
        %v756 = vunpack.c.l.b16 %v660
        %v757 = vunpack.c.h.b16 %v660
        %v758 = vunpack.c.l.b16 %v661
        %v759 = vunpack.c.h.b16 %v661
        %v760 = vunpack.c.l.b16 %v662
        %v761 = vunpack.c.h.b16 %v662
        %v762 = vunpack.c.l.b16 %v663
        %v763 = vunpack.c.h.b16 %v663
        %v764 = vunpack.c.l.b16 %v664
        %v765 = vunpack.c.h.b16 %v664
        %v766 = vunpack.c.l.b16 %v665
        %v767 = vunpack.c.h.b16 %v665
        %v768 = vunpack.c.l.b16 %v666
        %v769 = vunpack.c.h.b16 %v666
        %v770 = vunpack.c.l.b16 %v667
        %v771 = vunpack.c.h.b16 %v667
        %v772 = vunpack.c.l.b16 %v668
        %v773 = vunpack.c.h.b16 %v668
        %v774 = vunpack.c.l.b16 %v669
        %v775 = vunpack.c.h.b16 %v669
        %v776 = vunpack.c.l.b16 %v670
        %v777 = vunpack.c.h.b16 %v670
        %v778 = vunpack.c.l.b16 %v671
        %v779 = vunpack.c.h.b16 %v671
        %v780 = vunpack.c.l.b16 %v672
        %v781 = vunpack.c.h.b16 %v672
        %v782 = vunpack.c.l.b16 %v673
        %v783 = vunpack.c.h.b16 %v673
        %v784 = vunpack.c.l.b16 %v674
        %v785 = vunpack.c.h.b16 %v674
        %v786 = vunpack.c.l.b16 %v675
        %v787 = vunpack.c.h.b16 %v675
        %v788 = vpack.c.b16 %v726, %v724
        %v789 = vpack.c.b16 %v727, %v725
        %v790 = vpack.c.b16 %v730, %v728
        %v791 = vpack.c.b16 %v731, %v729
        %v792 = vpack.c.b16 %v734, %v732
        %v793 = vpack.c.b16 %v735, %v733
        %v794 = vpack.c.b16 %v738, %v736
        %v795 = vpack.c.b16 %v739, %v737
        %v796 = vpack.c.b16 %v742, %v740
        %v797 = vpack.c.b16 %v743, %v741
        %v798 = vpack.c.b16 %v746, %v744
        %v799 = vpack.c.b16 %v747, %v745
        %v800 = vpack.c.b16 %v750, %v748
        %v801 = vpack.c.b16 %v751, %v749
        %v802 = vpack.c.b16 %v754, %v752
        %v803 = vpack.c.b16 %v755, %v753
        %v804 = vpack.c.b16 %v758, %v756
        %v805 = vpack.c.b16 %v759, %v757
        %v806 = vpack.c.b16 %v762, %v760
        %v807 = vpack.c.b16 %v763, %v761
        %v808 = vpack.c.b16 %v766, %v764
        %v809 = vpack.c.b16 %v767, %v765
        %v810 = vpack.c.b16 %v770, %v768
        %v811 = vpack.c.b16 %v771, %v769
        %v812 = vpack.c.b16 %v774, %v772
        %v813 = vpack.c.b16 %v775, %v773
        %v814 = vpack.c.b16 %v778, %v776
        %v815 = vpack.c.b16 %v779, %v777
        %v816 = vpack.c.b16 %v782, %v780
        %v817 = vpack.c.b16 %v783, %v781
        %v818 = vpack.c.b16 %v786, %v784
        %v819 = vpack.c.b16 %v787, %v785
        %852 = vmatpush.bf16.msra.mxu0 %v802
        %853 = vmatpush.bf16.msra.mxu0 %v800
        %854 = vmatpush.bf16.msra.mxu0 %v798
        %855 = vmatpush.bf16.msra.mxu0 %v796
        %856 = vmatpush.bf16.msra.mxu0 %v794
        %857 = vmatpush.bf16.msra.mxu0 %v792
        %858 = vmatpush.bf16.msra.mxu0 %v790
        %859 = vmatpush.bf16.msra.mxu0 %v788
        %860 = vmatmul.bf16.gmra.mxu0 %v688
        %v861 = vpop.f32.mrf.mxu0
        %v862 = vadd.f32 %v678, %v861
        %v863 = vpop.f32.mrf.mxu0
        %v864 = vadd.f32 %v678, %v863
        %865 = vdwg.mxu0
        %866 = vmatpush.bf16.msra.mxu0 %v818
        %867 = vmatpush.bf16.msra.mxu0 %v816
        %868 = vmatpush.bf16.msra.mxu0 %v814
        %869 = vmatpush.bf16.msra.mxu0 %v812
        %870 = vmatpush.bf16.msra.mxu0 %v810
        %871 = vmatpush.bf16.msra.mxu0 %v808
        %872 = vmatpush.bf16.msra.mxu0 %v806
        %873 = vmatpush.bf16.msra.mxu0 %v804
        %874 = vmatmul.bf16.gmra.mxu0 %v689
        %v875 = vpop.f32.mrf.mxu0
        %v876 = vadd.f32 %v862, %v875
        %v877 = vpop.f32.mrf.mxu0
        %v878 = vadd.f32 %v864, %v877
        %879 = vdwg.mxu0
        %880 = vmatpush.bf16.msra.mxu0 %v803
        %881 = vmatpush.bf16.msra.mxu0 %v801
        %882 = vmatpush.bf16.msra.mxu0 %v799
        %883 = vmatpush.bf16.msra.mxu0 %v797
        %884 = vmatpush.bf16.msra.mxu0 %v795
        %885 = vmatpush.bf16.msra.mxu0 %v793
        %886 = vmatpush.bf16.msra.mxu0 %v791
        %887 = vmatpush.bf16.msra.mxu0 %v789
        %888 = vmatmul.bf16.gmra.mxu0 %v688
        %v889 = vpop.f32.mrf.mxu0
        %v890 = vadd.f32 %v679, %v889
        %v891 = vpop.f32.mrf.mxu0
        %v892 = vadd.f32 %v679, %v891
        %893 = vdwg.mxu0
        %894 = vmatpush.bf16.msra.mxu0 %v819
        %895 = vmatpush.bf16.msra.mxu0 %v817
        %896 = vmatpush.bf16.msra.mxu0 %v815
        %897 = vmatpush.bf16.msra.mxu0 %v813
        %898 = vmatpush.bf16.msra.mxu0 %v811
        %899 = vmatpush.bf16.msra.mxu0 %v809
        %900 = vmatpush.bf16.msra.mxu0 %v807
        %901 = vmatpush.bf16.msra.mxu0 %v805
        %902 = vmatmul.bf16.gmra.mxu0 %v689
        %v903 = vpop.f32.mrf.mxu0
        %v904 = vadd.f32 %v890, %v903
        %v905 = vpop.f32.mrf.mxu0
        %v906 = vadd.f32 %v892, %v905
        %907 = vdwg.mxu0
        %v908 = vmax.f32 %v876, 0.0
        %v909 = vmax.f32 %v904, 0.0
        %v910 = vmax.f32 %v878, 0.0
        %v911 = vmax.f32 %v906, 0.0
        %v912 = vld [vmem:[#allocation2] sm:$0xff]
        %v913 = vld [vmem:[#allocation2 + $0x8] sm:$0xff]
        %v914 = vld [vmem:[#allocation2 + $0x10] sm:$0xff]
        %v915 = vld [vmem:[#allocation2 + $0x18] sm:$0xff]
        %v916 = vpack.c.bf16 %v910, %v908
        %v917 = vpack.c.bf16 %v911, %v909
        %v918 = vld [vmem:[%s540] sm:$0xff]
        %v919 = vld [vmem:[%s540 + $0x8] sm:$0xff]
        %v920 = vld [vmem:[%s540 + $0x10] sm:$0xff]
        %v921 = vld [vmem:[%s540 + $0x18] sm:$0xff]
        %v922 = vld [vmem:[%s540 + $0x20] sm:$0xff]
        %v923 = vld [vmem:[%s540 + $0x28] sm:$0xff]
        %v924 = vld [vmem:[%s540 + $0x30] sm:$0xff]
        %v925 = vld [vmem:[%s540 + $0x38] sm:$0xff]
        %v926 = vld [vmem:[%s540 + $0x40] sm:$0xff]
        %v927 = vld [vmem:[%s540 + $0x48] sm:$0xff]
        %v928 = vld [vmem:[%s540 + $0x50] sm:$0xff]
        %v929 = vld [vmem:[%s540 + $0x58] sm:$0xff]
        %v930 = vld [vmem:[%s540 + $0x60] sm:$0xff]
        %v931 = vld [vmem:[%s540 + $0x68] sm:$0xff]
        %v932 = vld [vmem:[%s540 + $0x70] sm:$0xff]
        %v933 = vld [vmem:[%s540 + $0x78] sm:$0xff]
        %v934 = vld [vmem:[%s540 + $0x80] sm:$0xff]
        %v935 = vld [vmem:[%s540 + $0x88] sm:$0xff]
        %v936 = vld [vmem:[%s540 + $0x90] sm:$0xff]
        %v937 = vld [vmem:[%s540 + $0x98] sm:$0xff]
        %v938 = vld [vmem:[%s540 + $0xa0] sm:$0xff]
        %v939 = vld [vmem:[%s540 + $0xa8] sm:$0xff]
        %v940 = vld [vmem:[%s540 + $0xb0] sm:$0xff]
        %v941 = vld [vmem:[%s540 + $0xb8] sm:$0xff]
        %v942 = vld [vmem:[%s540 + $0xc0] sm:$0xff]
        %v943 = vld [vmem:[%s540 + $0xc8] sm:$0xff]
        %v944 = vld [vmem:[%s540 + $0xd0] sm:$0xff]
        %v945 = vld [vmem:[%s540 + $0xd8] sm:$0xff]
        %v946 = vld [vmem:[%s540 + $0xe0] sm:$0xff]
        %v947 = vld [vmem:[%s540 + $0xe8] sm:$0xff]
        %v948 = vld [vmem:[%s540 + $0xf0] sm:$0xff]
        %v949 = vld [vmem:[%s540 + $0xf8] sm:$0xff]
        %v982 = vunpack.c.l.b16 %v918
        %v983 = vunpack.c.h.b16 %v918
        %v984 = vunpack.c.l.b16 %v919
        %v985 = vunpack.c.h.b16 %v919
        %v986 = vunpack.c.l.b16 %v920
        %v987 = vunpack.c.h.b16 %v920
        %v988 = vunpack.c.l.b16 %v921
        %v989 = vunpack.c.h.b16 %v921
        %v990 = vunpack.c.l.b16 %v922
        %v991 = vunpack.c.h.b16 %v922
        %v992 = vunpack.c.l.b16 %v923
        %v993 = vunpack.c.h.b16 %v923
        %v994 = vunpack.c.l.b16 %v924
        %v995 = vunpack.c.h.b16 %v924
        %v996 = vunpack.c.l.b16 %v925
        %v997 = vunpack.c.h.b16 %v925
        %v998 = vunpack.c.l.b16 %v926
        %v999 = vunpack.c.h.b16 %v926
        %v1000 = vunpack.c.l.b16 %v927
        %v1001 = vunpack.c.h.b16 %v927
        %v1002 = vunpack.c.l.b16 %v928
        %v1003 = vunpack.c.h.b16 %v928
        %v1004 = vunpack.c.l.b16 %v929
        %v1005 = vunpack.c.h.b16 %v929
        %v1006 = vunpack.c.l.b16 %v930
        %v1007 = vunpack.c.h.b16 %v930
        %v1008 = vunpack.c.l.b16 %v931
        %v1009 = vunpack.c.h.b16 %v931
        %v1010 = vunpack.c.l.b16 %v932
        %v1011 = vunpack.c.h.b16 %v932
        %v1012 = vunpack.c.l.b16 %v933
        %v1013 = vunpack.c.h.b16 %v933
        %v1014 = vunpack.c.l.b16 %v934
        %v1015 = vunpack.c.h.b16 %v934
        %v1016 = vunpack.c.l.b16 %v935
        %v1017 = vunpack.c.h.b16 %v935
        %v1018 = vunpack.c.l.b16 %v936
        %v1019 = vunpack.c.h.b16 %v936
        %v1020 = vunpack.c.l.b16 %v937
        %v1021 = vunpack.c.h.b16 %v937
        %v1022 = vunpack.c.l.b16 %v938
        %v1023 = vunpack.c.h.b16 %v938
        %v1024 = vunpack.c.l.b16 %v939
        %v1025 = vunpack.c.h.b16 %v939
        %v1026 = vunpack.c.l.b16 %v940
        %v1027 = vunpack.c.h.b16 %v940
        %v1028 = vunpack.c.l.b16 %v941
        %v1029 = vunpack.c.h.b16 %v941
        %v1030 = vunpack.c.l.b16 %v942
        %v1031 = vunpack.c.h.b16 %v942
        %v1032 = vunpack.c.l.b16 %v943
        %v1033 = vunpack.c.h.b16 %v943
        %v1034 = vunpack.c.l.b16 %v944
        %v1035 = vunpack.c.h.b16 %v944
        %v1036 = vunpack.c.l.b16 %v945
        %v1037 = vunpack.c.h.b16 %v945
        %v1038 = vunpack.c.l.b16 %v946
        %v1039 = vunpack.c.h.b16 %v946
        %v1040 = vunpack.c.l.b16 %v947
        %v1041 = vunpack.c.h.b16 %v947
        %v1042 = vunpack.c.l.b16 %v948
        %v1043 = vunpack.c.h.b16 %v948
        %v1044 = vunpack.c.l.b16 %v949
        %v1045 = vunpack.c.h.b16 %v949
        %v1046 = vpack.c.b16 %v984, %v982
        %v1047 = vpack.c.b16 %v985, %v983
        %v1048 = vpack.c.b16 %v988, %v986
        %v1049 = vpack.c.b16 %v989, %v987
        %v1050 = vpack.c.b16 %v992, %v990
        %v1051 = vpack.c.b16 %v993, %v991
        %v1052 = vpack.c.b16 %v996, %v994
        %v1053 = vpack.c.b16 %v997, %v995
        %v1054 = vpack.c.b16 %v1000, %v998
        %v1055 = vpack.c.b16 %v1001, %v999
        %v1056 = vpack.c.b16 %v1004, %v1002
        %v1057 = vpack.c.b16 %v1005, %v1003
        %v1058 = vpack.c.b16 %v1008, %v1006
        %v1059 = vpack.c.b16 %v1009, %v1007
        %v1060 = vpack.c.b16 %v1012, %v1010
        %v1061 = vpack.c.b16 %v1013, %v1011
        %v1062 = vpack.c.b16 %v1016, %v1014
        %v1063 = vpack.c.b16 %v1017, %v1015
        %v1064 = vpack.c.b16 %v1020, %v1018
        %v1065 = vpack.c.b16 %v1021, %v1019
        %v1066 = vpack.c.b16 %v1024, %v1022
        %v1067 = vpack.c.b16 %v1025, %v1023
        %v1068 = vpack.c.b16 %v1028, %v1026
        %v1069 = vpack.c.b16 %v1029, %v1027
        %v1070 = vpack.c.b16 %v1032, %v1030
        %v1071 = vpack.c.b16 %v1033, %v1031
        %v1072 = vpack.c.b16 %v1036, %v1034
        %v1073 = vpack.c.b16 %v1037, %v1035
        %v1074 = vpack.c.b16 %v1040, %v1038
        %v1075 = vpack.c.b16 %v1041, %v1039
        %v1076 = vpack.c.b16 %v1044, %v1042
        %v1077 = vpack.c.b16 %v1045, %v1043
        %1110 = vmatpush.bf16.msra.mxu0 %v1060
        %1111 = vmatpush.bf16.msra.mxu0 %v1058
        %1112 = vmatpush.bf16.msra.mxu0 %v1056
        %1113 = vmatpush.bf16.msra.mxu0 %v1054
        %1114 = vmatpush.bf16.msra.mxu0 %v1052
        %1115 = vmatpush.bf16.msra.mxu0 %v1050
        %1116 = vmatpush.bf16.msra.mxu0 %v1048
        %1117 = vmatpush.bf16.msra.mxu0 %v1046
        %1118 = vmatmul.bf16.gmra.mxu0 %v916
        %v1119 = vpop.f32.mrf.mxu0
        %v1120 = vadd.f32 0.0, %v1119
        %v1121 = vpop.f32.mrf.mxu0
        %v1122 = vadd.f32 0.0, %v1121
        %1123 = vdwg.mxu0
        %1124 = vmatpush.bf16.msra.mxu0 %v1076
        %1125 = vmatpush.bf16.msra.mxu0 %v1074
        %1126 = vmatpush.bf16.msra.mxu0 %v1072
        %1127 = vmatpush.bf16.msra.mxu0 %v1070
        %1128 = vmatpush.bf16.msra.mxu0 %v1068
        %1129 = vmatpush.bf16.msra.mxu0 %v1066
        %1130 = vmatpush.bf16.msra.mxu0 %v1064
        %1131 = vmatpush.bf16.msra.mxu0 %v1062
        %1132 = vmatmul.bf16.gmra.mxu0 %v917
        %v1133 = vpop.f32.mrf.mxu0
        %v1134 = vadd.f32 %v1120, %v1133
        %v1135 = vpop.f32.mrf.mxu0
        %v1136 = vadd.f32 %v1122, %v1135
        %1137 = vdwg.mxu0
        %1138 = vmatpush.bf16.msra.mxu0 %v1061
        %1139 = vmatpush.bf16.msra.mxu0 %v1059
        %1140 = vmatpush.bf16.msra.mxu0 %v1057
        %1141 = vmatpush.bf16.msra.mxu0 %v1055
        %1142 = vmatpush.bf16.msra.mxu0 %v1053
        %1143 = vmatpush.bf16.msra.mxu0 %v1051
        %1144 = vmatpush.bf16.msra.mxu0 %v1049
        %1145 = vmatpush.bf16.msra.mxu0 %v1047
        %1146 = vmatmul.bf16.gmra.mxu0 %v916
        %v1147 = vpop.f32.mrf.mxu0
        %v1148 = vadd.f32 0.0, %v1147
        %v1149 = vpop.f32.mrf.mxu0
        %v1150 = vadd.f32 0.0, %v1149
        %1151 = vdwg.mxu0
        %1152 = vmatpush.bf16.msra.mxu0 %v1077
        %1153 = vmatpush.bf16.msra.mxu0 %v1075
        %1154 = vmatpush.bf16.msra.mxu0 %v1073
        %1155 = vmatpush.bf16.msra.mxu0 %v1071
        %1156 = vmatpush.bf16.msra.mxu0 %v1069
        %1157 = vmatpush.bf16.msra.mxu0 %v1067
        %1158 = vmatpush.bf16.msra.mxu0 %v1065
        %1159 = vmatpush.bf16.msra.mxu0 %v1063
        %1160 = vmatmul.bf16.gmra.mxu0 %v917
        %v1161 = vpop.f32.mrf.mxu0
        %v1162 = vadd.f32 %v1148, %v1161
        %v1163 = vpop.f32.mrf.mxu0
        %v1164 = vadd.f32 %v1150, %v1163
        %1165 = vdwg.mxu0
        %v1166 = vadd.f32 %v912, %v1134
        %v1167 = vadd.f32 %v913, %v1162
        %v1168 = vadd.f32 %v914, %v1136
        %v1169 = vadd.f32 %v915, %v1164
        %1170 = vst [vmem:[#allocation2] sm:$0xff] %v1166
        %1171 = vst [vmem:[#allocation2 + $0x8] sm:$0xff] %v1167
        %1172 = vst [vmem:[#allocation2 + $0x10] sm:$0xff] %v1168
        %1173 = vst [vmem:[#allocation2 + $0x18] sm:$0xff] %v1169
        %p1174 = scmp.eq.s32.totalorder %s28, 1
        // Predicated region
        $region91: #{encoder_layer.5} parent=81 // pred_check
          %p1175 = pneg %p1174
        $region92: #{encoder_layer.5} parent=81 // pred_check_branch
          %1177 = sbr.rel (%p1175) target = $region94
        $region93: #{encoder_layer.5} parent=81 // pred_region
          %v1178 = vld [vmem:[%s527] sm:$0xff]
          %v1179 = vld [vmem:[%s527 + $0x8] sm:$0xff]
          %v1180 = vld [vmem:[%s527 + $0x10] sm:$0xff]
          %v1181 = vld [vmem:[%s527 + $0x18] sm:$0xff]
          %v1182 = vld [vmem:[#allocation2] sm:$0xff]
          %v1183 = vld [vmem:[#allocation2 + $0x8] sm:$0xff]
          %v1184 = vld [vmem:[#allocation2 + $0x10] sm:$0xff]
          %v1185 = vld [vmem:[#allocation2 + $0x18] sm:$0xff]
          %v1186 = vadd.f32 %v1178, %v1182
          %v1187 = vadd.f32 %v1179, %v1183
          %v1188 = vadd.f32 %v1180, %v1184
          %v1189 = vadd.f32 %v1181, %v1185
          %v1190 = vld [vmem:[%s6] sm:$0x3]
          %v1192 = vperm.slane %v1190, 0
          %v1193 = vperm.slane %v1190, 1
          %v1196 = vadd.f32 %v1186, %v1192
          %v1197 = vadd.f32 %v1187, %v1193
          %v1198 = vadd.f32 %v1188, %v1192
          %v1199 = vadd.f32 %v1189, %v1193
          %1200 = vst [vmem:[%s517] sm:$0xff] %v1196
          %1201 = vst [vmem:[%s517 + $0x8] sm:$0xff] %v1197
          %1202 = vst [vmem:[%s517 + $0x10] sm:$0xff] %v1198
          %1203 = vst [vmem:[%s517 + $0x18] sm:$0xff] %v1199
        $region94: #{encoder_layer.5} parent=81 // pred_fallthru
          _
        %s1204 = sand.u32 %s219, 1
        %s1205 = scalar_lea.sflag [#allocation6], %s1204
        %s1206 = sand.u32 %s219, 1
        %s1207 = smul.addr %s1206, 32
        %s1208 = scalar_lea.vmem [#allocation5], %s1207
        // Predicated region
        $region95: #{encoder_layer.5} parent=81 // pred_check
          %p1209 = pneg %p229
        $region96: #{encoder_layer.5} parent=81 // pred_check_branch
          %1211 = sbr.rel (%p1209) target = $region98
        $region97: #{encoder_layer.5} parent=81 // pred_region
          %s1212 = smul.u32 2, %s27
          %1214 = vsyncadd %s1205, 0
          %s1215 = smul.addr %s1212, 2
          %s1216 = smul.addr %s26, 8
          %s1217 = sadd.s32 %s1215, %s1216
          %s1218 = smul.addr %s1217, 8
          %s1219 = scalar_lea.hbm %s7, %s1218
          %s1220 = sshll.u32 %s1208, 4
          %s1221 = int_to_ptr.vmem [resolvable:$true] %s1220
          %s1222 = sshll.u32 %s1219, 4
          %s1223 = int_to_ptr.hbm [resolvable:$true] %s1222
          %1228 = dma.vmem_to_hbm [thread:$0]  %s1221, 512, %s1223, %s1205, 256, 256, 16
        $region98: #{encoder_layer.5} parent=81 // pred_fallthru
          _
      $region82: #{encoder_layer.5} parent=5 // pred_fallthru
        _
      %p1229 = scmp.le.s32.totalorder 2, %s16
      // Predicated region
      $region99: #{encoder_layer.5} parent=5 // pred_check
        %p1230 = pneg %p1229
      $region100: #{encoder_layer.5} parent=5 // pred_check_branch
        %1232 = sbr.rel (%p1230) target = $region102
      $region101: #{encoder_layer.5} parent=5 // pred_region
        %s1233 = ssub.s32 %s16, 2
        // Predicated region
        $region103: #{encoder_layer.5} parent=101 // pred_check
          %p1234 = pneg %p235
        $region104: #{encoder_layer.5} parent=101 // pred_check_branch
          %1236 = sbr.rel (%p1234) target = $region106
        $region105: #{encoder_layer.5} parent=101 // pred_region
          %s1237 = sand.u32 %s220, 1
          %s1238 = scalar_lea.sflag [#allocation6], %s1237
          %s1239 = sand.u32 %s220, 1
          %s1240 = smul.addr %s1239, 32
          %s1241 = scalar_lea.vmem [#allocation5], %s1240
          %1243 = dma.done %s1238, 512
        $region106: #{encoder_layer.5} parent=101 // pred_fallthru
          _
      $region102: #{encoder_layer.5} parent=5 // pred_fallthru
        _
    $region6: #{encoder_layer.5} parent=1 // loop_footer
      %s20 = sadd.s32 1, %s16
    $region7: #{encoder_layer.5} parent=1 // loop_footer_branch
      %15 = sbr.rel target = $region3
    $region8: #{encoder_layer.5} parent=1 // loop_exit
      _
    %1244 = vsyncpa [#allocation6], 1
    %s1245 = scalar_lea.sflag [#allocation6], 1
    %1246 = vsyncpa %s1245, 1

</llo_original>
